<compile_context>
chip_gen: v7x
topology: tpu7x:2x2x1
jax: 0.10.0
libtpu: 0.0.40
codegen_flags: <defaults>
</compile_context>

<pallas_src>
import functools

import jax
import jax.numpy as jnp
from jax import lax
from jax.experimental import pallas as pl
from jax.experimental.pallas import tpu as pltpu

EPS = 1e-5  # nn.BatchNorm2d default


# ----------------------------------------------------------------------------
# Pass 1: 3x3 conv (bf16 MXU, f32 accumulate) + bias + partial BN statistics.
# ----------------------------------------------------------------------------
def _conv_bias_stats_kernel(xm_ref, xu_ref, xd_ref, w_ref, b_ref,
                            y_ref, st_ref, xt_ref):
    # xm_ref: (1, TH, W, Cin) bf16  main row tile
    # xu_ref: (1, 1,  W, Cin) bf16  row above the tile (ignored for tile 0)
    # xd_ref: (1, 1,  W, Cin) bf16  row below the tile (ignored for last tile)
    # w_ref : (9, Cin, Cout)  bf16  conv weights, offset order s = dy*3 + dx
    # b_ref : (1, Cout)       f32   conv bias
    # y_ref : (1, TH, W, Cout) f32  conv + bias output
    # st_ref: (1, 1, 2, Cout) f32   per-tile [sum, sum of squares]
    # xt_ref: (TH+2, W+2, Cin) bf16 scratch: zero-padded input tile
    _, th, wd, c_in = xm_ref.shape
    c_out = y_ref.shape[3]
    i = pl.program_id(1)

    # Build the zero-padded (TH+2, W+2, Cin) tile in VMEM.
    xt_ref[...] = jnp.zeros(xt_ref.shape, xt_ref.dtype)
    xt_ref[1:th + 1, 1:wd + 1, :] = xm_ref[0]

    @pl.when(i > 0)
    def _top_halo():
        xt_ref[0:1, 1:wd + 1, :] = xu_ref[0]

    @pl.when(i + 1 < pl.num_programs(1))
    def _bottom_halo():
        xt_ref[th + 1:th + 2, 1:wd + 1, :] = xd_ref[0]

    # 3x3 conv as nine shifted (Cin -> Cout) matmuls on the MXU.
    acc = jnp.zeros((th * wd, c_out), jnp.float32)
    for dy in range(3):
        for dx in range(3):
            patch = xt_ref[dy:dy + th, dx:dx + wd, :].reshape(th * wd, c_in)
            acc = acc + jnp.dot(patch, w_ref[dy * 3 + dx],
                                preferred_element_type=jnp.float32)
    acc = acc + b_ref[...]

    y_ref[...] = acc.reshape(1, th, wd, c_out)

    # One-pass partial BatchNorm statistics (sum, sum of squares) for this tile.
    s1 = jnp.sum(acc, axis=0, keepdims=True)
    s2 = jnp.sum(acc * acc, axis=0, keepdims=True)
    st_ref[...] = jnp.concatenate([s1, s2], axis=0).reshape(1, 1, 2, c_out)


# ----------------------------------------------------------------------------
# Pass 2: BatchNorm (folded to per-channel scale/shift) + ReLU, tiled.
# ----------------------------------------------------------------------------
def _bn_relu_kernel(y_ref, ab_ref, o_ref):
    # y_ref: (1, TH, W, C) f32 ; ab_ref: (2, 1, C) f32 (row 0 = scale, 1 = shift)
    out = jnp.maximum(y_ref[...] * ab_ref[0] + ab_ref[1], 0.0)
    o_ref[...] = out.astype(o_ref.dtype)


def _pick_tile_h(h, w, c_in, c_out, budget_bytes=8 * 1024 * 1024):
    """Largest divisor of H whose per-step VMEM working set fits the budget."""
    best = 1
    for th in range(1, h + 1):
        if h % th:
            continue
        est = (th * w * (8 * c_in + 16 * c_out)      # double-buffered blocks + temps
               + (th + 2) * (w + 2) * 2 * c_in)      # padded-tile scratch (bf16)
        if est <= budget_bytes:
            best = th
    return best


def _prep_weight(w_oihw):
    """(Cout, Cin, 3, 3) -> (9, Cin, Cout) bf16, offset order s = dy*3 + dx."""
    c_out, c_in = w_oihw.shape[0], w_oihw.shape[1]
    return (jnp.transpose(w_oihw, (2, 3, 1, 0))
            .reshape(9, c_in, c_out).astype(jnp.bfloat16))


def conv_bn_relu(x_bf, w9, bias2d, gamma, beta, out_dtype, tile_h=None):
    """One Conv2d(3x3, pad 1, bias) + BatchNorm2d(train) + ReLU, NHWC in/out."""
    n, h, w, c_in = x_bf.shape
    c_out = w9.shape[-1]
    if tile_h is None:
        tile_h = _pick_tile_h(h, w, c_in, c_out)
    n_h = h // tile_h
    cparams = pltpu.CompilerParams(
        dimension_semantics=("parallel", "parallel"),
        vmem_limit_bytes=32 * 1024 * 1024)

    y, stats = pl.pallas_call(
        _conv_bias_stats_kernel,
        out_shape=(jax.ShapeDtypeStruct((n, h, w, c_out), jnp.float32),
                   jax.ShapeDtypeStruct((n, n_h, 2, c_out), jnp.float32)),
        grid=(n, n_h),
        in_specs=[
            pl.BlockSpec((1, tile_h, w, c_in), lambda b, i: (b, i, 0, 0)),
            pl.BlockSpec((1, 1, w, c_in),
                         lambda b, i: (b, jnp.maximum(i * tile_h - 1, 0), 0, 0)),
            pl.BlockSpec((1, 1, w, c_in),
                         lambda b, i: (b, jnp.minimum((i + 1) * tile_h, h - 1), 0, 0)),
            pl.BlockSpec((9, c_in, c_out), lambda b, i: (0, 0, 0)),
            pl.BlockSpec((1, c_out), lambda b, i: (0, 0)),
        ],
        out_specs=(
            pl.BlockSpec((1, tile_h, w, c_out), lambda b, i: (b, i, 0, 0)),
            pl.BlockSpec((1, 1, 2, c_out), lambda b, i: (b, i, 0, 0)),
        ),
        scratch_shapes=[pltpu.VMEM((tile_h + 2, w + 2, c_in), jnp.bfloat16)],
        compiler_params=cparams,
    )(x_bf, x_bf, x_bf, w9, bias2d)

    # Finish the BatchNorm statistics (tiny reduction) and fold mean / var /
    # gamma / beta into a single per-channel scale & shift.
    sums = jnp.sum(stats, axis=(0, 1))                 # (2, Cout)
    cnt = jnp.float32(n * h * w)
    mean = sums[0] / cnt
    var = jnp.maximum(sums[1] / cnt - mean * mean, 0.0)  # biased variance
    scale = gamma * lax.rsqrt(var + EPS)
    shift = beta - mean * scale
    ab = jnp.stack([scale, shift])[:, None, :]          # (2, 1, Cout)

    out = pl.pallas_call(
        _bn_relu_kernel,
        out_shape=jax.ShapeDtypeStruct((n, h, w, c_out), out_dtype),
        grid=(n, n_h),
        in_specs=[
            pl.BlockSpec((1, tile_h, w, c_out), lambda b, i: (b, i, 0, 0)),
            pl.BlockSpec((2, 1, c_out), lambda b, i: (0, 0, 0)),
        ],
        out_specs=pl.BlockSpec((1, tile_h, w, c_out), lambda b, i: (b, i, 0, 0)),
        compiler_params=cparams,
    )(y, ab)
    return out


def recurrent_block_forward(x_nchw, params, t=2):
    """Mirrors Recurrent_block.forward (shared conv block, t iterations)."""
    assert t >= 1
    x_nhwc = jnp.transpose(x_nchw.astype(jnp.bfloat16), (0, 2, 3, 1))

    # Weight / bias prep hoisted out of the per-call path; the "x + x" doubling
    # is folded into a second weight tensor (exact: power-of-two scale).
    w9 = _prep_weight(params["w"])
    w9x2 = _prep_weight(2.0 * params["w"])
    bias2d = params["b"].reshape(1, -1).astype(jnp.float32)
    gamma = params["gamma"].astype(jnp.float32)
    beta = params["beta"].astype(jnp.float32)

    # i == 0:  x = conv(x)
    x1 = conv_bn_relu(x_nhwc, w9, bias2d, gamma, beta, out_dtype=jnp.bfloat16)
    # Every iteration then computes out = conv(x + x) with the SAME x, so all t
    # results are identical; compute it once (exact semantic match).
    out = conv_bn_relu(x1, w9x2, bias2d, gamma, beta, out_dtype=jnp.float32)

    return jnp.transpose(out, (0, 3, 1, 2))             # back to NCHW


def _reference(x_nchw, params, t=2):
    """Precision-matched pure-JAX reference (bf16 conv operands, f32 math)."""
    w_q = params["w"].astype(jnp.bfloat16).astype(jnp.float32)
    b = params["b"].reshape(1, -1, 1, 1)
    g = params["gamma"].reshape(1, -1, 1, 1)
    bt = params["beta"].reshape(1, -1, 1, 1)

    def block(inp):
        inp_q = inp.astype(jnp.bfloat16).astype(jnp.float32)
        y = lax.conv_general_dilated(
            inp_q, w_q, window_strides=(1, 1), padding="SAME",
            dimension_numbers=("NCHW", "OIHW", "NCHW"),
            precision=lax.Precision.HIGHEST)
        y = y + b
        mean = jnp.mean(y, axis=(0, 2, 3), keepdims=True)
        var = jnp.mean((y - mean) ** 2, axis=(0, 2, 3), keepdims=True)
        return jnp.maximum((y - mean) * lax.rsqrt(var + EPS) * g + bt, 0.0)

    out = None
    x = x_nchw
    for i in range(t):
        if i == 0:
            x = block(x)
        out = block(x + x)
    return out


if __name__ == "__main__":
    out_ch = 4
    key = jax.random.PRNGKey(0)
    k1, k2, k3 = jax.random.split(key, 3)
    # Deterministic synthetic parameters (Recurrent_block.__init__(out_ch=4)).
    params = {
        "w": 0.1 * jax.random.normal(k1, (out_ch, out_ch, 3, 3), jnp.float32),
        "b": 0.05 * jax.random.normal(k2, (out_ch,), jnp.float32),
        "gamma": jnp.ones((out_ch,), jnp.float32),   # BN default init
        "beta": jnp.zeros((out_ch,), jnp.float32),
    }
    x = jax.random.normal(k3, (2, out_ch, 16, 16), jnp.float32)   # NCHW

    fwd = jax.jit(functools.partial(recurrent_block_forward, t=2))
    out = jax.block_until_ready(fwd(x, params))
    assert out.shape == x.shape and out.dtype == jnp.float32

    ref = _reference(x, params, t=2)
    if not jnp.allclose(out, ref, rtol=1e-2, atol=1e-2):
        err = float(jnp.max(jnp.abs(out - ref)))
        raise AssertionError(f"Pallas kernel mismatches reference (max abs err {err})")

    print("KERNEL_OK")
</pallas_src>

<mosaic_0001>
module attributes {stable_mosaic.version = 11 : i64} {
  func.func @_bn_relu_kernel(%arg0: i32, %arg1: i32, %arg2: memref<1x16x16x4xf32, #tpu.memory_space<vmem>>, %arg3: memref<2x1x4xf32, #tpu.memory_space<vmem>>, %arg4: memref<1x16x16x4xbf16, #tpu.memory_space<vmem>>) attributes {dimension_semantics = [#tpu.dimension_semantics<parallel>, #tpu.dimension_semantics<parallel>], iteration_bounds = array<i64: 2, 1>, scalar_prefetch = 0 : i64, scratch_operands = 0 : i64, tpu.core_type = #tpu.core_type<tc>, window_params = [{transform_indices = @transform_0, window_bounds = array<i64: 1, 16, 16, 4>}, {pipeline_mode = #tpu.pipeline_mode<synchronous>, transform_indices = @transform_1, window_bounds = array<i64: 2, 1, 4>}, {transform_indices = @transform_2, window_bounds = array<i64: 1, 16, 16, 4>}]} {
    %c0 = arith.constant 0 : index
    %c0_0 = arith.constant 0 : index
    %c0_1 = arith.constant 0 : index
    %c0_2 = arith.constant 0 : index
    %0 = vector.load %arg2[%c0, %c0_0, %c0_1, %c0_2] : memref<1x16x16x4xf32, #tpu.memory_space<vmem>>, vector<1x16x16x4xf32>
    %c0_3 = arith.constant 0 : index
    %c0_4 = arith.constant 0 : index
    %c0_5 = arith.constant 0 : index
    %1 = vector.load %arg3[%c0_3, %c0_4, %c0_5] : memref<2x1x4xf32, #tpu.memory_space<vmem>>, vector<1x1x4xf32>
    %2 = vector.shape_cast %1 : vector<1x1x4xf32> to vector<1x4xf32>
    %3 = vector.shape_cast %2 : vector<1x4xf32> to vector<1x1x1x4xf32>
    %4 = vector.broadcast %3 : vector<1x1x1x4xf32> to vector<1x16x16x4xf32>
    %5 = arith.mulf %0, %4 : vector<1x16x16x4xf32>
    %c1 = arith.constant 1 : index
    %c0_6 = arith.constant 0 : index
    %c0_7 = arith.constant 0 : index
    %6 = vector.load %arg3[%c1, %c0_6, %c0_7] : memref<2x1x4xf32, #tpu.memory_space<vmem>>, vector<1x1x4xf32>
    %7 = vector.shape_cast %6 : vector<1x1x4xf32> to vector<1x4xf32>
    %8 = vector.shape_cast %7 : vector<1x4xf32> to vector<1x1x1x4xf32>
    %9 = vector.broadcast %8 : vector<1x1x1x4xf32> to vector<1x16x16x4xf32>
    %10 = arith.addf %5, %9 : vector<1x16x16x4xf32>
    %cst = arith.constant 0.000000e+00 : f32
    %11 = vector.broadcast %cst : f32 to vector<1x16x16x4xf32>
    %12 = arith.maximumf %10, %11 : vector<1x16x16x4xf32>
    %13 = arith.truncf %12 : vector<1x16x16x4xf32> to vector<1x16x16x4xbf16>
    %c0_8 = arith.constant 0 : index
    %c0_9 = arith.constant 0 : index
    %c0_10 = arith.constant 0 : index
    %c0_11 = arith.constant 0 : index
    %14 = vector.load %arg4[%c0_8, %c0_9, %c0_10, %c0_11] : memref<1x16x16x4xbf16, #tpu.memory_space<vmem>>, vector<1x16x16x4xbf16>
    tpu.vector_store %arg4[%c0_8, %c0_9, %c0_10, %c0_11], %13 {strides = array<i32>} : memref<1x16x16x4xbf16, #tpu.memory_space<vmem>>, vector<1x16x16x4xbf16>,
    return
  }
  func.func @transform_0(%arg0: i32, %arg1: i32) -> (i32, i32, i32, i32) {
    %c0_i32 = arith.constant 0 : i32
    %c0_i32_0 = arith.constant 0 : i32
    %c0_i32_1 = arith.constant 0 : i32
    return %arg0, %arg1, %c0_i32, %c0_i32_0 : i32, i32, i32, i32
  }
  func.func @transform_1(%arg0: i32, %arg1: i32) -> (i32, i32, i32) {
    %c0_i32 = arith.constant 0 : i32
    %c0_i32_0 = arith.constant 0 : i32
    %c0_i32_1 = arith.constant 0 : i32
    %c0_i32_2 = arith.constant 0 : i32
    return %c0_i32, %c0_i32_0, %c0_i32_1 : i32, i32, i32
  }
  func.func @transform_2(%arg0: i32, %arg1: i32) -> (i32, i32, i32, i32) {
    %c0_i32 = arith.constant 0 : i32
    %c0_i32_0 = arith.constant 0 : i32
    %c0_i32_1 = arith.constant 0 : i32
    return %arg0, %arg1, %c0_i32, %c0_i32_0 : i32, i32, i32, i32
  }
}

module attributes {stable_mosaic.version = 11 : i64} {
  func.func @_conv_bias_stats_kernel(%arg0: i32, %arg1: i32, %arg2: memref<1x16x16x4xbf16, #tpu.memory_space<vmem>>, %arg3: memref<1x1x16x4xbf16, #tpu.memory_space<vmem>>, %arg4: memref<1x1x16x4xbf16, #tpu.memory_space<vmem>>, %arg5: memref<9x4x4xbf16, #tpu.memory_space<vmem>>, %arg6: memref<1x4xf32, #tpu.memory_space<vmem>>, %arg7: memref<1x16x16x4xf32, #tpu.memory_space<vmem>>, %arg8: memref<1x1x2x4xf32, #tpu.memory_space<vmem>>, %arg9: memref<18x18x4xbf16, #tpu.memory_space<vmem>>) attributes {dimension_semantics = [#tpu.dimension_semantics<parallel>, #tpu.dimension_semantics<parallel>], iteration_bounds = array<i64: 2, 1>, scalar_prefetch = 0 : i64, scratch_operands = 1 : i64, tpu.core_type = #tpu.core_type<tc>, window_params = [{transform_indices = @transform_0, window_bounds = array<i64: 1, 16, 16, 4>}, {transform_indices = @transform_1, window_bounds = array<i64: 1, 1, 16, 4>}, {transform_indices = @transform_2, window_bounds = array<i64: 1, 1, 16, 4>}, {pipeline_mode = #tpu.pipeline_mode<synchronous>, transform_indices = @transform_3, window_bounds = array<i64: 9, 4, 4>}, {pipeline_mode = #tpu.pipeline_mode<synchronous>, transform_indices = @transform_4, window_bounds = array<i64: 1, 4>}, {transform_indices = @transform_5, window_bounds = array<i64: 1, 16, 16, 4>}, {transform_indices = @transform_6, window_bounds = array<i64: 1, 1, 2, 4>}]} {
    %cst = arith.constant 0.000000e+00 : bf16
    %0 = vector.broadcast %cst : bf16 to vector<18x18x4xbf16>
    %c0 = arith.constant 0 : index
    %c0_0 = arith.constant 0 : index
    %c0_1 = arith.constant 0 : index
    %1 = vector.load %arg9[%c0, %c0_0, %c0_1] : memref<18x18x4xbf16, #tpu.memory_space<vmem>>, vector<18x18x4xbf16>
    tpu.vector_store %arg9[%c0, %c0_0, %c0_1], %0 {strides = array<i32>} : memref<18x18x4xbf16, #tpu.memory_space<vmem>>, vector<18x18x4xbf16>,
    %c0_2 = arith.constant 0 : index
    %c0_3 = arith.constant 0 : index
    %c0_4 = arith.constant 0 : index
    %c0_5 = arith.constant 0 : index
    %2 = vector.load %arg2[%c0_2, %c0_3, %c0_4, %c0_5] : memref<1x16x16x4xbf16, #tpu.memory_space<vmem>>, vector<1x16x16x4xbf16>
    %3 = vector.shape_cast %2 : vector<1x16x16x4xbf16> to vector<16x16x4xbf16>
    %c1 = arith.constant 1 : index
    %c1_6 = arith.constant 1 : index
    %c0_7 = arith.constant 0 : index
    %4 = vector.load %arg9[%c1, %c1_6, %c0_7] : memref<18x18x4xbf16, #tpu.memory_space<vmem>>, vector<16x16x4xbf16>
    tpu.vector_store %arg9[%c1, %c1_6, %c0_7], %3 {strides = array<i32>} : memref<18x18x4xbf16, #tpu.memory_space<vmem>>, vector<16x16x4xbf16>,
    %c0_i32 = arith.constant 0 : i32
    %5 = arith.cmpi sgt, %arg1, %c0_i32 : i32
    %6 = arith.extui %5 : i1 to i32
    %c0_i32_8 = arith.constant 0 : i32
    %7 = arith.cmpi ne, %6, %c0_i32_8 : i32
    scf.if %7 {
      %c0_80 = arith.constant 0 : index
      %c0_81 = arith.constant 0 : index
      %c0_82 = arith.constant 0 : index
      %c0_83 = arith.constant 0 : index
      %80 = vector.load %arg3[%c0_80, %c0_81, %c0_82, %c0_83] : memref<1x1x16x4xbf16, #tpu.memory_space<vmem>>, vector<1x1x16x4xbf16>
      %81 = vector.shape_cast %80 : vector<1x1x16x4xbf16> to vector<1x16x4xbf16>
      %c0_84 = arith.constant 0 : index
      %c1_85 = arith.constant 1 : index
      %c0_86 = arith.constant 0 : index
      %82 = vector.load %arg9[%c0_84, %c1_85, %c0_86] : memref<18x18x4xbf16, #tpu.memory_space<vmem>>, vector<1x16x4xbf16>
      tpu.vector_store %arg9[%c0_84, %c1_85, %c0_86], %81 {strides = array<i32>} : memref<18x18x4xbf16, #tpu.memory_space<vmem>>, vector<1x16x4xbf16>,
    } else {
    }
    %c1_i32 = arith.constant 1 : i32
    %8 = arith.addi %arg1, %c1_i32 : i32
    %c1_i32_9 = arith.constant 1 : i32
    %9 = arith.cmpi slt, %8, %c1_i32_9 : i32
    %10 = arith.extui %9 : i1 to i32
    %c0_i32_10 = arith.constant 0 : i32
    %11 = arith.cmpi ne, %10, %c0_i32_10 : i32
    scf.if %11 {
      %c0_80 = arith.constant 0 : index
      %c0_81 = arith.constant 0 : index
      %c0_82 = arith.constant 0 : index
      %c0_83 = arith.constant 0 : index
      %80 = vector.load %arg4[%c0_80, %c0_81, %c0_82, %c0_83] : memref<1x1x16x4xbf16, #tpu.memory_space<vmem>>, vector<1x1x16x4xbf16>
      %81 = vector.shape_cast %80 : vector<1x1x16x4xbf16> to vector<1x16x4xbf16>
      %c17 = arith.constant 17 : index
      %c1_84 = arith.constant 1 : index
      %c0_85 = arith.constant 0 : index
      %82 = vector.load %arg9[%c17, %c1_84, %c0_85] : memref<18x18x4xbf16, #tpu.memory_space<vmem>>, vector<1x16x4xbf16>
      tpu.vector_store %arg9[%c17, %c1_84, %c0_85], %81 {strides = array<i32>} : memref<18x18x4xbf16, #tpu.memory_space<vmem>>, vector<1x16x4xbf16>,
    } else {
    }
    %cst_11 = arith.constant 0.000000e+00 : f32
    %12 = vector.broadcast %cst_11 : f32 to vector<256x4xf32>
    %c0_12 = arith.constant 0 : index
    %c0_13 = arith.constant 0 : index
    %c0_14 = arith.constant 0 : index
    %13 = vector.load %arg9[%c0_12, %c0_13, %c0_14] : memref<18x18x4xbf16, #tpu.memory_space<vmem>>, vector<16x16x4xbf16>
    %14 = vector.shape_cast %13 : vector<16x16x4xbf16> to vector<256x4xbf16>
    %c0_15 = arith.constant 0 : index
    %c0_16 = arith.constant 0 : index
    %c0_17 = arith.constant 0 : index
    %15 = vector.load %arg5[%c0_15, %c0_16, %c0_17] : memref<9x4x4xbf16, #tpu.memory_space<vmem>>, vector<1x4x4xbf16>
    %16 = vector.shape_cast %15 : vector<1x4x4xbf16> to vector<4x4xbf16>
    %cst_18 = arith.constant dense<0.000000e+00> : vector<256x4xf32>
    %17 = tpu.matmul %14, %16, %cst_18 {dimension_numbers = #tpu.dot_dimension_numbers<[1], [0], [0], [1], [0, 0, 1, 1], [], []>} : vector<256x4xbf16>, vector<4x4xbf16>, vector<256x4xf32> -> vector<256x4xf32>
    %18 = arith.addf %12, %17 : vector<256x4xf32>
    %c0_19 = arith.constant 0 : index
    %c1_20 = arith.constant 1 : index
    %c0_21 = arith.constant 0 : index
    %19 = vector.load %arg9[%c0_19, %c1_20, %c0_21] : memref<18x18x4xbf16, #tpu.memory_space<vmem>>, vector<16x16x4xbf16>
    %20 = vector.shape_cast %19 : vector<16x16x4xbf16> to vector<256x4xbf16>
    %c1_22 = arith.constant 1 : index
    %c0_23 = arith.constant 0 : index
    %c0_24 = arith.constant 0 : index
    %21 = vector.load %arg5[%c1_22, %c0_23, %c0_24] : memref<9x4x4xbf16, #tpu.memory_space<vmem>>, vector<1x4x4xbf16>
    %22 = vector.shape_cast %21 : vector<1x4x4xbf16> to vector<4x4xbf16>
    %cst_25 = arith.constant dense<0.000000e+00> : vector<256x4xf32>
    %23 = tpu.matmul %20, %22, %cst_25 {dimension_numbers = #tpu.dot_dimension_numbers<[1], [0], [0], [1], [0, 0, 1, 1], [], []>} : vector<256x4xbf16>, vector<4x4xbf16>, vector<256x4xf32> -> vector<256x4xf32>
    %24 = arith.addf %18, %23 : vector<256x4xf32>
    %c0_26 = arith.constant 0 : index
    %c2 = arith.constant 2 : index
    %c0_27 = arith.constant 0 : index
    %25 = vector.load %arg9[%c0_26, %c2, %c0_27] : memref<18x18x4xbf16, #tpu.memory_space<vmem>>, vector<16x16x4xbf16>
    %26 = vector.shape_cast %25 : vector<16x16x4xbf16> to vector<256x4xbf16>
    %c2_28 = arith.constant 2 : index
    %c0_29 = arith.constant 0 : index
    %c0_30 = arith.constant 0 : index
    %27 = vector.load %arg5[%c2_28, %c0_29, %c0_30] : memref<9x4x4xbf16, #tpu.memory_space<vmem>>, vector<1x4x4xbf16>
    %28 = vector.shape_cast %27 : vector<1x4x4xbf16> to vector<4x4xbf16>
    %cst_31 = arith.constant dense<0.000000e+00> : vector<256x4xf32>
    %29 = tpu.matmul %26, %28, %cst_31 {dimension_numbers = #tpu.dot_dimension_numbers<[1], [0], [0], [1], [0, 0, 1, 1], [], []>} : vector<256x4xbf16>, vector<4x4xbf16>, vector<256x4xf32> -> vector<256x4xf32>
    %30 = arith.addf %24, %29 : vector<256x4xf32>
    %c1_32 = arith.constant 1 : index
    %c0_33 = arith.constant 0 : index
    %c0_34 = arith.constant 0 : index
    %31 = vector.load %arg9[%c1_32, %c0_33, %c0_34] : memref<18x18x4xbf16, #tpu.memory_space<vmem>>, vector<16x16x4xbf16>
    %32 = vector.shape_cast %31 : vector<16x16x4xbf16> to vector<256x4xbf16>
    %c3 = arith.constant 3 : index
    %c0_35 = arith.constant 0 : index
    %c0_36 = arith.constant 0 : index
    %33 = vector.load %arg5[%c3, %c0_35, %c0_36] : memref<9x4x4xbf16, #tpu.memory_space<vmem>>, vector<1x4x4xbf16>
    %34 = vector.shape_cast %33 : vector<1x4x4xbf16> to vector<4x4xbf16>
    %cst_37 = arith.constant dense<0.000000e+00> : vector<256x4xf32>
    %35 = tpu.matmul %32, %34, %cst_37 {dimension_numbers = #tpu.dot_dimension_numbers<[1], [0], [0], [1], [0, 0, 1, 1], [], []>} : vector<256x4xbf16>, vector<4x4xbf16>, vector<256x4xf32> -> vector<256x4xf32>
    %36 = arith.addf %30, %35 : vector<256x4xf32>
    %c1_38 = arith.constant 1 : index
    %c1_39 = arith.constant 1 : index
    %c0_40 = arith.constant 0 : index
    %37 = vector.load %arg9[%c1_38, %c1_39, %c0_40] : memref<18x18x4xbf16, #tpu.memory_space<vmem>>, vector<16x16x4xbf16>
    %38 = vector.shape_cast %37 : vector<16x16x4xbf16> to vector<256x4xbf16>
    %c4 = arith.constant 4 : index
    %c0_41 = arith.constant 0 : index
    %c0_42 = arith.constant 0 : index
    %39 = vector.load %arg5[%c4, %c0_41, %c0_42] : memref<9x4x4xbf16, #tpu.memory_space<vmem>>, vector<1x4x4xbf16>
    %40 = vector.shape_cast %39 : vector<1x4x4xbf16> to vector<4x4xbf16>
    %cst_43 = arith.constant dense<0.000000e+00> : vector<256x4xf32>
    %41 = tpu.matmul %38, %40, %cst_43 {dimension_numbers = #tpu.dot_dimension_numbers<[1], [0], [0], [1], [0, 0, 1, 1], [], []>} : vector<256x4xbf16>, vector<4x4xbf16>, vector<256x4xf32> -> vector<256x4xf32>
    %42 = arith.addf %36, %41 : vector<256x4xf32>
    %c1_44 = arith.constant 1 : index
    %c2_45 = arith.constant 2 : index
    %c0_46 = arith.constant 0 : index
    %43 = vector.load %arg9[%c1_44, %c2_45, %c0_46] : memref<18x18x4xbf16, #tpu.memory_space<vmem>>, vector<16x16x4xbf16>
    %44 = vector.shape_cast %43 : vector<16x16x4xbf16> to vector<256x4xbf16>
    %c5 = arith.constant 5 : index
    %c0_47 = arith.constant 0 : index
    %c0_48 = arith.constant 0 : index
    %45 = vector.load %arg5[%c5, %c0_47, %c0_48] : memref<9x4x4xbf16, #tpu.memory_space<vmem>>, vector<1x4x4xbf16>
    %46 = vector.shape_cast %45 : vector<1x4x4xbf16> to vector<4x4xbf16>
    %cst_49 = arith.constant dense<0.000000e+00> : vector<256x4xf32>
    %47 = tpu.matmul %44, %46, %cst_49 {dimension_numbers = #tpu.dot_dimension_numbers<[1], [0], [0], [1], [0, 0, 1, 1], [], []>} : vector<256x4xbf16>, vector<4x4xbf16>, vector<256x4xf32> -> vector<256x4xf32>
    %48 = arith.addf %42, %47 : vector<256x4xf32>
    %c2_50 = arith.constant 2 : index
    %c0_51 = arith.constant 0 : index
    %c0_52 = arith.constant 0 : index
    %49 = vector.load %arg9[%c2_50, %c0_51, %c0_52] : memref<18x18x4xbf16, #tpu.memory_space<vmem>>, vector<16x16x4xbf16>
    %50 = vector.shape_cast %49 : vector<16x16x4xbf16> to vector<256x4xbf16>
    %c6 = arith.constant 6 : index
    %c0_53 = arith.constant 0 : index
    %c0_54 = arith.constant 0 : index
    %51 = vector.load %arg5[%c6, %c0_53, %c0_54] : memref<9x4x4xbf16, #tpu.memory_space<vmem>>, vector<1x4x4xbf16>
    %52 = vector.shape_cast %51 : vector<1x4x4xbf16> to vector<4x4xbf16>
    %cst_55 = arith.constant dense<0.000000e+00> : vector<256x4xf32>
    %53 = tpu.matmul %50, %52, %cst_55 {dimension_numbers = #tpu.dot_dimension_numbers<[1], [0], [0], [1], [0, 0, 1, 1], [], []>} : vector<256x4xbf16>, vector<4x4xbf16>, vector<256x4xf32> -> vector<256x4xf32>
    %54 = arith.addf %48, %53 : vector<256x4xf32>
    %c2_56 = arith.constant 2 : index
    %c1_57 = arith.constant 1 : index
    %c0_58 = arith.constant 0 : index
    %55 = vector.load %arg9[%c2_56, %c1_57, %c0_58] : memref<18x18x4xbf16, #tpu.memory_space<vmem>>, vector<16x16x4xbf16>
    %56 = vector.shape_cast %55 : vector<16x16x4xbf16> to vector<256x4xbf16>
    %c7 = arith.constant 7 : index
    %c0_59 = arith.constant 0 : index
    %c0_60 = arith.constant 0 : index
    %57 = vector.load %arg5[%c7, %c0_59, %c0_60] : memref<9x4x4xbf16, #tpu.memory_space<vmem>>, vector<1x4x4xbf16>
    %58 = vector.shape_cast %57 : vector<1x4x4xbf16> to vector<4x4xbf16>
    %cst_61 = arith.constant dense<0.000000e+00> : vector<256x4xf32>
    %59 = tpu.matmul %56, %58, %cst_61 {dimension_numbers = #tpu.dot_dimension_numbers<[1], [0], [0], [1], [0, 0, 1, 1], [], []>} : vector<256x4xbf16>, vector<4x4xbf16>, vector<256x4xf32> -> vector<256x4xf32>
    %60 = arith.addf %54, %59 : vector<256x4xf32>
    %c2_62 = arith.constant 2 : index
    %c2_63 = arith.constant 2 : index
    %c0_64 = arith.constant 0 : index
    %61 = vector.load %arg9[%c2_62, %c2_63, %c0_64] : memref<18x18x4xbf16, #tpu.memory_space<vmem>>, vector<16x16x4xbf16>
    %62 = vector.shape_cast %61 : vector<16x16x4xbf16> to vector<256x4xbf16>
    %c8 = arith.constant 8 : index
    %c0_65 = arith.constant 0 : index
    %c0_66 = arith.constant 0 : index
    %63 = vector.load %arg5[%c8, %c0_65, %c0_66] : memref<9x4x4xbf16, #tpu.memory_space<vmem>>, vector<1x4x4xbf16>
    %64 = vector.shape_cast %63 : vector<1x4x4xbf16> to vector<4x4xbf16>
    %cst_67 = arith.constant dense<0.000000e+00> : vector<256x4xf32>
    %65 = tpu.matmul %62, %64, %cst_67 {dimension_numbers = #tpu.dot_dimension_numbers<[1], [0], [0], [1], [0, 0, 1, 1], [], []>} : vector<256x4xbf16>, vector<4x4xbf16>, vector<256x4xf32> -> vector<256x4xf32>
    %66 = arith.addf %60, %65 : vector<256x4xf32>
    %c0_68 = arith.constant 0 : index
    %c0_69 = arith.constant 0 : index
    %67 = vector.load %arg6[%c0_68, %c0_69] : memref<1x4xf32, #tpu.memory_space<vmem>>, vector<1x4xf32>
    %68 = vector.broadcast %67 : vector<1x4xf32> to vector<256x4xf32>
    %69 = arith.addf %66, %68 : vector<256x4xf32>
    %70 = vector.shape_cast %69 : vector<256x4xf32> to vector<1x16x16x4xf32>
    %c0_70 = arith.constant 0 : index
    %c0_71 = arith.constant 0 : index
    %c0_72 = arith.constant 0 : index
    %c0_73 = arith.constant 0 : index
    %71 = vector.load %arg7[%c0_70, %c0_71, %c0_72, %c0_73] : memref<1x16x16x4xf32, #tpu.memory_space<vmem>>, vector<1x16x16x4xf32>
    tpu.vector_store %arg7[%c0_70, %c0_71, %c0_72, %c0_73], %70 {strides = array<i32>} : memref<1x16x16x4xf32, #tpu.memory_space<vmem>>, vector<1x16x16x4xf32>,
    %cst_74 = arith.constant dense<0.000000e+00> : vector<4xf32>
    %72 = vector.multi_reduction <add>, %69, %cst_74 [0] : vector<256x4xf32> to vector<4xf32>
    %73 = vector.shape_cast %72 : vector<4xf32> to vector<1x4xf32>
    %74 = arith.mulf %69, %69 : vector<256x4xf32>
    %cst_75 = arith.constant dense<0.000000e+00> : vector<4xf32>
    %75 = vector.multi_reduction <add>, %74, %cst_75 [0] : vector<256x4xf32> to vector<4xf32>
    %76 = vector.shape_cast %75 : vector<4xf32> to vector<1x4xf32>
    %77 = tpu.concatenate %73, %76 in 0 : vector<1x4xf32>, vector<1x4xf32> -> vector<2x4xf32>
    %78 = vector.shape_cast %77 : vector<2x4xf32> to vector<1x1x2x4xf32>
    %c0_76 = arith.constant 0 : index
    %c0_77 = arith.constant 0 : index
    %c0_78 = arith.constant 0 : index
    %c0_79 = arith.constant 0 : index
    %79 = vector.load %arg8[%c0_76, %c0_77, %c0_78, %c0_79] : memref<1x1x2x4xf32, #tpu.memory_space<vmem>>, vector<1x1x2x4xf32>
    tpu.vector_store %arg8[%c0_76, %c0_77, %c0_78, %c0_79], %78 {strides = array<i32>} : memref<1x1x2x4xf32, #tpu.memory_space<vmem>>, vector<1x1x2x4xf32>,
    return
  }
  func.func @transform_0(%arg0: i32, %arg1: i32) -> (i32, i32, i32, i32) {
    %c0_i32 = arith.constant 0 : i32
    %c0_i32_0 = arith.constant 0 : i32
    %c0_i32_1 = arith.constant 0 : i32
    return %arg0, %arg1, %c0_i32, %c0_i32_0 : i32, i32, i32, i32
  }
  func.func @transform_1(%arg0: i32, %arg1: i32) -> (i32, i32, i32, i32) {
    %c16_i32 = arith.constant 16 : i32
    %0 = arith.muli %arg1, %c16_i32 : i32
    %c1_i32 = arith.constant 1 : i32
    %1 = arith.subi %0, %c1_i32 : i32
    %c0_i32 = arith.constant 0 : i32
    %2 = arith.maxsi %1, %c0_i32 : i32
    %c0_i32_0 = arith.constant 0 : i32
    %c0_i32_1 = arith.constant 0 : i32
    %c0_i32_2 = arith.constant 0 : i32
    return %arg0, %2, %c0_i32_0, %c0_i32_1 : i32, i32, i32, i32
  }
  func.func @transform_2(%arg0: i32, %arg1: i32) -> (i32, i32, i32, i32) {
    %c1_i32 = arith.constant 1 : i32
    %0 = arith.addi %arg1, %c1_i32 : i32
    %c16_i32 = arith.constant 16 : i32
    %1 = arith.muli %0, %c16_i32 : i32
    %c15_i32 = arith.constant 15 : i32
    %2 = arith.minsi %1, %c15_i32 : i32
    %c0_i32 = arith.constant 0 : i32
    %c0_i32_0 = arith.constant 0 : i32
    %c0_i32_1 = arith.constant 0 : i32
    return %arg0, %2, %c0_i32, %c0_i32_0 : i32, i32, i32, i32
  }
  func.func @transform_3(%arg0: i32, %arg1: i32) -> (i32, i32, i32) {
    %c0_i32 = arith.constant 0 : i32
    %c0_i32_0 = arith.constant 0 : i32
    %c0_i32_1 = arith.constant 0 : i32
    %c0_i32_2 = arith.constant 0 : i32
    return %c0_i32, %c0_i32_0, %c0_i32_1 : i32, i32, i32
  }
  func.func @transform_4(%arg0: i32, %arg1: i32) -> (i32, i32) {
    %c0_i32 = arith.constant 0 : i32
    %c0_i32_0 = arith.constant 0 : i32
    %c0_i32_1 = arith.constant 0 : i32
    return %c0_i32, %c0_i32_0 : i32, i32
  }
  func.func @transform_5(%arg0: i32, %arg1: i32) -> (i32, i32, i32, i32) {
    %c0_i32 = arith.constant 0 : i32
    %c0_i32_0 = arith.constant 0 : i32
    %c0_i32_1 = arith.constant 0 : i32
    return %arg0, %arg1, %c0_i32, %c0_i32_0 : i32, i32, i32, i32
  }
  func.func @transform_6(%arg0: i32, %arg1: i32) -> (i32, i32, i32, i32) {
    %c0_i32 = arith.constant 0 : i32
    %c0_i32_0 = arith.constant 0 : i32
    %c0_i32_1 = arith.constant 0 : i32
    return %arg0, %arg1, %c0_i32, %c0_i32_0 : i32, i32, i32, i32
  }
}

module attributes {stable_mosaic.version = 11 : i64} {
  func.func @_bn_relu_kernel(%arg0: i32, %arg1: i32, %arg2: memref<1x16x16x4xf32, #tpu.memory_space<vmem>>, %arg3: memref<2x1x4xf32, #tpu.memory_space<vmem>>, %arg4: memref<1x16x16x4xf32, #tpu.memory_space<vmem>>) attributes {dimension_semantics = [#tpu.dimension_semantics<parallel>, #tpu.dimension_semantics<parallel>], iteration_bounds = array<i64: 2, 1>, scalar_prefetch = 0 : i64, scratch_operands = 0 : i64, tpu.core_type = #tpu.core_type<tc>, window_params = [{transform_indices = @transform_0, window_bounds = array<i64: 1, 16, 16, 4>}, {pipeline_mode = #tpu.pipeline_mode<synchronous>, transform_indices = @transform_1, window_bounds = array<i64: 2, 1, 4>}, {transform_indices = @transform_2, window_bounds = array<i64: 1, 16, 16, 4>}]} {
    %c0 = arith.constant 0 : index
    %c0_0 = arith.constant 0 : index
    %c0_1 = arith.constant 0 : index
    %c0_2 = arith.constant 0 : index
    %0 = vector.load %arg2[%c0, %c0_0, %c0_1, %c0_2] : memref<1x16x16x4xf32, #tpu.memory_space<vmem>>, vector<1x16x16x4xf32>
    %c0_3 = arith.constant 0 : index
    %c0_4 = arith.constant 0 : index
    %c0_5 = arith.constant 0 : index
    %1 = vector.load %arg3[%c0_3, %c0_4, %c0_5] : memref<2x1x4xf32, #tpu.memory_space<vmem>>, vector<1x1x4xf32>
    %2 = vector.shape_cast %1 : vector<1x1x4xf32> to vector<1x4xf32>
    %3 = vector.shape_cast %2 : vector<1x4xf32> to vector<1x1x1x4xf32>
    %4 = vector.broadcast %3 : vector<1x1x1x4xf32> to vector<1x16x16x4xf32>
    %5 = arith.mulf %0, %4 : vector<1x16x16x4xf32>
    %c1 = arith.constant 1 : index
    %c0_6 = arith.constant 0 : index
    %c0_7 = arith.constant 0 : index
    %6 = vector.load %arg3[%c1, %c0_6, %c0_7] : memref<2x1x4xf32, #tpu.memory_space<vmem>>, vector<1x1x4xf32>
    %7 = vector.shape_cast %6 : vector<1x1x4xf32> to vector<1x4xf32>
    %8 = vector.shape_cast %7 : vector<1x4xf32> to vector<1x1x1x4xf32>
    %9 = vector.broadcast %8 : vector<1x1x1x4xf32> to vector<1x16x16x4xf32>
    %10 = arith.addf %5, %9 : vector<1x16x16x4xf32>
    %cst = arith.constant 0.000000e+00 : f32
    %11 = vector.broadcast %cst : f32 to vector<1x16x16x4xf32>
    %12 = arith.maximumf %10, %11 : vector<1x16x16x4xf32>
    %c0_8 = arith.constant 0 : index
    %c0_9 = arith.constant 0 : index
    %c0_10 = arith.constant 0 : index
    %c0_11 = arith.constant 0 : index
    %13 = vector.load %arg4[%c0_8, %c0_9, %c0_10, %c0_11] : memref<1x16x16x4xf32, #tpu.memory_space<vmem>>, vector<1x16x16x4xf32>
    tpu.vector_store %arg4[%c0_8, %c0_9, %c0_10, %c0_11], %12 {strides = array<i32>} : memref<1x16x16x4xf32, #tpu.memory_space<vmem>>, vector<1x16x16x4xf32>,
    return
  }
  func.func @transform_0(%arg0: i32, %arg1: i32) -> (i32, i32, i32, i32) {
    %c0_i32 = arith.constant 0 : i32
    %c0_i32_0 = arith.constant 0 : i32
    %c0_i32_1 = arith.constant 0 : i32
    return %arg0, %arg1, %c0_i32, %c0_i32_0 : i32, i32, i32, i32
  }
  func.func @transform_1(%arg0: i32, %arg1: i32) -> (i32, i32, i32) {
    %c0_i32 = arith.constant 0 : i32
    %c0_i32_0 = arith.constant 0 : i32
    %c0_i32_1 = arith.constant 0 : i32
    %c0_i32_2 = arith.constant 0 : i32
    return %c0_i32, %c0_i32_0, %c0_i32_1 : i32, i32, i32
  }
  func.func @transform_2(%arg0: i32, %arg1: i32) -> (i32, i32, i32, i32) {
    %c0_i32 = arith.constant 0 : i32
    %c0_i32_0 = arith.constant 0 : i32
    %c0_i32_1 = arith.constant 0 : i32
    return %arg0, %arg1, %c0_i32, %c0_i32_0 : i32, i32, i32, i32
  }
}

</mosaic_0001>

<llo_original>
// kernel: recurrent_block_forward.7
$region0: #{recurrent_block_forward.7}
  #allocation0 [shape = 'u32[]', space=smem, size = 0x4, offset = 0x4, fixed_abs, tag = 'smem constant byte address 0x4 - core index']
  #allocation1 [shape = 'u32[144,128]{1,0:T(1,128)}', space=vmem, size = 0x12000, scoped, tag = 'internal scratch']
  %s0 = inlined_call_operand.vmem [shape: f32[2,16,16,4], index: 0, kind: input, shape index: {}]
  %s1 = inlined_call_operand.vmem [shape: f32[2,1,4], index: 1, kind: input, shape index: {}]
  %s2 = inlined_call_operand.vmem [shape: f32[2,16,16,4], index: 2, kind: output, shape index: {}]
  %s3 = sld [smem:[#allocation0]]
  $region41: #{recurrent_block_forward.7} parent=0
    _
  %s5 = ssub.s32 1, %s3
  %s6 = scalar_select 0, %s5, %s3
  loop: start=0, step=1, limit=4
  $region2: #{recurrent_block_forward.7} parent=0 // loop_pre_header
    _
  $region3: #{recurrent_block_forward.7} parent=0 // loop_header
    %s8 = sphi 0, %s12
    %p9 = scmp.ge.s32.totalorder %s8, 4
    %s15 = sphi 0, %s27
    %s16 = sphi 0, %s23
    %s17 = sphi 0, %s15
    %s18 = sphi 0, %s16
    %s19 = sphi 0, %s17
    %s20 = sphi 0, %s18
    %s32 = sphi 0, %s34
    %s35 = sphi 0, %s32
    %s36 = sphi 0, %s35
    %s52 = sphi 0, %s36
    %s56 = sphi 0, %s56
    %s58 = sphi 0, %s56
    %s59 = sphi 0, %s58
    %s73 = sphi 0, %s59
    %s81 = sphi 0, %s83
    %s84 = sphi 0, %s81
    %s85 = sphi 0, %s84
    %s101 = sphi 0, %s85
  $region4: #{recurrent_block_forward.7} parent=0 // loop_header_branch
    %11 = sbr.rel (%p9) target = $region8
  $region5: #{recurrent_block_forward.7} parent=0 // loop_body
    %s13 = ssub.s32 %s8, 1
    %s14 = ssub.s32 %s8, 2
    %s21 = sadd.s32 1, %s16
    %p22 = scmp.ge.s32.totalorder %s21, 1
    %s23 = scalar_select %p22, 0, %s21
    %s24 = sadd.s32 1, %s15
    %s25 = scalar_select %p22, %s24, %s15
    %p26 = scmp.ge.s32.totalorder %s25, 2
    %s27 = scalar_select %p26, 0, %s25
    %s28 = ssub.s32 %s15, %s27
    %s29 = ssub.s32 %s16, %s23
    %s30 = sor.u32 %s28, %s29
    %p31 = scmp.eq.s32.totalorder %s30, 0
    %s33 = sadd.s32 %s32, 1
    %s34 = scalar_select %p31, %s32, %s33
    %p37 = pneg %p31
    %p38 = scmp.eq.s32.totalorder %s8, 1
    %p39 = por %p37, %p38
    %p40 = scmp.ne.s32.totalorder %s32, %s35
    %p41 = scmp.eq.s32.totalorder %s8, 0
    %p42 = por %p40, %p41
    %p43 = scmp.ne.s32.totalorder %s32, %s35
    %p44 = scmp.eq.s32.totalorder %s13, 1
    %p45 = por %p43, %p44
    %p46 = scmp.ne.s32.totalorder %s35, %s36
    %p47 = scmp.eq.s32.totalorder %s13, 0
    %p48 = por %p46, %p47
    %p49 = scmp.ne.s32.totalorder %s35, %s36
    %p50 = scmp.eq.s32.totalorder %s14, 1
    %p51 = por %p49, %p50
    %p53 = scmp.ne.s32.totalorder %s36, %s52
    %p54 = scmp.eq.s32.totalorder %s14, 0
    %p55 = por %p53, %p54
    %s57 = sadd.s32 %s56, 1
    %p60 = scmp.eq.s32.totalorder %s8, 1
    %p61 = scmp.ne.s32.totalorder %s56, %s58
    %p62 = scmp.eq.s32.totalorder %s8, 0
    %p63 = por %p61, %p62
    %p64 = scmp.ne.s32.totalorder %s56, %s58
    %p65 = scmp.eq.s32.totalorder %s13, 1
    %p66 = por %p64, %p65
    %p67 = scmp.ne.s32.totalorder %s58, %s59
    %p68 = scmp.eq.s32.totalorder %s13, 0
    %p69 = por %p67, %p68
    %p70 = scmp.ne.s32.totalorder %s58, %s59
    %p71 = scmp.eq.s32.totalorder %s14, 1
    %p72 = por %p70, %p71
    %p74 = scmp.ne.s32.totalorder %s59, %s73
    %p75 = scmp.eq.s32.totalorder %s14, 0
    %p76 = por %p74, %p75
    %s77 = ssub.s32 %s15, %s27
    %s78 = ssub.s32 %s16, %s23
    %s79 = sor.u32 %s77, %s78
    %p80 = scmp.eq.s32.totalorder %s79, 0
    %s82 = sadd.s32 %s81, 1
    %s83 = scalar_select %p80, %s81, %s82
    %p86 = pneg %p80
    %p87 = scmp.eq.s32.totalorder %s8, 1
    %p88 = por %p86, %p87
    %p89 = scmp.ne.s32.totalorder %s81, %s84
    %p90 = scmp.eq.s32.totalorder %s8, 0
    %p91 = por %p89, %p90
    %p92 = scmp.ne.s32.totalorder %s81, %s84
    %p93 = scmp.eq.s32.totalorder %s13, 1
    %p94 = por %p92, %p93
    %p95 = scmp.ne.s32.totalorder %s84, %s85
    %p96 = scmp.eq.s32.totalorder %s13, 0
    %p97 = por %p95, %p96
    %p98 = scmp.ne.s32.totalorder %s84, %s85
    %p99 = scmp.eq.s32.totalorder %s14, 1
    %p100 = por %p98, %p99
    %p102 = scmp.ne.s32.totalorder %s85, %s101
    %p103 = scmp.eq.s32.totalorder %s14, 0
    %p104 = por %p102, %p103
    %p105 = scmp.le.s32.totalorder 1, %s8
    %p106 = scmp.lt.s32.totalorder %s8, 3
    %p107 = pnand %p105, %p106
    %p108 = pneg %p107
    // Predicated region
    $region9: #{recurrent_block_forward.7} parent=5 // pred_check
      _
    $region10: #{recurrent_block_forward.7} parent=5 // pred_check_branch
      %110 = sbr.rel (%p107) target = $region12
    $region11: #{recurrent_block_forward.7} parent=5 // pred_region
      %s111 = ssub.s32 %s8, 1
      // Predicated region
      $region13: #{recurrent_block_forward.7} parent=11 // pred_check
        %p112 = pneg %p69
      $region14: #{recurrent_block_forward.7} parent=11 // pred_check_branch
        %114 = sbr.rel (%p112) target = $region16
      $region15: #{recurrent_block_forward.7} parent=11 // pred_region
        _
      $region16: #{recurrent_block_forward.7} parent=11 // pred_fallthru
        _
    $region12: #{recurrent_block_forward.7} parent=5 // pred_fallthru
      _
    %p115 = scmp.lt.s32.totalorder %s8, 2
    // Predicated region
    $region17: #{recurrent_block_forward.7} parent=5 // pred_check
      %p116 = pneg %p115
    $region18: #{recurrent_block_forward.7} parent=5 // pred_check_branch
      %118 = sbr.rel (%p116) target = $region20
    $region19: #{recurrent_block_forward.7} parent=5 // pred_region
      // Predicated region
      $region21: #{recurrent_block_forward.7} parent=19 // pred_check
        %p119 = pneg %p42
      $region22: #{recurrent_block_forward.7} parent=19 // pred_check_branch
        %121 = sbr.rel (%p119) target = $region24
      $region23: #{recurrent_block_forward.7} parent=19 // pred_region
        %s122 = smul.u32 16, %s16
        %p123 = scmp.lt.s32.totalorder %s15, 1
        %s124 = scalar_select %p123, %s15, 1
        %p125 = scmp.lt.s32.totalorder %s122, 15
        %s126 = scalar_select %p125, %s122, 15
        %s127 = smul.addr %s126, 2
        %s128 = smul.addr %s124, 32
        %s129 = sadd.s32 %s127, %s128
        %s130 = smul.addr %s129, 8
        %s131 = scalar_lea.vmem %s0, %s130
        %s132 = smul.u32 16, %s16
      $region24: #{recurrent_block_forward.7} parent=19 // pred_fallthru
        _
    $region20: #{recurrent_block_forward.7} parent=5 // pred_fallthru
      _
    %p133 = scmp.le.s32.totalorder 1, %s8
    %p134 = scmp.lt.s32.totalorder %s8, 3
    %p135 = pnand %p133, %p134
    %p136 = pneg %p135
    // Predicated region
    $region25: #{recurrent_block_forward.7} parent=5 // pred_check
      _
    $region26: #{recurrent_block_forward.7} parent=5 // pred_check_branch
      %138 = sbr.rel (%p135) target = $region28
    $region27: #{recurrent_block_forward.7} parent=5 // pred_region
      %s139 = ssub.s32 %s8, 1
      %s140 = smul.u32 16, %s18
      %p141 = scmp.lt.s32.totalorder %s17, 1
      %s142 = scalar_select %p141, %s17, 1
      %p143 = scmp.lt.s32.totalorder %s140, 15
      %s144 = scalar_select %p143, %s140, 15
      %s145 = smul.addr %s144, 2
      %s146 = smul.addr %s142, 32
      %s147 = sadd.s32 %s145, %s146
      %s148 = smul.addr %s147, 8
      %s149 = scalar_lea.vmem %s0, %s148
      %p150 = pneg %p48
      %p151 = pneg %p45
      %p152 = pneg %p69
      %p153 = pneg %p66
      %p154 = pneg %p97
      %p155 = pneg %p94
      %s156 = smul.u32 16, %s18
      %p157 = scmp.lt.s32.totalorder %s17, 1
      %s158 = scalar_select %p157, %s17, 1
      %p159 = scmp.lt.s32.totalorder %s156, 15
      %s160 = scalar_select %p159, %s156, 15
      %s161 = smul.addr %s160, 2
      %s162 = smul.addr %s158, 32
      %s163 = sadd.s32 %s161, %s162
      %s164 = smul.addr %s163, 8
      %s165 = scalar_lea.vmem %s2, %s164
      %s166 = smul.u32 16, %s18
      %p167 = scmp.lt.s32.totalorder %s17, 1
      %s168 = scalar_select %p167, %s17, 1
      %p169 = scmp.lt.s32.totalorder %s166, 15
      %s170 = scalar_select %p169, %s166, 15
      %s171 = smul.addr %s170, 2
      %s172 = smul.addr %s168, 32
      %s173 = sadd.s32 %s171, %s172
      %s174 = smul.addr %s173, 8
      %s175 = scalar_lea.vmem %s0, %s174
      %s176 = smul.u32 16, %s18
      %s177 = smul.u32 16, %s18
      %p178 = scmp.lt.s32.totalorder %s17, 1
      %s179 = scalar_select %p178, %s17, 1
      %p180 = scmp.lt.s32.totalorder %s177, 15
      %s181 = scalar_select %p180, %s177, 15
      %s182 = smul.addr %s181, 2
      %s183 = smul.addr %s179, 32
      %s184 = sadd.s32 %s182, %s183
      %s185 = smul.addr %s184, 8
      %s186 = scalar_lea.vmem %s2, %s185
      %s187 = smul.u32 16, %s18
      %v188 = vld [vmem:[%s175] sm:$0xff]
      %v189 = vld [vmem:[%s175 + $0x8] sm:$0xff]
      %v190 = vld [vmem:[%s175 + $0x10] sm:$0xff]
      %v191 = vld [vmem:[%s175 + $0x18] sm:$0xff]
      %v192 = vld [vmem:[%s175 + $0x20] sm:$0xff]
      %v193 = vld [vmem:[%s175 + $0x28] sm:$0xff]
      %v194 = vld [vmem:[%s175 + $0x30] sm:$0xff]
      %v195 = vld [vmem:[%s175 + $0x38] sm:$0xff]
      %v196 = vld [vmem:[%s175 + $0x40] sm:$0xff]
      %v197 = vld [vmem:[%s175 + $0x48] sm:$0xff]
      %v198 = vld [vmem:[%s175 + $0x50] sm:$0xff]
      %v199 = vld [vmem:[%s175 + $0x58] sm:$0xff]
      %v200 = vld [vmem:[%s175 + $0x60] sm:$0xff]
      %v201 = vld [vmem:[%s175 + $0x68] sm:$0xff]
      %v202 = vld [vmem:[%s175 + $0x70] sm:$0xff]
      %v203 = vld [vmem:[%s175 + $0x78] sm:$0xff]
      %v204 = vld [vmem:[%s175 + $0x80] sm:$0xff]
      %v205 = vld [vmem:[%s175 + $0x88] sm:$0xff]
      %v206 = vld [vmem:[%s175 + $0x90] sm:$0xff]
      %v207 = vld [vmem:[%s175 + $0x98] sm:$0xff]
      %v208 = vld [vmem:[%s175 + $0xa0] sm:$0xff]
      %v209 = vld [vmem:[%s175 + $0xa8] sm:$0xff]
      %v210 = vld [vmem:[%s175 + $0xb0] sm:$0xff]
      %v211 = vld [vmem:[%s175 + $0xb8] sm:$0xff]
      %v212 = vld [vmem:[%s175 + $0xc0] sm:$0xff]
      %v213 = vld [vmem:[%s175 + $0xc8] sm:$0xff]
      %v214 = vld [vmem:[%s175 + $0xd0] sm:$0xff]
      %v215 = vld [vmem:[%s175 + $0xd8] sm:$0xff]
      %v216 = vld [vmem:[%s175 + $0xe0] sm:$0xff]
      %v217 = vld [vmem:[%s175 + $0xe8] sm:$0xff]
      %v218 = vld [vmem:[%s175 + $0xf0] sm:$0xff]
      %v219 = vld [vmem:[%s175 + $0xf8] sm:$0xff]
      %v220 = vld [vmem:[%s1] sm:$0x1]
      %v222 = vlaneseq
      %v223 = vshrl.u32 %v222, 7
      %v224 = vsub.s32 0, %v223
      %v225 = vrot.slane %v220, %v224
      %v227 = vmul.f32 %v188, %v225
      %v228 = vmul.f32 %v189, %v225
      %v229 = vmul.f32 %v190, %v225
      %v230 = vmul.f32 %v191, %v225
      %v231 = vmul.f32 %v192, %v225
      %v232 = vmul.f32 %v193, %v225
      %v233 = vmul.f32 %v194, %v225
      %v234 = vmul.f32 %v195, %v225
      %v235 = vmul.f32 %v196, %v225
      %v236 = vmul.f32 %v197, %v225
      %v237 = vmul.f32 %v198, %v225
      %v238 = vmul.f32 %v199, %v225
      %v239 = vmul.f32 %v200, %v225
      %v240 = vmul.f32 %v201, %v225
      %v241 = vmul.f32 %v202, %v225
      %v242 = vmul.f32 %v203, %v225
      %v243 = vmul.f32 %v204, %v225
      %v244 = vmul.f32 %v205, %v225
      %v245 = vmul.f32 %v206, %v225
      %v246 = vmul.f32 %v207, %v225
      %v247 = vmul.f32 %v208, %v225
      %v248 = vmul.f32 %v209, %v225
      %v249 = vmul.f32 %v210, %v225
      %v250 = vmul.f32 %v211, %v225
      %v251 = vmul.f32 %v212, %v225
      %v252 = vmul.f32 %v213, %v225
      %v253 = vmul.f32 %v214, %v225
      %v254 = vmul.f32 %v215, %v225
      %v255 = vmul.f32 %v216, %v225
      %v256 = vmul.f32 %v217, %v225
      %v257 = vmul.f32 %v218, %v225
      %v258 = vmul.f32 %v219, %v225
      %s259 = scalar_lea.vmem %s1, 1
      %v260 = vld [vmem:[%s259] sm:$0x1]
      %v262 = vlaneseq
      %v263 = vshrl.u32 %v262, 7
      %v264 = vsub.s32 0, %v263
      %v265 = vrot.slane %v260, %v264
      %v267 = vadd.f32 %v227, %v265
      %v268 = vadd.f32 %v228, %v265
      %v269 = vadd.f32 %v229, %v265
      %v270 = vadd.f32 %v230, %v265
      %v271 = vadd.f32 %v231, %v265
      %v272 = vadd.f32 %v232, %v265
      %v273 = vadd.f32 %v233, %v265
      %v274 = vadd.f32 %v234, %v265
      %v275 = vadd.f32 %v235, %v265
      %v276 = vadd.f32 %v236, %v265
      %v277 = vadd.f32 %v237, %v265
      %v278 = vadd.f32 %v238, %v265
      %v279 = vadd.f32 %v239, %v265
      %v280 = vadd.f32 %v240, %v265
      %v281 = vadd.f32 %v241, %v265
      %v282 = vadd.f32 %v242, %v265
      %v283 = vadd.f32 %v243, %v265
      %v284 = vadd.f32 %v244, %v265
      %v285 = vadd.f32 %v245, %v265
      %v286 = vadd.f32 %v246, %v265
      %v287 = vadd.f32 %v247, %v265
      %v288 = vadd.f32 %v248, %v265
      %v289 = vadd.f32 %v249, %v265
      %v290 = vadd.f32 %v250, %v265
      %v291 = vadd.f32 %v251, %v265
      %v292 = vadd.f32 %v252, %v265
      %v293 = vadd.f32 %v253, %v265
      %v294 = vadd.f32 %v254, %v265
      %v295 = vadd.f32 %v255, %v265
      %v296 = vadd.f32 %v256, %v265
      %v297 = vadd.f32 %v257, %v265
      %v298 = vadd.f32 %v258, %v265
      %v299 = vmax.f32 %v267, 0.0
      %v300 = vmax.f32 %v268, 0.0
      %v301 = vmax.f32 %v269, 0.0
      %v302 = vmax.f32 %v270, 0.0
      %v303 = vmax.f32 %v271, 0.0
      %v304 = vmax.f32 %v272, 0.0
      %v305 = vmax.f32 %v273, 0.0
      %v306 = vmax.f32 %v274, 0.0
      %v307 = vmax.f32 %v275, 0.0
      %v308 = vmax.f32 %v276, 0.0
      %v309 = vmax.f32 %v277, 0.0
      %v310 = vmax.f32 %v278, 0.0
      %v311 = vmax.f32 %v279, 0.0
      %v312 = vmax.f32 %v280, 0.0
      %v313 = vmax.f32 %v281, 0.0
      %v314 = vmax.f32 %v282, 0.0
      %v315 = vmax.f32 %v283, 0.0
      %v316 = vmax.f32 %v284, 0.0
      %v317 = vmax.f32 %v285, 0.0
      %v318 = vmax.f32 %v286, 0.0
      %v319 = vmax.f32 %v287, 0.0
      %v320 = vmax.f32 %v288, 0.0
      %v321 = vmax.f32 %v289, 0.0
      %v322 = vmax.f32 %v290, 0.0
      %v323 = vmax.f32 %v291, 0.0
      %v324 = vmax.f32 %v292, 0.0
      %v325 = vmax.f32 %v293, 0.0
      %v326 = vmax.f32 %v294, 0.0
      %v327 = vmax.f32 %v295, 0.0
      %v328 = vmax.f32 %v296, 0.0
      %v329 = vmax.f32 %v297, 0.0
      %v330 = vmax.f32 %v298, 0.0
      %vm331 = vcmask 31744
      %332 = vst.msk [vmem:[%s186] sm:$0xff] %vm331, %v299
      %333 = vst.msk [vmem:[%s186 + $0x8] sm:$0xff] %vm331, %v300
      %334 = vst.msk [vmem:[%s186 + $0x10] sm:$0xff] %vm331, %v301
      %335 = vst.msk [vmem:[%s186 + $0x18] sm:$0xff] %vm331, %v302
      %336 = vst.msk [vmem:[%s186 + $0x20] sm:$0xff] %vm331, %v303
      %337 = vst.msk [vmem:[%s186 + $0x28] sm:$0xff] %vm331, %v304
      %338 = vst.msk [vmem:[%s186 + $0x30] sm:$0xff] %vm331, %v305
      %339 = vst.msk [vmem:[%s186 + $0x38] sm:$0xff] %vm331, %v306
      %340 = vst.msk [vmem:[%s186 + $0x40] sm:$0xff] %vm331, %v307
      %341 = vst.msk [vmem:[%s186 + $0x48] sm:$0xff] %vm331, %v308
      %342 = vst.msk [vmem:[%s186 + $0x50] sm:$0xff] %vm331, %v309
      %343 = vst.msk [vmem:[%s186 + $0x58] sm:$0xff] %vm331, %v310
      %344 = vst.msk [vmem:[%s186 + $0x60] sm:$0xff] %vm331, %v311
      %345 = vst.msk [vmem:[%s186 + $0x68] sm:$0xff] %vm331, %v312
      %346 = vst.msk [vmem:[%s186 + $0x70] sm:$0xff] %vm331, %v313
      %347 = vst.msk [vmem:[%s186 + $0x78] sm:$0xff] %vm331, %v314
      %348 = vst.msk [vmem:[%s186 + $0x80] sm:$0xff] %vm331, %v315
      %349 = vst.msk [vmem:[%s186 + $0x88] sm:$0xff] %vm331, %v316
      %350 = vst.msk [vmem:[%s186 + $0x90] sm:$0xff] %vm331, %v317
      %351 = vst.msk [vmem:[%s186 + $0x98] sm:$0xff] %vm331, %v318
      %352 = vst.msk [vmem:[%s186 + $0xa0] sm:$0xff] %vm331, %v319
      %353 = vst.msk [vmem:[%s186 + $0xa8] sm:$0xff] %vm331, %v320
      %354 = vst.msk [vmem:[%s186 + $0xb0] sm:$0xff] %vm331, %v321
      %355 = vst.msk [vmem:[%s186 + $0xb8] sm:$0xff] %vm331, %v322
      %356 = vst.msk [vmem:[%s186 + $0xc0] sm:$0xff] %vm331, %v323
      %357 = vst.msk [vmem:[%s186 + $0xc8] sm:$0xff] %vm331, %v324
      %358 = vst.msk [vmem:[%s186 + $0xd0] sm:$0xff] %vm331, %v325
      %359 = vst.msk [vmem:[%s186 + $0xd8] sm:$0xff] %vm331, %v326
      %360 = vst.msk [vmem:[%s186 + $0xe0] sm:$0xff] %vm331, %v327
      %361 = vst.msk [vmem:[%s186 + $0xe8] sm:$0xff] %vm331, %v328
      %362 = vst.msk [vmem:[%s186 + $0xf0] sm:$0xff] %vm331, %v329
      %363 = vst.msk [vmem:[%s186 + $0xf8] sm:$0xff] %vm331, %v330
      %s364 = smul.u32 16, %s18
      %p365 = scmp.lt.s32.totalorder %s17, 1
      %s366 = scalar_select %p365, %s17, 1
      %p367 = scmp.lt.s32.totalorder %s364, 15
      %s368 = scalar_select %p367, %s364, 15
      %s369 = smul.addr %s368, 2
      %s370 = smul.addr %s366, 32
      %s371 = sadd.s32 %s369, %s370
      %s372 = smul.addr %s371, 8
      %s373 = scalar_lea.vmem %s2, %s372
      // Predicated region
      $region29: #{recurrent_block_forward.7} parent=27 // pred_check
        %p374 = pneg %p94
      $region30: #{recurrent_block_forward.7} parent=27 // pred_check_branch
        %376 = sbr.rel (%p374) target = $region32
      $region31: #{recurrent_block_forward.7} parent=27 // pred_region
        %s377 = smul.u32 16, %s18
      $region32: #{recurrent_block_forward.7} parent=27 // pred_fallthru
        _
    $region28: #{recurrent_block_forward.7} parent=5 // pred_fallthru
      _
    %p378 = scmp.le.s32.totalorder 2, %s8
    // Predicated region
    $region33: #{recurrent_block_forward.7} parent=5 // pred_check
      %p379 = pneg %p378
    $region34: #{recurrent_block_forward.7} parent=5 // pred_check_branch
      %381 = sbr.rel (%p379) target = $region36
    $region35: #{recurrent_block_forward.7} parent=5 // pred_region
      %s382 = ssub.s32 %s8, 2
      // Predicated region
      $region37: #{recurrent_block_forward.7} parent=35 // pred_check
        %p383 = pneg %p100
      $region38: #{recurrent_block_forward.7} parent=35 // pred_check_branch
        %385 = sbr.rel (%p383) target = $region40
      $region39: #{recurrent_block_forward.7} parent=35 // pred_region
        %s386 = smul.u32 16, %s20
        %p387 = scmp.lt.s32.totalorder %s19, 1
        %s388 = scalar_select %p387, %s19, 1
        %p389 = scmp.lt.s32.totalorder %s386, 15
        %s390 = scalar_select %p389, %s386, 15
        %s391 = smul.addr %s390, 2
        %s392 = smul.addr %s388, 32
        %s393 = sadd.s32 %s391, %s392
        %s394 = smul.addr %s393, 8
        %s395 = scalar_lea.vmem %s2, %s394
      $region40: #{recurrent_block_forward.7} parent=35 // pred_fallthru
        _
    $region36: #{recurrent_block_forward.7} parent=5 // pred_fallthru
      _
  $region6: #{recurrent_block_forward.7} parent=0 // loop_footer
    %s12 = sadd.s32 1, %s8
  $region7: #{recurrent_block_forward.7} parent=0 // loop_footer_branch
    %7 = sbr.rel target = $region3
  $region8: #{recurrent_block_forward.7} parent=0 // loop_exit
    _

// kernel: recurrent_block_forward.5
$region0: #{recurrent_block_forward.5}
  #allocation0 [shape = 'u32[]', space=smem, size = 0x4, offset = 0x4, fixed_abs, tag = 'smem constant byte address 0x4 - core index']
  #allocation1 [shape = 'u32[144,128]{1,0:T(1,128)}', space=vmem, size = 0x12000, scoped, tag = 'internal scratch']
  %s0 = inlined_call_operand.vmem [shape: f32[2,16,16,4], index: 0, kind: input, shape index: {}]
  %s1 = inlined_call_operand.vmem [shape: f32[2,1,4], index: 1, kind: input, shape index: {}]
  %s2 = inlined_call_operand.vmem [shape: bf16[2,16,16,4], index: 2, kind: output, shape index: {}]
  %s3 = sld [smem:[#allocation0]]
  $region41: #{recurrent_block_forward.5} parent=0
    _
  %s5 = ssub.s32 1, %s3
  %s6 = scalar_select 0, %s5, %s3
  loop: start=0, step=1, limit=4
  $region2: #{recurrent_block_forward.5} parent=0 // loop_pre_header
    _
  $region3: #{recurrent_block_forward.5} parent=0 // loop_header
    %s8 = sphi 0, %s12
    %p9 = scmp.ge.s32.totalorder %s8, 4
    %s15 = sphi 0, %s27
    %s16 = sphi 0, %s23
    %s17 = sphi 0, %s15
    %s18 = sphi 0, %s16
    %s19 = sphi 0, %s17
    %s20 = sphi 0, %s18
    %s32 = sphi 0, %s34
    %s35 = sphi 0, %s32
    %s36 = sphi 0, %s35
    %s52 = sphi 0, %s36
    %s56 = sphi 0, %s56
    %s58 = sphi 0, %s56
    %s59 = sphi 0, %s58
    %s73 = sphi 0, %s59
    %s81 = sphi 0, %s83
    %s84 = sphi 0, %s81
    %s85 = sphi 0, %s84
    %s101 = sphi 0, %s85
  $region4: #{recurrent_block_forward.5} parent=0 // loop_header_branch
    %11 = sbr.rel (%p9) target = $region8
  $region5: #{recurrent_block_forward.5} parent=0 // loop_body
    %s13 = ssub.s32 %s8, 1
    %s14 = ssub.s32 %s8, 2
    %s21 = sadd.s32 1, %s16
    %p22 = scmp.ge.s32.totalorder %s21, 1
    %s23 = scalar_select %p22, 0, %s21
    %s24 = sadd.s32 1, %s15
    %s25 = scalar_select %p22, %s24, %s15
    %p26 = scmp.ge.s32.totalorder %s25, 2
    %s27 = scalar_select %p26, 0, %s25
    %s28 = ssub.s32 %s15, %s27
    %s29 = ssub.s32 %s16, %s23
    %s30 = sor.u32 %s28, %s29
    %p31 = scmp.eq.s32.totalorder %s30, 0
    %s33 = sadd.s32 %s32, 1
    %s34 = scalar_select %p31, %s32, %s33
    %p37 = pneg %p31
    %p38 = scmp.eq.s32.totalorder %s8, 1
    %p39 = por %p37, %p38
    %p40 = scmp.ne.s32.totalorder %s32, %s35
    %p41 = scmp.eq.s32.totalorder %s8, 0
    %p42 = por %p40, %p41
    %p43 = scmp.ne.s32.totalorder %s32, %s35
    %p44 = scmp.eq.s32.totalorder %s13, 1
    %p45 = por %p43, %p44
    %p46 = scmp.ne.s32.totalorder %s35, %s36
    %p47 = scmp.eq.s32.totalorder %s13, 0
    %p48 = por %p46, %p47
    %p49 = scmp.ne.s32.totalorder %s35, %s36
    %p50 = scmp.eq.s32.totalorder %s14, 1
    %p51 = por %p49, %p50
    %p53 = scmp.ne.s32.totalorder %s36, %s52
    %p54 = scmp.eq.s32.totalorder %s14, 0
    %p55 = por %p53, %p54
    %s57 = sadd.s32 %s56, 1
    %p60 = scmp.eq.s32.totalorder %s8, 1
    %p61 = scmp.ne.s32.totalorder %s56, %s58
    %p62 = scmp.eq.s32.totalorder %s8, 0
    %p63 = por %p61, %p62
    %p64 = scmp.ne.s32.totalorder %s56, %s58
    %p65 = scmp.eq.s32.totalorder %s13, 1
    %p66 = por %p64, %p65
    %p67 = scmp.ne.s32.totalorder %s58, %s59
    %p68 = scmp.eq.s32.totalorder %s13, 0
    %p69 = por %p67, %p68
    %p70 = scmp.ne.s32.totalorder %s58, %s59
    %p71 = scmp.eq.s32.totalorder %s14, 1
    %p72 = por %p70, %p71
    %p74 = scmp.ne.s32.totalorder %s59, %s73
    %p75 = scmp.eq.s32.totalorder %s14, 0
    %p76 = por %p74, %p75
    %s77 = ssub.s32 %s15, %s27
    %s78 = ssub.s32 %s16, %s23
    %s79 = sor.u32 %s77, %s78
    %p80 = scmp.eq.s32.totalorder %s79, 0
    %s82 = sadd.s32 %s81, 1
    %s83 = scalar_select %p80, %s81, %s82
    %p86 = pneg %p80
    %p87 = scmp.eq.s32.totalorder %s8, 1
    %p88 = por %p86, %p87
    %p89 = scmp.ne.s32.totalorder %s81, %s84
    %p90 = scmp.eq.s32.totalorder %s8, 0
    %p91 = por %p89, %p90
    %p92 = scmp.ne.s32.totalorder %s81, %s84
    %p93 = scmp.eq.s32.totalorder %s13, 1
    %p94 = por %p92, %p93
    %p95 = scmp.ne.s32.totalorder %s84, %s85
    %p96 = scmp.eq.s32.totalorder %s13, 0
    %p97 = por %p95, %p96
    %p98 = scmp.ne.s32.totalorder %s84, %s85
    %p99 = scmp.eq.s32.totalorder %s14, 1
    %p100 = por %p98, %p99
    %p102 = scmp.ne.s32.totalorder %s85, %s101
    %p103 = scmp.eq.s32.totalorder %s14, 0
    %p104 = por %p102, %p103
    %p105 = scmp.le.s32.totalorder 1, %s8
    %p106 = scmp.lt.s32.totalorder %s8, 3
    %p107 = pnand %p105, %p106
    %p108 = pneg %p107
    // Predicated region
    $region9: #{recurrent_block_forward.5} parent=5 // pred_check
      _
    $region10: #{recurrent_block_forward.5} parent=5 // pred_check_branch
      %110 = sbr.rel (%p107) target = $region12
    $region11: #{recurrent_block_forward.5} parent=5 // pred_region
      %s111 = ssub.s32 %s8, 1
      // Predicated region
      $region13: #{recurrent_block_forward.5} parent=11 // pred_check
        %p112 = pneg %p69
      $region14: #{recurrent_block_forward.5} parent=11 // pred_check_branch
        %114 = sbr.rel (%p112) target = $region16
      $region15: #{recurrent_block_forward.5} parent=11 // pred_region
        _
      $region16: #{recurrent_block_forward.5} parent=11 // pred_fallthru
        _
    $region12: #{recurrent_block_forward.5} parent=5 // pred_fallthru
      _
    %p115 = scmp.lt.s32.totalorder %s8, 2
    // Predicated region
    $region17: #{recurrent_block_forward.5} parent=5 // pred_check
      %p116 = pneg %p115
    $region18: #{recurrent_block_forward.5} parent=5 // pred_check_branch
      %118 = sbr.rel (%p116) target = $region20
    $region19: #{recurrent_block_forward.5} parent=5 // pred_region
      // Predicated region
      $region21: #{recurrent_block_forward.5} parent=19 // pred_check
        %p119 = pneg %p42
      $region22: #{recurrent_block_forward.5} parent=19 // pred_check_branch
        %121 = sbr.rel (%p119) target = $region24
      $region23: #{recurrent_block_forward.5} parent=19 // pred_region
        %s122 = smul.u32 16, %s16
        %p123 = scmp.lt.s32.totalorder %s15, 1
        %s124 = scalar_select %p123, %s15, 1
        %p125 = scmp.lt.s32.totalorder %s122, 15
        %s126 = scalar_select %p125, %s122, 15
        %s127 = smul.addr %s126, 2
        %s128 = smul.addr %s124, 32
        %s129 = sadd.s32 %s127, %s128
        %s130 = smul.addr %s129, 8
        %s131 = scalar_lea.vmem %s0, %s130
        %s132 = smul.u32 16, %s16
      $region24: #{recurrent_block_forward.5} parent=19 // pred_fallthru
        _
    $region20: #{recurrent_block_forward.5} parent=5 // pred_fallthru
      _
    %p133 = scmp.le.s32.totalorder 1, %s8
    %p134 = scmp.lt.s32.totalorder %s8, 3
    %p135 = pnand %p133, %p134
    %p136 = pneg %p135
    // Predicated region
    $region25: #{recurrent_block_forward.5} parent=5 // pred_check
      _
    $region26: #{recurrent_block_forward.5} parent=5 // pred_check_branch
      %138 = sbr.rel (%p135) target = $region28
    $region27: #{recurrent_block_forward.5} parent=5 // pred_region
      %s139 = ssub.s32 %s8, 1
      %s140 = smul.u32 16, %s18
      %p141 = scmp.lt.s32.totalorder %s17, 1
      %s142 = scalar_select %p141, %s17, 1
      %p143 = scmp.lt.s32.totalorder %s140, 15
      %s144 = scalar_select %p143, %s140, 15
      %s145 = smul.addr %s144, 2
      %s146 = smul.addr %s142, 32
      %s147 = sadd.s32 %s145, %s146
      %s148 = smul.addr %s147, 8
      %s149 = scalar_lea.vmem %s0, %s148
      %p150 = pneg %p48
      %p151 = pneg %p45
      %p152 = pneg %p69
      %p153 = pneg %p66
      %p154 = pneg %p97
      %p155 = pneg %p94
      %s156 = smul.u32 16, %s18
      %p157 = scmp.lt.s32.totalorder %s17, 1
      %s158 = scalar_select %p157, %s17, 1
      %p159 = scmp.lt.s32.totalorder %s156, 15
      %s160 = scalar_select %p159, %s156, 15
      %s161 = smul.addr %s160, 2
      %s162 = smul.addr %s158, 32
      %s163 = sadd.s32 %s161, %s162
      %s164 = smul.addr %s163, 4
      %s165 = scalar_lea.vmem %s2, %s164
      %s166 = smul.u32 16, %s18
      %p167 = scmp.lt.s32.totalorder %s17, 1
      %s168 = scalar_select %p167, %s17, 1
      %p169 = scmp.lt.s32.totalorder %s166, 15
      %s170 = scalar_select %p169, %s166, 15
      %s171 = smul.addr %s170, 2
      %s172 = smul.addr %s168, 32
      %s173 = sadd.s32 %s171, %s172
      %s174 = smul.addr %s173, 8
      %s175 = scalar_lea.vmem %s0, %s174
      %s176 = smul.u32 16, %s18
      %s177 = smul.u32 16, %s18
      %p178 = scmp.lt.s32.totalorder %s17, 1
      %s179 = scalar_select %p178, %s17, 1
      %p180 = scmp.lt.s32.totalorder %s177, 15
      %s181 = scalar_select %p180, %s177, 15
      %s182 = smul.addr %s181, 2
      %s183 = smul.addr %s179, 32
      %s184 = sadd.s32 %s182, %s183
      %s185 = smul.addr %s184, 4
      %s186 = scalar_lea.vmem %s2, %s185
      %s187 = smul.u32 16, %s18
      %v188 = vld [vmem:[%s175] sm:$0xff]
      %v189 = vld [vmem:[%s175 + $0x8] sm:$0xff]
      %v190 = vld [vmem:[%s175 + $0x10] sm:$0xff]
      %v191 = vld [vmem:[%s175 + $0x18] sm:$0xff]
      %v192 = vld [vmem:[%s175 + $0x20] sm:$0xff]
      %v193 = vld [vmem:[%s175 + $0x28] sm:$0xff]
      %v194 = vld [vmem:[%s175 + $0x30] sm:$0xff]
      %v195 = vld [vmem:[%s175 + $0x38] sm:$0xff]
      %v196 = vld [vmem:[%s175 + $0x40] sm:$0xff]
      %v197 = vld [vmem:[%s175 + $0x48] sm:$0xff]
      %v198 = vld [vmem:[%s175 + $0x50] sm:$0xff]
      %v199 = vld [vmem:[%s175 + $0x58] sm:$0xff]
      %v200 = vld [vmem:[%s175 + $0x60] sm:$0xff]
      %v201 = vld [vmem:[%s175 + $0x68] sm:$0xff]
      %v202 = vld [vmem:[%s175 + $0x70] sm:$0xff]
      %v203 = vld [vmem:[%s175 + $0x78] sm:$0xff]
      %v204 = vld [vmem:[%s175 + $0x80] sm:$0xff]
      %v205 = vld [vmem:[%s175 + $0x88] sm:$0xff]
      %v206 = vld [vmem:[%s175 + $0x90] sm:$0xff]
      %v207 = vld [vmem:[%s175 + $0x98] sm:$0xff]
      %v208 = vld [vmem:[%s175 + $0xa0] sm:$0xff]
      %v209 = vld [vmem:[%s175 + $0xa8] sm:$0xff]
      %v210 = vld [vmem:[%s175 + $0xb0] sm:$0xff]
      %v211 = vld [vmem:[%s175 + $0xb8] sm:$0xff]
      %v212 = vld [vmem:[%s175 + $0xc0] sm:$0xff]
      %v213 = vld [vmem:[%s175 + $0xc8] sm:$0xff]
      %v214 = vld [vmem:[%s175 + $0xd0] sm:$0xff]
      %v215 = vld [vmem:[%s175 + $0xd8] sm:$0xff]
      %v216 = vld [vmem:[%s175 + $0xe0] sm:$0xff]
      %v217 = vld [vmem:[%s175 + $0xe8] sm:$0xff]
      %v218 = vld [vmem:[%s175 + $0xf0] sm:$0xff]
      %v219 = vld [vmem:[%s175 + $0xf8] sm:$0xff]
      %v220 = vld [vmem:[%s1] sm:$0x1]
      %v222 = vlaneseq
      %v223 = vshrl.u32 %v222, 7
      %v224 = vsub.s32 0, %v223
      %v225 = vrot.slane %v220, %v224
      %v227 = vmul.f32 %v188, %v225
      %v228 = vmul.f32 %v189, %v225
      %v229 = vmul.f32 %v190, %v225
      %v230 = vmul.f32 %v191, %v225
      %v231 = vmul.f32 %v192, %v225
      %v232 = vmul.f32 %v193, %v225
      %v233 = vmul.f32 %v194, %v225
      %v234 = vmul.f32 %v195, %v225
      %v235 = vmul.f32 %v196, %v225
      %v236 = vmul.f32 %v197, %v225
      %v237 = vmul.f32 %v198, %v225
      %v238 = vmul.f32 %v199, %v225
      %v239 = vmul.f32 %v200, %v225
      %v240 = vmul.f32 %v201, %v225
      %v241 = vmul.f32 %v202, %v225
      %v242 = vmul.f32 %v203, %v225
      %v243 = vmul.f32 %v204, %v225
      %v244 = vmul.f32 %v205, %v225
      %v245 = vmul.f32 %v206, %v225
      %v246 = vmul.f32 %v207, %v225
      %v247 = vmul.f32 %v208, %v225
      %v248 = vmul.f32 %v209, %v225
      %v249 = vmul.f32 %v210, %v225
      %v250 = vmul.f32 %v211, %v225
      %v251 = vmul.f32 %v212, %v225
      %v252 = vmul.f32 %v213, %v225
      %v253 = vmul.f32 %v214, %v225
      %v254 = vmul.f32 %v215, %v225
      %v255 = vmul.f32 %v216, %v225
      %v256 = vmul.f32 %v217, %v225
      %v257 = vmul.f32 %v218, %v225
      %v258 = vmul.f32 %v219, %v225
      %s259 = scalar_lea.vmem %s1, 1
      %v260 = vld [vmem:[%s259] sm:$0x1]
      %v262 = vlaneseq
      %v263 = vshrl.u32 %v262, 7
      %v264 = vsub.s32 0, %v263
      %v265 = vrot.slane %v260, %v264
      %v267 = vadd.f32 %v227, %v265
      %v268 = vadd.f32 %v228, %v265
      %v269 = vadd.f32 %v229, %v265
      %v270 = vadd.f32 %v230, %v265
      %v271 = vadd.f32 %v231, %v265
      %v272 = vadd.f32 %v232, %v265
      %v273 = vadd.f32 %v233, %v265
      %v274 = vadd.f32 %v234, %v265
      %v275 = vadd.f32 %v235, %v265
      %v276 = vadd.f32 %v236, %v265
      %v277 = vadd.f32 %v237, %v265
      %v278 = vadd.f32 %v238, %v265
      %v279 = vadd.f32 %v239, %v265
      %v280 = vadd.f32 %v240, %v265
      %v281 = vadd.f32 %v241, %v265
      %v282 = vadd.f32 %v242, %v265
      %v283 = vadd.f32 %v243, %v265
      %v284 = vadd.f32 %v244, %v265
      %v285 = vadd.f32 %v245, %v265
      %v286 = vadd.f32 %v246, %v265
      %v287 = vadd.f32 %v247, %v265
      %v288 = vadd.f32 %v248, %v265
      %v289 = vadd.f32 %v249, %v265
      %v290 = vadd.f32 %v250, %v265
      %v291 = vadd.f32 %v251, %v265
      %v292 = vadd.f32 %v252, %v265
      %v293 = vadd.f32 %v253, %v265
      %v294 = vadd.f32 %v254, %v265
      %v295 = vadd.f32 %v255, %v265
      %v296 = vadd.f32 %v256, %v265
      %v297 = vadd.f32 %v257, %v265
      %v298 = vadd.f32 %v258, %v265
      %v299 = vmax.f32 %v267, 0.0
      %v300 = vmax.f32 %v268, 0.0
      %v301 = vmax.f32 %v269, 0.0
      %v302 = vmax.f32 %v270, 0.0
      %v303 = vmax.f32 %v271, 0.0
      %v304 = vmax.f32 %v272, 0.0
      %v305 = vmax.f32 %v273, 0.0
      %v306 = vmax.f32 %v274, 0.0
      %v307 = vmax.f32 %v275, 0.0
      %v308 = vmax.f32 %v276, 0.0
      %v309 = vmax.f32 %v277, 0.0
      %v310 = vmax.f32 %v278, 0.0
      %v311 = vmax.f32 %v279, 0.0
      %v312 = vmax.f32 %v280, 0.0
      %v313 = vmax.f32 %v281, 0.0
      %v314 = vmax.f32 %v282, 0.0
      %v315 = vmax.f32 %v283, 0.0
      %v316 = vmax.f32 %v284, 0.0
      %v317 = vmax.f32 %v285, 0.0
      %v318 = vmax.f32 %v286, 0.0
      %v319 = vmax.f32 %v287, 0.0
      %v320 = vmax.f32 %v288, 0.0
      %v321 = vmax.f32 %v289, 0.0
      %v322 = vmax.f32 %v290, 0.0
      %v323 = vmax.f32 %v291, 0.0
      %v324 = vmax.f32 %v292, 0.0
      %v325 = vmax.f32 %v293, 0.0
      %v326 = vmax.f32 %v294, 0.0
      %v327 = vmax.f32 %v295, 0.0
      %v328 = vmax.f32 %v296, 0.0
      %v329 = vmax.f32 %v297, 0.0
      %v330 = vmax.f32 %v298, 0.0
      %v331 = vpack.c.bf16 %v300, %v299
      %v332 = vpack.c.bf16 %v302, %v301
      %v333 = vpack.c.bf16 %v304, %v303
      %v334 = vpack.c.bf16 %v306, %v305
      %v335 = vpack.c.bf16 %v308, %v307
      %v336 = vpack.c.bf16 %v310, %v309
      %v337 = vpack.c.bf16 %v312, %v311
      %v338 = vpack.c.bf16 %v314, %v313
      %v339 = vpack.c.bf16 %v316, %v315
      %v340 = vpack.c.bf16 %v318, %v317
      %v341 = vpack.c.bf16 %v320, %v319
      %v342 = vpack.c.bf16 %v322, %v321
      %v343 = vpack.c.bf16 %v324, %v323
      %v344 = vpack.c.bf16 %v326, %v325
      %v345 = vpack.c.bf16 %v328, %v327
      %v346 = vpack.c.bf16 %v330, %v329
      %v363 = vunpack.c.l.b16 %v331
      %v364 = vunpack.c.h.b16 %v331
      %v365 = vunpack.c.l.b16 %v332
      %v366 = vunpack.c.h.b16 %v332
      %v367 = vunpack.c.l.b16 %v333
      %v368 = vunpack.c.h.b16 %v333
      %v369 = vunpack.c.l.b16 %v334
      %v370 = vunpack.c.h.b16 %v334
      %v371 = vunpack.c.l.b16 %v335
      %v372 = vunpack.c.h.b16 %v335
      %v373 = vunpack.c.l.b16 %v336
      %v374 = vunpack.c.h.b16 %v336
      %v375 = vunpack.c.l.b16 %v337
      %v376 = vunpack.c.h.b16 %v337
      %v377 = vunpack.c.l.b16 %v338
      %v378 = vunpack.c.h.b16 %v338
      %v379 = vunpack.c.l.b16 %v339
      %v380 = vunpack.c.h.b16 %v339
      %v381 = vunpack.c.l.b16 %v340
      %v382 = vunpack.c.h.b16 %v340
      %v383 = vunpack.c.l.b16 %v341
      %v384 = vunpack.c.h.b16 %v341
      %v385 = vunpack.c.l.b16 %v342
      %v386 = vunpack.c.h.b16 %v342
      %v387 = vunpack.c.l.b16 %v343
      %v388 = vunpack.c.h.b16 %v343
      %v389 = vunpack.c.l.b16 %v344
      %v390 = vunpack.c.h.b16 %v344
      %v391 = vunpack.c.l.b16 %v345
      %v392 = vunpack.c.h.b16 %v345
      %v393 = vunpack.c.l.b16 %v346
      %v394 = vunpack.c.h.b16 %v346
      %v395 = vpack.c.b16 %v363, %v363
      %v396 = vpack.c.b16 %v364, %v364
      %v397 = vpack.c.b16 %v365, %v365
      %v398 = vpack.c.b16 %v366, %v366
      %v399 = vpack.c.b16 %v367, %v367
      %v400 = vpack.c.b16 %v368, %v368
      %v401 = vpack.c.b16 %v369, %v369
      %v402 = vpack.c.b16 %v370, %v370
      %v403 = vpack.c.b16 %v371, %v371
      %v404 = vpack.c.b16 %v372, %v372
      %v405 = vpack.c.b16 %v373, %v373
      %v406 = vpack.c.b16 %v374, %v374
      %v407 = vpack.c.b16 %v375, %v375
      %v408 = vpack.c.b16 %v376, %v376
      %v409 = vpack.c.b16 %v377, %v377
      %v410 = vpack.c.b16 %v378, %v378
      %v411 = vpack.c.b16 %v379, %v379
      %v412 = vpack.c.b16 %v380, %v380
      %v413 = vpack.c.b16 %v381, %v381
      %v414 = vpack.c.b16 %v382, %v382
      %v415 = vpack.c.b16 %v383, %v383
      %v416 = vpack.c.b16 %v384, %v384
      %v417 = vpack.c.b16 %v385, %v385
      %v418 = vpack.c.b16 %v386, %v386
      %v419 = vpack.c.b16 %v387, %v387
      %v420 = vpack.c.b16 %v388, %v388
      %v421 = vpack.c.b16 %v389, %v389
      %v422 = vpack.c.b16 %v390, %v390
      %v423 = vpack.c.b16 %v391, %v391
      %v424 = vpack.c.b16 %v392, %v392
      %v425 = vpack.c.b16 %v393, %v393
      %v426 = vpack.c.b16 %v394, %v394
      %vm459 = vcmask 27648
      %460 = vst.msk [vmem:[%s186] sm:$0xf] %vm459, %v395
      %461 = vst.msk [vmem:[%s186 + $0x4] sm:$0xf] %vm459, %v396
      %462 = vst.msk [vmem:[%s186 + $0x8] sm:$0xf] %vm459, %v397
      %463 = vst.msk [vmem:[%s186 + $0xc] sm:$0xf] %vm459, %v398
      %464 = vst.msk [vmem:[%s186 + $0x10] sm:$0xf] %vm459, %v399
      %465 = vst.msk [vmem:[%s186 + $0x14] sm:$0xf] %vm459, %v400
      %466 = vst.msk [vmem:[%s186 + $0x18] sm:$0xf] %vm459, %v401
      %467 = vst.msk [vmem:[%s186 + $0x1c] sm:$0xf] %vm459, %v402
      %468 = vst.msk [vmem:[%s186 + $0x20] sm:$0xf] %vm459, %v403
      %469 = vst.msk [vmem:[%s186 + $0x24] sm:$0xf] %vm459, %v404
      %470 = vst.msk [vmem:[%s186 + $0x28] sm:$0xf] %vm459, %v405
      %471 = vst.msk [vmem:[%s186 + $0x2c] sm:$0xf] %vm459, %v406
      %472 = vst.msk [vmem:[%s186 + $0x30] sm:$0xf] %vm459, %v407
      %473 = vst.msk [vmem:[%s186 + $0x34] sm:$0xf] %vm459, %v408
      %474 = vst.msk [vmem:[%s186 + $0x38] sm:$0xf] %vm459, %v409
      %475 = vst.msk [vmem:[%s186 + $0x3c] sm:$0xf] %vm459, %v410
      %476 = vst.msk [vmem:[%s186 + $0x40] sm:$0xf] %vm459, %v411
      %477 = vst.msk [vmem:[%s186 + $0x44] sm:$0xf] %vm459, %v412
      %478 = vst.msk [vmem:[%s186 + $0x48] sm:$0xf] %vm459, %v413
      %479 = vst.msk [vmem:[%s186 + $0x4c] sm:$0xf] %vm459, %v414
      %480 = vst.msk [vmem:[%s186 + $0x50] sm:$0xf] %vm459, %v415
      %481 = vst.msk [vmem:[%s186 + $0x54] sm:$0xf] %vm459, %v416
      %482 = vst.msk [vmem:[%s186 + $0x58] sm:$0xf] %vm459, %v417
      %483 = vst.msk [vmem:[%s186 + $0x5c] sm:$0xf] %vm459, %v418
      %484 = vst.msk [vmem:[%s186 + $0x60] sm:$0xf] %vm459, %v419
      %485 = vst.msk [vmem:[%s186 + $0x64] sm:$0xf] %vm459, %v420
      %486 = vst.msk [vmem:[%s186 + $0x68] sm:$0xf] %vm459, %v421
      %487 = vst.msk [vmem:[%s186 + $0x6c] sm:$0xf] %vm459, %v422
      %488 = vst.msk [vmem:[%s186 + $0x70] sm:$0xf] %vm459, %v423
      %489 = vst.msk [vmem:[%s186 + $0x74] sm:$0xf] %vm459, %v424
      %490 = vst.msk [vmem:[%s186 + $0x78] sm:$0xf] %vm459, %v425
      %491 = vst.msk [vmem:[%s186 + $0x7c] sm:$0xf] %vm459, %v426
      %s492 = smul.u32 16, %s18
      %p493 = scmp.lt.s32.totalorder %s17, 1
      %s494 = scalar_select %p493, %s17, 1
      %p495 = scmp.lt.s32.totalorder %s492, 15
      %s496 = scalar_select %p495, %s492, 15
      %s497 = smul.addr %s496, 2
      %s498 = smul.addr %s494, 32
      %s499 = sadd.s32 %s497, %s498
      %s500 = smul.addr %s499, 4
      %s501 = scalar_lea.vmem %s2, %s500
      // Predicated region
      $region29: #{recurrent_block_forward.5} parent=27 // pred_check
        %p502 = pneg %p94
      $region30: #{recurrent_block_forward.5} parent=27 // pred_check_branch
        %504 = sbr.rel (%p502) target = $region32
      $region31: #{recurrent_block_forward.5} parent=27 // pred_region
        %s505 = smul.u32 16, %s18
      $region32: #{recurrent_block_forward.5} parent=27 // pred_fallthru
        _
    $region28: #{recurrent_block_forward.5} parent=5 // pred_fallthru
      _
    %p506 = scmp.le.s32.totalorder 2, %s8
    // Predicated region
    $region33: #{recurrent_block_forward.5} parent=5 // pred_check
      %p507 = pneg %p506
    $region34: #{recurrent_block_forward.5} parent=5 // pred_check_branch
      %509 = sbr.rel (%p507) target = $region36
    $region35: #{recurrent_block_forward.5} parent=5 // pred_region
      %s510 = ssub.s32 %s8, 2
      // Predicated region
      $region37: #{recurrent_block_forward.5} parent=35 // pred_check
        %p511 = pneg %p100
      $region38: #{recurrent_block_forward.5} parent=35 // pred_check_branch
        %513 = sbr.rel (%p511) target = $region40
      $region39: #{recurrent_block_forward.5} parent=35 // pred_region
        %s514 = smul.u32 16, %s20
        %p515 = scmp.lt.s32.totalorder %s19, 1
        %s516 = scalar_select %p515, %s19, 1
        %p517 = scmp.lt.s32.totalorder %s514, 15
        %s518 = scalar_select %p517, %s514, 15
        %s519 = smul.addr %s518, 2
        %s520 = smul.addr %s516, 32
        %s521 = sadd.s32 %s519, %s520
        %s522 = smul.addr %s521, 4
        %s523 = scalar_lea.vmem %s2, %s522
      $region40: #{recurrent_block_forward.5} parent=35 // pred_fallthru
        _
    $region36: #{recurrent_block_forward.5} parent=5 // pred_fallthru
      _
  $region6: #{recurrent_block_forward.5} parent=0 // loop_footer
    %s12 = sadd.s32 1, %s8
  $region7: #{recurrent_block_forward.5} parent=0 // loop_footer_branch
    %7 = sbr.rel target = $region3
  $region8: #{recurrent_block_forward.5} parent=0 // loop_exit
    _

// kernel: recurrent_block_forward.4
$region0: #{recurrent_block_forward.4}
  #allocation0 [shape = 'u32[]', space=smem, size = 0x4, offset = 0x4, fixed_abs, tag = 'smem constant byte address 0x4 - core index']
  #allocation1 [shape = 'u32[144,128]{1,0:T(1,128)}', space=vmem, size = 0x12000, scoped, tag = 'internal scratch']
  #allocation2 [shape = 'bf16[18,18,4]{2,1,0:T(8,128)(2,1)}', space=vmem, size = 0x1b000, scoped, tag = 'scratch operand']
  %s0 = inlined_call_operand.vmem [shape: bf16[2,16,16,4], index: 0, kind: input, shape index: {}, may-alias: {0,1,2}]
  %s1 = inlined_call_operand.vmem [shape: bf16[2,16,16,4], index: 1, kind: input, shape index: {}, may-alias: {0,1,2}]
  %s2 = inlined_call_operand.vmem [shape: bf16[2,16,16,4], index: 2, kind: input, shape index: {}, may-alias: {0,1,2}]
  %s3 = inlined_call_operand.vmem [shape: bf16[9,4,4], index: 3, kind: input, shape index: {}]
  %s4 = inlined_call_operand.vmem [shape: f32[1,4], index: 4, kind: input, shape index: {}]
  %s5 = inlined_call_operand.vmem [shape: f32[2,16,16,4], index: 5, kind: output, shape index: {0}]
  %s6 = inlined_call_operand.vmem [shape: f32[2,1,2,4], index: 6, kind: output, shape index: {1}]
  %7 = xla_tuple %s5, %s6
  %s8 = sld [smem:[#allocation0]]
  $region69: #{recurrent_block_forward.4} parent=0
    _
  %s10 = ssub.s32 1, %s8
  %s11 = scalar_select 0, %s10, %s8
  loop: start=0, step=1, limit=4
  $region2: #{recurrent_block_forward.4} parent=0 // loop_pre_header
    _
  $region3: #{recurrent_block_forward.4} parent=0 // loop_header
    %s13 = sphi 0, %s17
    %p14 = scmp.ge.s32.totalorder %s13, 4
    %s20 = sphi 0, %s32
    %s21 = sphi 0, %s28
    %s22 = sphi 0, %s20
    %s23 = sphi 0, %s21
    %s24 = sphi 0, %s22
    %s25 = sphi 0, %s23
    %s37 = sphi 0, %s39
    %s40 = sphi 0, %s37
    %s41 = sphi 0, %s40
    %s57 = sphi 0, %s41
    %s73 = sphi 0, %s75
    %s76 = sphi 0, %s73
    %s77 = sphi 0, %s76
    %s93 = sphi 0, %s77
    %s109 = sphi 0, %s111
    %s112 = sphi 0, %s109
    %s113 = sphi 0, %s112
    %s129 = sphi 0, %s113
    %s133 = sphi 0, %s133
    %s135 = sphi 0, %s133
    %s136 = sphi 0, %s135
    %s150 = sphi 0, %s136
    %s154 = sphi 0, %s154
    %s156 = sphi 0, %s154
    %s157 = sphi 0, %s156
    %s171 = sphi 0, %s157
    %s179 = sphi 0, %s181
    %s182 = sphi 0, %s179
    %s183 = sphi 0, %s182
    %s199 = sphi 0, %s183
    %s207 = sphi 0, %s209
    %s210 = sphi 0, %s207
    %s211 = sphi 0, %s210
    %s227 = sphi 0, %s211
  $region4: #{recurrent_block_forward.4} parent=0 // loop_header_branch
    %16 = sbr.rel (%p14) target = $region8
  $region5: #{recurrent_block_forward.4} parent=0 // loop_body
    %s18 = ssub.s32 %s13, 1
    %s19 = ssub.s32 %s13, 2
    %s26 = sadd.s32 1, %s21
    %p27 = scmp.ge.s32.totalorder %s26, 1
    %s28 = scalar_select %p27, 0, %s26
    %s29 = sadd.s32 1, %s20
    %s30 = scalar_select %p27, %s29, %s20
    %p31 = scmp.ge.s32.totalorder %s30, 2
    %s32 = scalar_select %p31, 0, %s30
    %s33 = ssub.s32 %s20, %s32
    %s34 = ssub.s32 %s21, %s28
    %s35 = sor.u32 %s33, %s34
    %p36 = scmp.eq.s32.totalorder %s35, 0
    %s38 = sadd.s32 %s37, 1
    %s39 = scalar_select %p36, %s37, %s38
    %p42 = pneg %p36
    %p43 = scmp.eq.s32.totalorder %s13, 1
    %p44 = por %p42, %p43
    %p45 = scmp.ne.s32.totalorder %s37, %s40
    %p46 = scmp.eq.s32.totalorder %s13, 0
    %p47 = por %p45, %p46
    %p48 = scmp.ne.s32.totalorder %s37, %s40
    %p49 = scmp.eq.s32.totalorder %s18, 1
    %p50 = por %p48, %p49
    %p51 = scmp.ne.s32.totalorder %s40, %s41
    %p52 = scmp.eq.s32.totalorder %s18, 0
    %p53 = por %p51, %p52
    %p54 = scmp.ne.s32.totalorder %s40, %s41
    %p55 = scmp.eq.s32.totalorder %s19, 1
    %p56 = por %p54, %p55
    %p58 = scmp.ne.s32.totalorder %s41, %s57
    %p59 = scmp.eq.s32.totalorder %s19, 0
    %p60 = por %p58, %p59
    %s61 = smul.u32 %s21, 16
    %s62 = ssub.s32 %s61, 1
    %p63 = scmp.gt.s32.totalorder %s62, 0
    %s64 = scalar_select %p63, %s62, 0
    %s65 = smul.u32 %s28, 16
    %s66 = ssub.s32 %s65, 1
    %p67 = scmp.gt.s32.totalorder %s66, 0
    %s68 = scalar_select %p67, %s66, 0
    %s69 = ssub.s32 %s20, %s32
    %s70 = ssub.s32 %s64, %s68
    %s71 = sor.u32 %s69, %s70
    %p72 = scmp.eq.s32.totalorder %s71, 0
    %s74 = sadd.s32 %s73, 1
    %s75 = scalar_select %p72, %s73, %s74
    %p78 = pneg %p72
    %p79 = scmp.eq.s32.totalorder %s13, 1
    %p80 = por %p78, %p79
    %p81 = scmp.ne.s32.totalorder %s73, %s76
    %p82 = scmp.eq.s32.totalorder %s13, 0
    %p83 = por %p81, %p82
    %p84 = scmp.ne.s32.totalorder %s73, %s76
    %p85 = scmp.eq.s32.totalorder %s18, 1
    %p86 = por %p84, %p85
    %p87 = scmp.ne.s32.totalorder %s76, %s77
    %p88 = scmp.eq.s32.totalorder %s18, 0
    %p89 = por %p87, %p88
    %p90 = scmp.ne.s32.totalorder %s76, %s77
    %p91 = scmp.eq.s32.totalorder %s19, 1
    %p92 = por %p90, %p91
    %p94 = scmp.ne.s32.totalorder %s77, %s93
    %p95 = scmp.eq.s32.totalorder %s19, 0
    %p96 = por %p94, %p95
    %s97 = sadd.s32 %s21, 1
    %s98 = smul.u32 %s97, 16
    %p99 = scmp.lt.s32.totalorder %s98, 15
    %s100 = scalar_select %p99, %s98, 15
    %s101 = sadd.s32 %s28, 1
    %s102 = smul.u32 %s101, 16
    %p103 = scmp.lt.s32.totalorder %s102, 15
    %s104 = scalar_select %p103, %s102, 15
    %s105 = ssub.s32 %s20, %s32
    %s106 = ssub.s32 %s100, %s104
    %s107 = sor.u32 %s105, %s106
    %p108 = scmp.eq.s32.totalorder %s107, 0
    %s110 = sadd.s32 %s109, 1
    %s111 = scalar_select %p108, %s109, %s110
    %p114 = pneg %p108
    %p115 = scmp.eq.s32.totalorder %s13, 1
    %p116 = por %p114, %p115
    %p117 = scmp.ne.s32.totalorder %s109, %s112
    %p118 = scmp.eq.s32.totalorder %s13, 0
    %p119 = por %p117, %p118
    %p120 = scmp.ne.s32.totalorder %s109, %s112
    %p121 = scmp.eq.s32.totalorder %s18, 1
    %p122 = por %p120, %p121
    %p123 = scmp.ne.s32.totalorder %s112, %s113
    %p124 = scmp.eq.s32.totalorder %s18, 0
    %p125 = por %p123, %p124
    %p126 = scmp.ne.s32.totalorder %s112, %s113
    %p127 = scmp.eq.s32.totalorder %s19, 1
    %p128 = por %p126, %p127
    %p130 = scmp.ne.s32.totalorder %s113, %s129
    %p131 = scmp.eq.s32.totalorder %s19, 0
    %p132 = por %p130, %p131
    %s134 = sadd.s32 %s133, 1
    %p137 = scmp.eq.s32.totalorder %s13, 1
    %p138 = scmp.ne.s32.totalorder %s133, %s135
    %p139 = scmp.eq.s32.totalorder %s13, 0
    %p140 = por %p138, %p139
    %p141 = scmp.ne.s32.totalorder %s133, %s135
    %p142 = scmp.eq.s32.totalorder %s18, 1
    %p143 = por %p141, %p142
    %p144 = scmp.ne.s32.totalorder %s135, %s136
    %p145 = scmp.eq.s32.totalorder %s18, 0
    %p146 = por %p144, %p145
    %p147 = scmp.ne.s32.totalorder %s135, %s136
    %p148 = scmp.eq.s32.totalorder %s19, 1
    %p149 = por %p147, %p148
    %p151 = scmp.ne.s32.totalorder %s136, %s150
    %p152 = scmp.eq.s32.totalorder %s19, 0
    %p153 = por %p151, %p152
    %s155 = sadd.s32 %s154, 1
    %p158 = scmp.eq.s32.totalorder %s13, 1
    %p159 = scmp.ne.s32.totalorder %s154, %s156
    %p160 = scmp.eq.s32.totalorder %s13, 0
    %p161 = por %p159, %p160
    %p162 = scmp.ne.s32.totalorder %s154, %s156
    %p163 = scmp.eq.s32.totalorder %s18, 1
    %p164 = por %p162, %p163
    %p165 = scmp.ne.s32.totalorder %s156, %s157
    %p166 = scmp.eq.s32.totalorder %s18, 0
    %p167 = por %p165, %p166
    %p168 = scmp.ne.s32.totalorder %s156, %s157
    %p169 = scmp.eq.s32.totalorder %s19, 1
    %p170 = por %p168, %p169
    %p172 = scmp.ne.s32.totalorder %s157, %s171
    %p173 = scmp.eq.s32.totalorder %s19, 0
    %p174 = por %p172, %p173
    %s175 = ssub.s32 %s20, %s32
    %s176 = ssub.s32 %s21, %s28
    %s177 = sor.u32 %s175, %s176
    %p178 = scmp.eq.s32.totalorder %s177, 0
    %s180 = sadd.s32 %s179, 1
    %s181 = scalar_select %p178, %s179, %s180
    %p184 = pneg %p178
    %p185 = scmp.eq.s32.totalorder %s13, 1
    %p186 = por %p184, %p185
    %p187 = scmp.ne.s32.totalorder %s179, %s182
    %p188 = scmp.eq.s32.totalorder %s13, 0
    %p189 = por %p187, %p188
    %p190 = scmp.ne.s32.totalorder %s179, %s182
    %p191 = scmp.eq.s32.totalorder %s18, 1
    %p192 = por %p190, %p191
    %p193 = scmp.ne.s32.totalorder %s182, %s183
    %p194 = scmp.eq.s32.totalorder %s18, 0
    %p195 = por %p193, %p194
    %p196 = scmp.ne.s32.totalorder %s182, %s183
    %p197 = scmp.eq.s32.totalorder %s19, 1
    %p198 = por %p196, %p197
    %p200 = scmp.ne.s32.totalorder %s183, %s199
    %p201 = scmp.eq.s32.totalorder %s19, 0
    %p202 = por %p200, %p201
    %s203 = ssub.s32 %s20, %s32
    %s204 = ssub.s32 %s21, %s28
    %s205 = sor.u32 %s203, %s204
    %p206 = scmp.eq.s32.totalorder %s205, 0
    %s208 = sadd.s32 %s207, 1
    %s209 = scalar_select %p206, %s207, %s208
    %p212 = pneg %p206
    %p213 = scmp.eq.s32.totalorder %s13, 1
    %p214 = por %p212, %p213
    %p215 = scmp.ne.s32.totalorder %s207, %s210
    %p216 = scmp.eq.s32.totalorder %s13, 0
    %p217 = por %p215, %p216
    %p218 = scmp.ne.s32.totalorder %s207, %s210
    %p219 = scmp.eq.s32.totalorder %s18, 1
    %p220 = por %p218, %p219
    %p221 = scmp.ne.s32.totalorder %s210, %s211
    %p222 = scmp.eq.s32.totalorder %s18, 0
    %p223 = por %p221, %p222
    %p224 = scmp.ne.s32.totalorder %s210, %s211
    %p225 = scmp.eq.s32.totalorder %s19, 1
    %p226 = por %p224, %p225
    %p228 = scmp.ne.s32.totalorder %s211, %s227
    %p229 = scmp.eq.s32.totalorder %s19, 0
    %p230 = por %p228, %p229
    %p231 = scmp.le.s32.totalorder 1, %s13
    %p232 = scmp.lt.s32.totalorder %s13, 3
    %p233 = pnand %p231, %p232
    %p234 = pneg %p233
    // Predicated region
    $region9: #{recurrent_block_forward.4} parent=5 // pred_check
      _
    $region10: #{recurrent_block_forward.4} parent=5 // pred_check_branch
      %236 = sbr.rel (%p233) target = $region12
    $region11: #{recurrent_block_forward.4} parent=5 // pred_region
      %s237 = ssub.s32 %s13, 1
      // Predicated region
      $region13: #{recurrent_block_forward.4} parent=11 // pred_check
        %p238 = pneg %p146
      $region14: #{recurrent_block_forward.4} parent=11 // pred_check_branch
        %240 = sbr.rel (%p238) target = $region16
      $region15: #{recurrent_block_forward.4} parent=11 // pred_region
        _
      $region16: #{recurrent_block_forward.4} parent=11 // pred_fallthru
        _
      // Predicated region
      $region17: #{recurrent_block_forward.4} parent=11 // pred_check
        %p241 = pneg %p167
      $region18: #{recurrent_block_forward.4} parent=11 // pred_check_branch
        %243 = sbr.rel (%p241) target = $region20
      $region19: #{recurrent_block_forward.4} parent=11 // pred_region
        _
      $region20: #{recurrent_block_forward.4} parent=11 // pred_fallthru
        _
    $region12: #{recurrent_block_forward.4} parent=5 // pred_fallthru
      _
    %p244 = scmp.lt.s32.totalorder %s13, 2
    // Predicated region
    $region21: #{recurrent_block_forward.4} parent=5 // pred_check
      %p245 = pneg %p244
    $region22: #{recurrent_block_forward.4} parent=5 // pred_check_branch
      %247 = sbr.rel (%p245) target = $region24
    $region23: #{recurrent_block_forward.4} parent=5 // pred_region
      // Predicated region
      $region25: #{recurrent_block_forward.4} parent=23 // pred_check
        %p248 = pneg %p47
      $region26: #{recurrent_block_forward.4} parent=23 // pred_check_branch
        %250 = sbr.rel (%p248) target = $region28
      $region27: #{recurrent_block_forward.4} parent=23 // pred_region
        %s251 = smul.u32 16, %s21
        %p252 = scmp.lt.s32.totalorder %s20, 1
        %s253 = scalar_select %p252, %s20, 1
        %p254 = scmp.lt.s32.totalorder %s251, 15
        %s255 = scalar_select %p254, %s251, 15
        %s256 = smul.addr %s255, 2
        %s257 = smul.addr %s253, 32
        %s258 = sadd.s32 %s256, %s257
        %s259 = smul.addr %s258, 4
        %s260 = scalar_lea.vmem %s0, %s259
        %s261 = smul.u32 16, %s21
      $region28: #{recurrent_block_forward.4} parent=23 // pred_fallthru
        _
      // Predicated region
      $region29: #{recurrent_block_forward.4} parent=23 // pred_check
        %p262 = pneg %p83
      $region30: #{recurrent_block_forward.4} parent=23 // pred_check_branch
        %264 = sbr.rel (%p262) target = $region32
      $region31: #{recurrent_block_forward.4} parent=23 // pred_region
        %s265 = smul.u32 %s21, 16
        %s266 = ssub.s32 %s265, 1
        %p267 = scmp.gt.s32.totalorder %s266, 0
        %s268 = scalar_select %p267, %s266, 0
        %p269 = scmp.lt.s32.totalorder %s20, 1
        %s270 = scalar_select %p269, %s20, 1
        %p271 = scmp.lt.s32.totalorder %s268, 15
        %s272 = scalar_select %p271, %s268, 15
        %s273 = smul.addr %s272, 2
        %s274 = smul.addr %s270, 32
        %s275 = sadd.s32 %s273, %s274
        %s276 = smul.addr %s275, 4
        %s277 = scalar_lea.vmem %s1, %s276
        %s278 = smul.u32 %s21, 16
        %s279 = ssub.s32 %s278, 1
        %p280 = scmp.gt.s32.totalorder %s279, 0
        %s281 = scalar_select %p280, %s279, 0
      $region32: #{recurrent_block_forward.4} parent=23 // pred_fallthru
        _
      // Predicated region
      $region33: #{recurrent_block_forward.4} parent=23 // pred_check
        %p282 = pneg %p119
      $region34: #{recurrent_block_forward.4} parent=23 // pred_check_branch
        %284 = sbr.rel (%p282) target = $region36
      $region35: #{recurrent_block_forward.4} parent=23 // pred_region
        %s285 = sadd.s32 %s21, 1
        %s286 = smul.u32 %s285, 16
        %p287 = scmp.lt.s32.totalorder %s286, 15
        %s288 = scalar_select %p287, %s286, 15
        %p289 = scmp.lt.s32.totalorder %s20, 1
        %s290 = scalar_select %p289, %s20, 1
        %p291 = scmp.lt.s32.totalorder %s288, 15
        %s292 = scalar_select %p291, %s288, 15
        %s293 = smul.addr %s292, 2
        %s294 = smul.addr %s290, 32
        %s295 = sadd.s32 %s293, %s294
        %s296 = smul.addr %s295, 4
        %s297 = scalar_lea.vmem %s2, %s296
        %s298 = sadd.s32 %s21, 1
        %s299 = smul.u32 %s298, 16
        %p300 = scmp.lt.s32.totalorder %s299, 15
        %s301 = scalar_select %p300, %s299, 15
      $region36: #{recurrent_block_forward.4} parent=23 // pred_fallthru
        _
    $region24: #{recurrent_block_forward.4} parent=5 // pred_fallthru
      _
    %p302 = scmp.le.s32.totalorder 1, %s13
    %p303 = scmp.lt.s32.totalorder %s13, 3
    %p304 = pnand %p302, %p303
    %p305 = pneg %p304
    // Predicated region
    $region37: #{recurrent_block_forward.4} parent=5 // pred_check
      _
    $region38: #{recurrent_block_forward.4} parent=5 // pred_check_branch
      %307 = sbr.rel (%p304) target = $region40
    $region39: #{recurrent_block_forward.4} parent=5 // pred_region
      %s308 = ssub.s32 %s13, 1
      %s309 = smul.u32 16, %s23
      %p310 = scmp.lt.s32.totalorder %s22, 1
      %s311 = scalar_select %p310, %s22, 1
      %p312 = scmp.lt.s32.totalorder %s309, 15
      %s313 = scalar_select %p312, %s309, 15
      %s314 = smul.addr %s313, 2
      %s315 = smul.addr %s311, 32
      %s316 = sadd.s32 %s314, %s315
      %s317 = smul.addr %s316, 4
      %s318 = scalar_lea.vmem %s0, %s317
      %p319 = pneg %p53
      %p320 = pneg %p50
      %s321 = smul.u32 %s23, 16
      %s322 = ssub.s32 %s321, 1
      %p323 = scmp.gt.s32.totalorder %s322, 0
      %s324 = scalar_select %p323, %s322, 0
      %p325 = scmp.lt.s32.totalorder %s22, 1
      %s326 = scalar_select %p325, %s22, 1
      %p327 = scmp.lt.s32.totalorder %s324, 15
      %s328 = scalar_select %p327, %s324, 15
      %s329 = smul.addr %s328, 2
      %s330 = smul.addr %s326, 32
      %s331 = sadd.s32 %s329, %s330
      %s332 = smul.addr %s331, 4
      %s333 = scalar_lea.vmem %s1, %s332
      %p334 = pneg %p89
      %p335 = pneg %p86
      %s336 = sadd.s32 %s23, 1
      %s337 = smul.u32 %s336, 16
      %p338 = scmp.lt.s32.totalorder %s337, 15
      %s339 = scalar_select %p338, %s337, 15
      %p340 = scmp.lt.s32.totalorder %s22, 1
      %s341 = scalar_select %p340, %s22, 1
      %p342 = scmp.lt.s32.totalorder %s339, 15
      %s343 = scalar_select %p342, %s339, 15
      %s344 = smul.addr %s343, 2
      %s345 = smul.addr %s341, 32
      %s346 = sadd.s32 %s344, %s345
      %s347 = smul.addr %s346, 4
      %s348 = scalar_lea.vmem %s2, %s347
      %p349 = pneg %p125
      %p350 = pneg %p122
      %p351 = pneg %p146
      %p352 = pneg %p143
      %p353 = pneg %p167
      %p354 = pneg %p164
      %p355 = pneg %p195
      %p356 = pneg %p192
      %s357 = smul.u32 16, %s23
      %p358 = scmp.lt.s32.totalorder %s22, 1
      %s359 = scalar_select %p358, %s22, 1
      %p360 = scmp.lt.s32.totalorder %s357, 15
      %s361 = scalar_select %p360, %s357, 15
      %s362 = smul.addr %s361, 2
      %s363 = smul.addr %s359, 32
      %s364 = sadd.s32 %s362, %s363
      %s365 = smul.addr %s364, 8
      %s366 = scalar_lea.vmem %s5, %s365
      %p367 = pneg %p223
      %p368 = pneg %p220
      %p369 = scmp.lt.s32.totalorder %s22, 1
      %s370 = scalar_select %p369, %s22, 1
      %p371 = scmp.lt.s32.totalorder %s23, 0
      %s372 = scalar_select %p371, %s23, 0
      %s373 = sadd.s32 %s372, %s370
      %s374 = smul.addr %s373, 2
      %s375 = scalar_lea.vmem %s6, %s374
      %s376 = smul.u32 16, %s23
      %p377 = scmp.lt.s32.totalorder %s22, 1
      %s378 = scalar_select %p377, %s22, 1
      %p379 = scmp.lt.s32.totalorder %s376, 15
      %s380 = scalar_select %p379, %s376, 15
      %s381 = smul.addr %s380, 2
      %s382 = smul.addr %s378, 32
      %s383 = sadd.s32 %s381, %s382
      %s384 = smul.addr %s383, 4
      %s385 = scalar_lea.vmem %s0, %s384
      %s386 = smul.u32 16, %s23
      %s387 = smul.u32 %s23, 16
      %s388 = ssub.s32 %s387, 1
      %p389 = scmp.gt.s32.totalorder %s388, 0
      %s390 = scalar_select %p389, %s388, 0
      %p391 = scmp.lt.s32.totalorder %s22, 1
      %s392 = scalar_select %p391, %s22, 1
      %p393 = scmp.lt.s32.totalorder %s390, 15
      %s394 = scalar_select %p393, %s390, 15
      %s395 = smul.addr %s394, 2
      %s396 = smul.addr %s392, 32
      %s397 = sadd.s32 %s395, %s396
      %s398 = smul.addr %s397, 4
      %s399 = scalar_lea.vmem %s1, %s398
      %s400 = smul.u32 %s23, 16
      %s401 = ssub.s32 %s400, 1
      %p402 = scmp.gt.s32.totalorder %s401, 0
      %s403 = scalar_select %p402, %s401, 0
      %s404 = sadd.s32 %s23, 1
      %s405 = smul.u32 %s404, 16
      %p406 = scmp.lt.s32.totalorder %s405, 15
      %s407 = scalar_select %p406, %s405, 15
      %p408 = scmp.lt.s32.totalorder %s22, 1
      %s409 = scalar_select %p408, %s22, 1
      %p410 = scmp.lt.s32.totalorder %s407, 15
      %s411 = scalar_select %p410, %s407, 15
      %s412 = smul.addr %s411, 2
      %s413 = smul.addr %s409, 32
      %s414 = sadd.s32 %s412, %s413
      %s415 = smul.addr %s414, 4
      %s416 = scalar_lea.vmem %s2, %s415
      %s417 = sadd.s32 %s23, 1
      %s418 = smul.u32 %s417, 16
      %p419 = scmp.lt.s32.totalorder %s418, 15
      %s420 = scalar_select %p419, %s418, 15
      %s421 = smul.u32 16, %s23
      %p422 = scmp.lt.s32.totalorder %s22, 1
      %s423 = scalar_select %p422, %s22, 1
      %p424 = scmp.lt.s32.totalorder %s421, 15
      %s425 = scalar_select %p424, %s421, 15
      %s426 = smul.addr %s425, 2
      %s427 = smul.addr %s423, 32
      %s428 = sadd.s32 %s426, %s427
      %s429 = smul.addr %s428, 8
      %s430 = scalar_lea.vmem %s5, %s429
      %s431 = smul.u32 16, %s23
      %p432 = scmp.lt.s32.totalorder %s22, 1
      %s433 = scalar_select %p432, %s22, 1
      %p434 = scmp.lt.s32.totalorder %s23, 0
      %s435 = scalar_select %p434, %s23, 0
      %s436 = sadd.s32 %s435, %s433
      %s437 = smul.addr %s436, 2
      %s438 = scalar_lea.vmem %s6, %s437
      %vm440 = vcmask 27648
      %441 = vst.msk [vmem:[#allocation2] sm:$0xf] %vm440, 0
      %442 = vst.msk [vmem:[#allocation2 + $0x4] sm:$0xf] %vm440, 0
      %vm443 = vcmask 24576
      %444 = vst.msk [vmem:[#allocation2 + $0x8] sm:$0x1] %vm443, 0
      %445 = vst.msk [vmem:[#allocation2 + $0xc] sm:$0xf] %vm440, 0
      %446 = vst.msk [vmem:[#allocation2 + $0x10] sm:$0xf] %vm440, 0
      %447 = vst.msk [vmem:[#allocation2 + $0x14] sm:$0x1] %vm443, 0
      %448 = vst.msk [vmem:[#allocation2 + $0x18] sm:$0xf] %vm440, 0
      %449 = vst.msk [vmem:[#allocation2 + $0x1c] sm:$0xf] %vm440, 0
      %450 = vst.msk [vmem:[#allocation2 + $0x20] sm:$0x1] %vm443, 0
      %451 = vst.msk [vmem:[#allocation2 + $0x24] sm:$0xf] %vm440, 0
      %452 = vst.msk [vmem:[#allocation2 + $0x28] sm:$0xf] %vm440, 0
      %453 = vst.msk [vmem:[#allocation2 + $0x2c] sm:$0x1] %vm443, 0
      %454 = vst.msk [vmem:[#allocation2 + $0x30] sm:$0xf] %vm440, 0
      %455 = vst.msk [vmem:[#allocation2 + $0x34] sm:$0xf] %vm440, 0
      %456 = vst.msk [vmem:[#allocation2 + $0x38] sm:$0x1] %vm443, 0
      %457 = vst.msk [vmem:[#allocation2 + $0x3c] sm:$0xf] %vm440, 0
      %458 = vst.msk [vmem:[#allocation2 + $0x40] sm:$0xf] %vm440, 0
      %459 = vst.msk [vmem:[#allocation2 + $0x44] sm:$0x1] %vm443, 0
      %460 = vst.msk [vmem:[#allocation2 + $0x48] sm:$0xf] %vm440, 0
      %461 = vst.msk [vmem:[#allocation2 + $0x4c] sm:$0xf] %vm440, 0
      %462 = vst.msk [vmem:[#allocation2 + $0x50] sm:$0x1] %vm443, 0
      %463 = vst.msk [vmem:[#allocation2 + $0x54] sm:$0xf] %vm440, 0
      %464 = vst.msk [vmem:[#allocation2 + $0x58] sm:$0xf] %vm440, 0
      %465 = vst.msk [vmem:[#allocation2 + $0x5c] sm:$0x1] %vm443, 0
      %466 = vst.msk [vmem:[#allocation2 + $0x60] sm:$0xf] %vm440, 0
      %467 = vst.msk [vmem:[#allocation2 + $0x64] sm:$0xf] %vm440, 0
      %468 = vst.msk [vmem:[#allocation2 + $0x68] sm:$0x1] %vm443, 0
      %469 = vst.msk [vmem:[#allocation2 + $0x6c] sm:$0xf] %vm440, 0
      %470 = vst.msk [vmem:[#allocation2 + $0x70] sm:$0xf] %vm440, 0
      %471 = vst.msk [vmem:[#allocation2 + $0x74] sm:$0x1] %vm443, 0
      %472 = vst.msk [vmem:[#allocation2 + $0x78] sm:$0xf] %vm440, 0
      %473 = vst.msk [vmem:[#allocation2 + $0x7c] sm:$0xf] %vm440, 0
      %474 = vst.msk [vmem:[#allocation2 + $0x80] sm:$0x1] %vm443, 0
      %475 = vst.msk [vmem:[#allocation2 + $0x84] sm:$0xf] %vm440, 0
      %476 = vst.msk [vmem:[#allocation2 + $0x88] sm:$0xf] %vm440, 0
      %477 = vst.msk [vmem:[#allocation2 + $0x8c] sm:$0x1] %vm443, 0
      %478 = vst.msk [vmem:[#allocation2 + $0x90] sm:$0xf] %vm440, 0
      %479 = vst.msk [vmem:[#allocation2 + $0x94] sm:$0xf] %vm440, 0
      %480 = vst.msk [vmem:[#allocation2 + $0x98] sm:$0x1] %vm443, 0
      %481 = vst.msk [vmem:[#allocation2 + $0x9c] sm:$0xf] %vm440, 0
      %482 = vst.msk [vmem:[#allocation2 + $0xa0] sm:$0xf] %vm440, 0
      %483 = vst.msk [vmem:[#allocation2 + $0xa4] sm:$0x1] %vm443, 0
      %484 = vst.msk [vmem:[#allocation2 + $0xa8] sm:$0xf] %vm440, 0
      %485 = vst.msk [vmem:[#allocation2 + $0xac] sm:$0xf] %vm440, 0
      %486 = vst.msk [vmem:[#allocation2 + $0xb0] sm:$0x1] %vm443, 0
      %487 = vst.msk [vmem:[#allocation2 + $0xb4] sm:$0xf] %vm440, 0
      %488 = vst.msk [vmem:[#allocation2 + $0xb8] sm:$0xf] %vm440, 0
      %489 = vst.msk [vmem:[#allocation2 + $0xbc] sm:$0x1] %vm443, 0
      %490 = vst.msk [vmem:[#allocation2 + $0xc0] sm:$0xf] %vm440, 0
      %491 = vst.msk [vmem:[#allocation2 + $0xc4] sm:$0xf] %vm440, 0
      %492 = vst.msk [vmem:[#allocation2 + $0xc8] sm:$0x1] %vm443, 0
      %493 = vst.msk [vmem:[#allocation2 + $0xcc] sm:$0xf] %vm440, 0
      %494 = vst.msk [vmem:[#allocation2 + $0xd0] sm:$0xf] %vm440, 0
      %495 = vst.msk [vmem:[#allocation2 + $0xd4] sm:$0x1] %vm443, 0
      %v496 = vld [vmem:[%s385] sm:$0xf]
      %v497 = vld [vmem:[%s385 + $0x4] sm:$0xf]
      %v498 = vld [vmem:[%s385 + $0x8] sm:$0xf]
      %v499 = vld [vmem:[%s385 + $0xc] sm:$0xf]
      %v500 = vld [vmem:[%s385 + $0x10] sm:$0xf]
      %v501 = vld [vmem:[%s385 + $0x14] sm:$0xf]
      %v502 = vld [vmem:[%s385 + $0x18] sm:$0xf]
      %v503 = vld [vmem:[%s385 + $0x1c] sm:$0xf]
      %v504 = vld [vmem:[%s385 + $0x20] sm:$0xf]
      %v505 = vld [vmem:[%s385 + $0x24] sm:$0xf]
      %v506 = vld [vmem:[%s385 + $0x28] sm:$0xf]
      %v507 = vld [vmem:[%s385 + $0x2c] sm:$0xf]
      %v508 = vld [vmem:[%s385 + $0x30] sm:$0xf]
      %v509 = vld [vmem:[%s385 + $0x34] sm:$0xf]
      %v510 = vld [vmem:[%s385 + $0x38] sm:$0xf]
      %v511 = vld [vmem:[%s385 + $0x3c] sm:$0xf]
      %v512 = vld [vmem:[%s385 + $0x40] sm:$0xf]
      %v513 = vld [vmem:[%s385 + $0x44] sm:$0xf]
      %v514 = vld [vmem:[%s385 + $0x48] sm:$0xf]
      %v515 = vld [vmem:[%s385 + $0x4c] sm:$0xf]
      %v516 = vld [vmem:[%s385 + $0x50] sm:$0xf]
      %v517 = vld [vmem:[%s385 + $0x54] sm:$0xf]
      %v518 = vld [vmem:[%s385 + $0x58] sm:$0xf]
      %v519 = vld [vmem:[%s385 + $0x5c] sm:$0xf]
      %v520 = vld [vmem:[%s385 + $0x60] sm:$0xf]
      %v521 = vld [vmem:[%s385 + $0x64] sm:$0xf]
      %v522 = vld [vmem:[%s385 + $0x68] sm:$0xf]
      %v523 = vld [vmem:[%s385 + $0x6c] sm:$0xf]
      %v524 = vld [vmem:[%s385 + $0x70] sm:$0xf]
      %v525 = vld [vmem:[%s385 + $0x74] sm:$0xf]
      %v526 = vld [vmem:[%s385 + $0x78] sm:$0xf]
      %v527 = vld [vmem:[%s385 + $0x7c] sm:$0xf]
      %vm528 = vsmask.f32 256
      %vm529 = vsmask.f32 4368
      %vm530 = vmor %vm528, %vm529
      %v532 = vshrl.u32 %v496, 16
      %v534 = vrot.slane %v532, 7
      %v535 = vshll.u32 %v496, 16
      %v537 = vor.u32 %v534, %v535
      %v538 = vrot.slane %v534, 4
      %v540 = vshrl.u32 %v497, 16
      %v542 = vrot.slane %v540, 7
      %v543 = vshll.u32 %v497, 16
      %v545 = vor.u32 %v542, %v543
      %v546 = vsel %vm530, %v538, %v545
      %v547 = vrot.slane %v542, 4
      %v549 = vshrl.u32 %v498, 16
      %v551 = vrot.slane %v549, 7
      %v552 = vshll.u32 %v498, 16
      %v554 = vor.u32 %v551, %v552
      %v555 = vrot.slane %v551, 4
      %v557 = vshrl.u32 %v499, 16
      %v559 = vrot.slane %v557, 7
      %v560 = vshll.u32 %v499, 16
      %v562 = vor.u32 %v559, %v560
      %v563 = vsel %vm530, %v555, %v562
      %v564 = vrot.slane %v559, 4
      %v566 = vshrl.u32 %v500, 16
      %v568 = vrot.slane %v566, 7
      %v569 = vshll.u32 %v500, 16
      %v571 = vor.u32 %v568, %v569
      %v572 = vrot.slane %v568, 4
      %v574 = vshrl.u32 %v501, 16
      %v576 = vrot.slane %v574, 7
      %v577 = vshll.u32 %v501, 16
      %v579 = vor.u32 %v576, %v577
      %v580 = vsel %vm530, %v572, %v579
      %v581 = vrot.slane %v576, 4
      %v583 = vshrl.u32 %v502, 16
      %v585 = vrot.slane %v583, 7
      %v586 = vshll.u32 %v502, 16
      %v588 = vor.u32 %v585, %v586
      %v589 = vrot.slane %v585, 4
      %v591 = vshrl.u32 %v503, 16
      %v593 = vrot.slane %v591, 7
      %v594 = vshll.u32 %v503, 16
      %v596 = vor.u32 %v593, %v594
      %v597 = vsel %vm530, %v589, %v596
      %v598 = vrot.slane %v593, 4
      %v600 = vshrl.u32 %v504, 16
      %v602 = vrot.slane %v600, 7
      %v603 = vshll.u32 %v504, 16
      %v605 = vor.u32 %v602, %v603
      %v606 = vrot.slane %v602, 4
      %v608 = vshrl.u32 %v505, 16
      %v610 = vrot.slane %v608, 7
      %v611 = vshll.u32 %v505, 16
      %v613 = vor.u32 %v610, %v611
      %v614 = vsel %vm530, %v606, %v613
      %v615 = vrot.slane %v610, 4
      %v617 = vshrl.u32 %v506, 16
      %v619 = vrot.slane %v617, 7
      %v620 = vshll.u32 %v506, 16
      %v622 = vor.u32 %v619, %v620
      %v623 = vrot.slane %v619, 4
      %v625 = vshrl.u32 %v507, 16
      %v627 = vrot.slane %v625, 7
      %v628 = vshll.u32 %v507, 16
      %v630 = vor.u32 %v627, %v628
      %v631 = vsel %vm530, %v623, %v630
      %v632 = vrot.slane %v627, 4
      %v634 = vshrl.u32 %v508, 16
      %v636 = vrot.slane %v634, 7
      %v637 = vshll.u32 %v508, 16
      %v639 = vor.u32 %v636, %v637
      %v640 = vrot.slane %v636, 4
      %v642 = vshrl.u32 %v509, 16
      %v644 = vrot.slane %v642, 7
      %v645 = vshll.u32 %v509, 16
      %v647 = vor.u32 %v644, %v645
      %v648 = vsel %vm530, %v640, %v647
      %v649 = vrot.slane %v644, 4
      %v651 = vshrl.u32 %v510, 16
      %v653 = vrot.slane %v651, 7
      %v654 = vshll.u32 %v510, 16
      %v656 = vor.u32 %v653, %v654
      %v657 = vrot.slane %v653, 4
      %v659 = vshrl.u32 %v511, 16
      %v661 = vrot.slane %v659, 7
      %v662 = vshll.u32 %v511, 16
      %v664 = vor.u32 %v661, %v662
      %v665 = vsel %vm530, %v657, %v664
      %v666 = vrot.slane %v661, 4
      %v668 = vshrl.u32 %v512, 16
      %v670 = vrot.slane %v668, 7
      %v671 = vshll.u32 %v512, 16
      %v673 = vor.u32 %v670, %v671
      %v674 = vrot.slane %v670, 4
      %v676 = vshrl.u32 %v513, 16
      %v678 = vrot.slane %v676, 7
      %v679 = vshll.u32 %v513, 16
      %v681 = vor.u32 %v678, %v679
      %v682 = vsel %vm530, %v674, %v681
      %v683 = vrot.slane %v678, 4
      %v685 = vshrl.u32 %v514, 16
      %v687 = vrot.slane %v685, 7
      %v688 = vshll.u32 %v514, 16
      %v690 = vor.u32 %v687, %v688
      %v691 = vrot.slane %v687, 4
      %v693 = vshrl.u32 %v515, 16
      %v695 = vrot.slane %v693, 7
      %v696 = vshll.u32 %v515, 16
      %v698 = vor.u32 %v695, %v696
      %v699 = vsel %vm530, %v691, %v698
      %v700 = vrot.slane %v695, 4
      %v702 = vshrl.u32 %v516, 16
      %v704 = vrot.slane %v702, 7
      %v705 = vshll.u32 %v516, 16
      %v707 = vor.u32 %v704, %v705
      %v708 = vrot.slane %v704, 4
      %v710 = vshrl.u32 %v517, 16
      %v712 = vrot.slane %v710, 7
      %v713 = vshll.u32 %v517, 16
      %v715 = vor.u32 %v712, %v713
      %v716 = vsel %vm530, %v708, %v715
      %v717 = vrot.slane %v712, 4
      %v719 = vshrl.u32 %v518, 16
      %v721 = vrot.slane %v719, 7
      %v722 = vshll.u32 %v518, 16
      %v724 = vor.u32 %v721, %v722
      %v725 = vrot.slane %v721, 4
      %v727 = vshrl.u32 %v519, 16
      %v729 = vrot.slane %v727, 7
      %v730 = vshll.u32 %v519, 16
      %v732 = vor.u32 %v729, %v730
      %v733 = vsel %vm530, %v725, %v732
      %v734 = vrot.slane %v729, 4
      %v736 = vshrl.u32 %v520, 16
      %v738 = vrot.slane %v736, 7
      %v739 = vshll.u32 %v520, 16
      %v741 = vor.u32 %v738, %v739
      %v742 = vrot.slane %v738, 4
      %v744 = vshrl.u32 %v521, 16
      %v746 = vrot.slane %v744, 7
      %v747 = vshll.u32 %v521, 16
      %v749 = vor.u32 %v746, %v747
      %v750 = vsel %vm530, %v742, %v749
      %v751 = vrot.slane %v746, 4
      %v753 = vshrl.u32 %v522, 16
      %v755 = vrot.slane %v753, 7
      %v756 = vshll.u32 %v522, 16
      %v758 = vor.u32 %v755, %v756
      %v759 = vrot.slane %v755, 4
      %v761 = vshrl.u32 %v523, 16
      %v763 = vrot.slane %v761, 7
      %v764 = vshll.u32 %v523, 16
      %v766 = vor.u32 %v763, %v764
      %v767 = vsel %vm530, %v759, %v766
      %v768 = vrot.slane %v763, 4
      %v770 = vshrl.u32 %v524, 16
      %v772 = vrot.slane %v770, 7
      %v773 = vshll.u32 %v524, 16
      %v775 = vor.u32 %v772, %v773
      %v776 = vrot.slane %v772, 4
      %v778 = vshrl.u32 %v525, 16
      %v780 = vrot.slane %v778, 7
      %v781 = vshll.u32 %v525, 16
      %v783 = vor.u32 %v780, %v781
      %v784 = vsel %vm530, %v776, %v783
      %v785 = vrot.slane %v780, 4
      %v787 = vshrl.u32 %v526, 16
      %v789 = vrot.slane %v787, 7
      %v790 = vshll.u32 %v526, 16
      %v792 = vor.u32 %v789, %v790
      %v793 = vrot.slane %v789, 4
      %v795 = vshrl.u32 %v527, 16
      %v797 = vrot.slane %v795, 7
      %v798 = vshll.u32 %v527, 16
      %v800 = vor.u32 %v797, %v798
      %v801 = vsel %vm530, %v793, %v800
      %v802 = vrot.slane %v797, 4
      %s851 = scalar_lea.vmem [#allocation2], 12
      %vm852 = vcmask 27648
      %vm853 = vsmask.f32 7938
      %vm854 = vmand %vm852, %vm853
      %v855 = vld [vmem:[%s851] sm:$0xf]
      %v856 = vsel %vm854, %v537, %v855
      %857 = vst [vmem:[%s851] sm:$0xf] %v856
      %858 = vst.msk [vmem:[%s851 + $0x4] sm:$0xf] %vm440, %v546
      %vm859 = vcmask 24576
      %vm860 = vmand %vm859, %vm528
      %v861 = vld [vmem:[%s851 + $0x8] sm:$0x1]
      %v862 = vsel %vm860, %v547, %v861
      %863 = vst [vmem:[%s851 + $0x8] sm:$0x1] %v862
      %v864 = vld [vmem:[%s851 + $0xc] sm:$0xf]
      %v865 = vsel %vm854, %v554, %v864
      %866 = vst [vmem:[%s851 + $0xc] sm:$0xf] %v865
      %867 = vst.msk [vmem:[%s851 + $0x10] sm:$0xf] %vm440, %v563
      %v868 = vld [vmem:[%s851 + $0x14] sm:$0x1]
      %v869 = vsel %vm860, %v564, %v868
      %870 = vst [vmem:[%s851 + $0x14] sm:$0x1] %v869
      %v871 = vld [vmem:[%s851 + $0x18] sm:$0xf]
      %v872 = vsel %vm854, %v571, %v871
      %873 = vst [vmem:[%s851 + $0x18] sm:$0xf] %v872
      %874 = vst.msk [vmem:[%s851 + $0x1c] sm:$0xf] %vm440, %v580
      %v875 = vld [vmem:[%s851 + $0x20] sm:$0x1]
      %v876 = vsel %vm860, %v581, %v875
      %877 = vst [vmem:[%s851 + $0x20] sm:$0x1] %v876
      %v878 = vld [vmem:[%s851 + $0x24] sm:$0xf]
      %v879 = vsel %vm854, %v588, %v878
      %880 = vst [vmem:[%s851 + $0x24] sm:$0xf] %v879
      %881 = vst.msk [vmem:[%s851 + $0x28] sm:$0xf] %vm440, %v597
      %v882 = vld [vmem:[%s851 + $0x2c] sm:$0x1]
      %v883 = vsel %vm860, %v598, %v882
      %884 = vst [vmem:[%s851 + $0x2c] sm:$0x1] %v883
      %v885 = vld [vmem:[%s851 + $0x30] sm:$0xf]
      %v886 = vsel %vm854, %v605, %v885
      %887 = vst [vmem:[%s851 + $0x30] sm:$0xf] %v886
      %888 = vst.msk [vmem:[%s851 + $0x34] sm:$0xf] %vm440, %v614
      %v889 = vld [vmem:[%s851 + $0x38] sm:$0x1]
      %v890 = vsel %vm860, %v615, %v889
      %891 = vst [vmem:[%s851 + $0x38] sm:$0x1] %v890
      %v892 = vld [vmem:[%s851 + $0x3c] sm:$0xf]
      %v893 = vsel %vm854, %v622, %v892
      %894 = vst [vmem:[%s851 + $0x3c] sm:$0xf] %v893
      %895 = vst.msk [vmem:[%s851 + $0x40] sm:$0xf] %vm440, %v631
      %v896 = vld [vmem:[%s851 + $0x44] sm:$0x1]
      %v897 = vsel %vm860, %v632, %v896
      %898 = vst [vmem:[%s851 + $0x44] sm:$0x1] %v897
      %v899 = vld [vmem:[%s851 + $0x48] sm:$0xf]
      %v900 = vsel %vm854, %v639, %v899
      %901 = vst [vmem:[%s851 + $0x48] sm:$0xf] %v900
      %902 = vst.msk [vmem:[%s851 + $0x4c] sm:$0xf] %vm440, %v648
      %v903 = vld [vmem:[%s851 + $0x50] sm:$0x1]
      %v904 = vsel %vm860, %v649, %v903
      %905 = vst [vmem:[%s851 + $0x50] sm:$0x1] %v904
      %v906 = vld [vmem:[%s851 + $0x54] sm:$0xf]
      %v907 = vsel %vm854, %v656, %v906
      %908 = vst [vmem:[%s851 + $0x54] sm:$0xf] %v907
      %909 = vst.msk [vmem:[%s851 + $0x58] sm:$0xf] %vm440, %v665
      %v910 = vld [vmem:[%s851 + $0x5c] sm:$0x1]
      %v911 = vsel %vm860, %v666, %v910
      %912 = vst [vmem:[%s851 + $0x5c] sm:$0x1] %v911
      %v913 = vld [vmem:[%s851 + $0x60] sm:$0xf]
      %v914 = vsel %vm854, %v673, %v913
      %915 = vst [vmem:[%s851 + $0x60] sm:$0xf] %v914
      %916 = vst.msk [vmem:[%s851 + $0x64] sm:$0xf] %vm440, %v682
      %v917 = vld [vmem:[%s851 + $0x68] sm:$0x1]
      %v918 = vsel %vm860, %v683, %v917
      %919 = vst [vmem:[%s851 + $0x68] sm:$0x1] %v918
      %v920 = vld [vmem:[%s851 + $0x6c] sm:$0xf]
      %v921 = vsel %vm854, %v690, %v920
      %922 = vst [vmem:[%s851 + $0x6c] sm:$0xf] %v921
      %923 = vst.msk [vmem:[%s851 + $0x70] sm:$0xf] %vm440, %v699
      %v924 = vld [vmem:[%s851 + $0x74] sm:$0x1]
      %v925 = vsel %vm860, %v700, %v924
      %926 = vst [vmem:[%s851 + $0x74] sm:$0x1] %v925
      %v927 = vld [vmem:[%s851 + $0x78] sm:$0xf]
      %v928 = vsel %vm854, %v707, %v927
      %929 = vst [vmem:[%s851 + $0x78] sm:$0xf] %v928
      %930 = vst.msk [vmem:[%s851 + $0x7c] sm:$0xf] %vm440, %v716
      %v931 = vld [vmem:[%s851 + $0x80] sm:$0x1]
      %v932 = vsel %vm860, %v717, %v931
      %933 = vst [vmem:[%s851 + $0x80] sm:$0x1] %v932
      %v934 = vld [vmem:[%s851 + $0x84] sm:$0xf]
      %v935 = vsel %vm854, %v724, %v934
      %936 = vst [vmem:[%s851 + $0x84] sm:$0xf] %v935
      %937 = vst.msk [vmem:[%s851 + $0x88] sm:$0xf] %vm440, %v733
      %v938 = vld [vmem:[%s851 + $0x8c] sm:$0x1]
      %v939 = vsel %vm860, %v734, %v938
      %940 = vst [vmem:[%s851 + $0x8c] sm:$0x1] %v939
      %v941 = vld [vmem:[%s851 + $0x90] sm:$0xf]
      %v942 = vsel %vm854, %v741, %v941
      %943 = vst [vmem:[%s851 + $0x90] sm:$0xf] %v942
      %944 = vst.msk [vmem:[%s851 + $0x94] sm:$0xf] %vm440, %v750
      %v945 = vld [vmem:[%s851 + $0x98] sm:$0x1]
      %v946 = vsel %vm860, %v751, %v945
      %947 = vst [vmem:[%s851 + $0x98] sm:$0x1] %v946
      %v948 = vld [vmem:[%s851 + $0x9c] sm:$0xf]
      %v949 = vsel %vm854, %v758, %v948
      %950 = vst [vmem:[%s851 + $0x9c] sm:$0xf] %v949
      %951 = vst.msk [vmem:[%s851 + $0xa0] sm:$0xf] %vm440, %v767
      %v952 = vld [vmem:[%s851 + $0xa4] sm:$0x1]
      %v953 = vsel %vm860, %v768, %v952
      %954 = vst [vmem:[%s851 + $0xa4] sm:$0x1] %v953
      %v955 = vld [vmem:[%s851 + $0xa8] sm:$0xf]
      %v956 = vsel %vm854, %v775, %v955
      %957 = vst [vmem:[%s851 + $0xa8] sm:$0xf] %v956
      %958 = vst.msk [vmem:[%s851 + $0xac] sm:$0xf] %vm440, %v784
      %v959 = vld [vmem:[%s851 + $0xb0] sm:$0x1]
      %v960 = vsel %vm860, %v785, %v959
      %961 = vst [vmem:[%s851 + $0xb0] sm:$0x1] %v960
      %v962 = vld [vmem:[%s851 + $0xb4] sm:$0xf]
      %v963 = vsel %vm854, %v792, %v962
      %964 = vst [vmem:[%s851 + $0xb4] sm:$0xf] %v963
      %965 = vst.msk [vmem:[%s851 + $0xb8] sm:$0xf] %vm440, %v801
      %v966 = vld [vmem:[%s851 + $0xbc] sm:$0x1]
      %v967 = vsel %vm860, %v802, %v966
      %968 = vst [vmem:[%s851 + $0xbc] sm:$0x1] %v967
      %p969 = scmp.gt.s32.totalorder %s23, 0
      // Predicated region
      $region41: #{recurrent_block_forward.4} parent=39 // pred_check
        %p970 = pneg %p969
      $region42: #{recurrent_block_forward.4} parent=39 // pred_check_branch
        %972 = sbr.rel (%p970) target = $region44
      $region43: #{recurrent_block_forward.4} parent=39 // pred_region
        %v973 = vld [vmem:[%s399] sm:$0xf]
        %v974 = vld [vmem:[%s399 + $0x4] sm:$0xf]
        %v976 = vshrl.u32 %v973, 16
        %v978 = vrot.slane %v976, 7
        %v979 = vshll.u32 %v973, 16
        %v981 = vor.u32 %v978, %v979
        %v982 = vrot.slane %v978, 4
        %v984 = vshrl.u32 %v974, 16
        %v986 = vrot.slane %v984, 7
        %v987 = vshll.u32 %v974, 16
        %v989 = vor.u32 %v986, %v987
        %v990 = vsel %vm530, %v982, %v989
        %v991 = vrot.slane %v986, 4
        %v995 = vld [vmem:[#allocation2] sm:$0xf]
        %v996 = vsel %vm854, %v981, %v995
        %997 = vst [vmem:[#allocation2] sm:$0xf] %v996
        %998 = vst.msk [vmem:[#allocation2 + $0x4] sm:$0xf] %vm440, %v990
        %v999 = vld [vmem:[#allocation2 + $0x8] sm:$0x1]
        %v1000 = vsel %vm860, %v991, %v999
        %1001 = vst [vmem:[#allocation2 + $0x8] sm:$0x1] %v1000
      $region44: #{recurrent_block_forward.4} parent=39 // pred_fallthru
        _
      %s1002 = sadd.s32 %s23, 1
      %p1003 = scmp.lt.s32.totalorder %s1002, 1
      // Predicated region
      $region45: #{recurrent_block_forward.4} parent=39 // pred_check
        %p1004 = pneg %p1003
      $region46: #{recurrent_block_forward.4} parent=39 // pred_check_branch
        %1006 = sbr.rel (%p1004) target = $region48
      $region47: #{recurrent_block_forward.4} parent=39 // pred_region
        %v1007 = vld [vmem:[%s416] sm:$0xf]
        %v1008 = vld [vmem:[%s416 + $0x4] sm:$0xf]
        %v1010 = vshrl.u32 %v1007, 16
        %v1012 = vrot.slane %v1010, 7
        %v1013 = vshll.u32 %v1007, 16
        %v1015 = vor.u32 %v1012, %v1013
        %v1016 = vrot.slane %v1012, 4
        %v1018 = vshrl.u32 %v1008, 16
        %v1020 = vrot.slane %v1018, 7
        %v1021 = vshll.u32 %v1008, 16
        %v1023 = vor.u32 %v1020, %v1021
        %v1024 = vsel %vm530, %v1016, %v1023
        %v1025 = vrot.slane %v1020, 4
        %s1029 = scalar_lea.vmem [#allocation2], 204
        %v1030 = vld [vmem:[%s1029] sm:$0xf]
        %v1031 = vsel %vm854, %v1015, %v1030
        %1032 = vst [vmem:[%s1029] sm:$0xf] %v1031
        %1033 = vst.msk [vmem:[%s1029 + $0x4] sm:$0xf] %vm440, %v1024
        %v1034 = vld [vmem:[%s1029 + $0x8] sm:$0x1]
        %v1035 = vsel %vm860, %v1025, %v1034
        %1036 = vst [vmem:[%s1029 + $0x8] sm:$0x1] %v1035
      $region48: #{recurrent_block_forward.4} parent=39 // pred_fallthru
        _
      %v1037 = vld [vmem:[#allocation2] sm:$0xf]
      %v1038 = vld [vmem:[#allocation2 + $0x4] sm:$0xf]
      %v1039 = vld [vmem:[#allocation2 + $0xc] sm:$0xf]
      %v1040 = vld [vmem:[#allocation2 + $0x10] sm:$0xf]
      %v1041 = vld [vmem:[#allocation2 + $0x18] sm:$0xf]
      %v1042 = vld [vmem:[#allocation2 + $0x1c] sm:$0xf]
      %v1043 = vld [vmem:[#allocation2 + $0x24] sm:$0xf]
      %v1044 = vld [vmem:[#allocation2 + $0x28] sm:$0xf]
      %v1045 = vld [vmem:[#allocation2 + $0x30] sm:$0xf]
      %v1046 = vld [vmem:[#allocation2 + $0x34] sm:$0xf]
      %v1047 = vld [vmem:[#allocation2 + $0x3c] sm:$0xf]
      %v1048 = vld [vmem:[#allocation2 + $0x40] sm:$0xf]
      %v1049 = vld [vmem:[#allocation2 + $0x48] sm:$0xf]
      %v1050 = vld [vmem:[#allocation2 + $0x4c] sm:$0xf]
      %v1051 = vld [vmem:[#allocation2 + $0x54] sm:$0xf]
      %v1052 = vld [vmem:[#allocation2 + $0x58] sm:$0xf]
      %v1053 = vld [vmem:[#allocation2 + $0x60] sm:$0xf]
      %v1054 = vld [vmem:[#allocation2 + $0x64] sm:$0xf]
      %v1055 = vld [vmem:[#allocation2 + $0x6c] sm:$0xf]
      %v1056 = vld [vmem:[#allocation2 + $0x70] sm:$0xf]
      %v1057 = vld [vmem:[#allocation2 + $0x78] sm:$0xf]
      %v1058 = vld [vmem:[#allocation2 + $0x7c] sm:$0xf]
      %v1059 = vld [vmem:[#allocation2 + $0x84] sm:$0xf]
      %v1060 = vld [vmem:[#allocation2 + $0x88] sm:$0xf]
      %v1061 = vld [vmem:[#allocation2 + $0x90] sm:$0xf]
      %v1062 = vld [vmem:[#allocation2 + $0x94] sm:$0xf]
      %v1063 = vld [vmem:[#allocation2 + $0x9c] sm:$0xf]
      %v1064 = vld [vmem:[#allocation2 + $0xa0] sm:$0xf]
      %v1065 = vld [vmem:[#allocation2 + $0xa8] sm:$0xf]
      %v1066 = vld [vmem:[#allocation2 + $0xac] sm:$0xf]
      %v1067 = vld [vmem:[#allocation2 + $0xb4] sm:$0xf]
      %v1068 = vld [vmem:[#allocation2 + $0xb8] sm:$0xf]
      %v1069 = vld [vmem:[%s3] sm:$0x3]
      %v1070 = vld [vmem:[#allocation2 + $0x8] sm:$0x1]
      %v1071 = vld [vmem:[#allocation2 + $0x14] sm:$0x1]
      %v1072 = vld [vmem:[#allocation2 + $0x20] sm:$0x1]
      %v1073 = vld [vmem:[#allocation2 + $0x2c] sm:$0x1]
      %v1074 = vld [vmem:[#allocation2 + $0x38] sm:$0x1]
      %v1075 = vld [vmem:[#allocation2 + $0x44] sm:$0x1]
      %v1076 = vld [vmem:[#allocation2 + $0x50] sm:$0x1]
      %v1077 = vld [vmem:[#allocation2 + $0x5c] sm:$0x1]
      %v1078 = vld [vmem:[#allocation2 + $0x68] sm:$0x1]
      %v1079 = vld [vmem:[#allocation2 + $0x74] sm:$0x1]
      %v1080 = vld [vmem:[#allocation2 + $0x80] sm:$0x1]
      %v1081 = vld [vmem:[#allocation2 + $0x8c] sm:$0x1]
      %v1082 = vld [vmem:[#allocation2 + $0x98] sm:$0x1]
      %v1083 = vld [vmem:[#allocation2 + $0xa4] sm:$0x1]
      %v1084 = vld [vmem:[#allocation2 + $0xb0] sm:$0x1]
      %v1085 = vld [vmem:[#allocation2 + $0xbc] sm:$0x1]
      %vm1086 = vsmask.f32 3328
      %vm1087 = vsmask.f32 7440
      %vm1088 = vmor %vm1086, %vm1087
      %v1090 = vshrl.u32 %v1037, 16
      %v1092 = vrot.slane %v1090, 4
      %v1093 = vshll.u32 %v1037, 16
      %v1095 = vrot.slane %v1093, 5
      %v1096 = vor.u32 %v1092, %v1095
      %v1097 = vrot.slane %v1096, 4
      %v1099 = vshll.u32 %v1038, 16
      %v1101 = vrot.slane %v1099, 5
      %v1102 = vsel %vm1088, %v1097, %v1101
      %v1103 = vshrl.u32 %v1038, 16
      %v1105 = vrot.slane %v1103, 4
      %v1106 = vor.u32 %v1105, %v1101
      %v1107 = vrot.slane %v1106, 4
      %v1109 = vshll.u32 %v1070, 16
      %v1111 = vrot.slane %v1109, 5
      %v1112 = vsel %vm1088, %v1107, %v1111
      %v1114 = vshrl.u32 %v1039, 16
      %v1116 = vrot.slane %v1114, 4
      %v1117 = vshll.u32 %v1039, 16
      %v1119 = vrot.slane %v1117, 5
      %v1120 = vor.u32 %v1116, %v1119
      %v1121 = vrot.slane %v1120, 4
      %v1123 = vshll.u32 %v1040, 16
      %v1125 = vrot.slane %v1123, 5
      %v1126 = vsel %vm1088, %v1121, %v1125
      %v1127 = vshrl.u32 %v1040, 16
      %v1129 = vrot.slane %v1127, 4
      %v1130 = vor.u32 %v1129, %v1125
      %v1131 = vrot.slane %v1130, 4
      %v1133 = vshll.u32 %v1071, 16
      %v1135 = vrot.slane %v1133, 5
      %v1136 = vsel %vm1088, %v1131, %v1135
      %v1138 = vshrl.u32 %v1041, 16
      %v1140 = vrot.slane %v1138, 4
      %v1141 = vshll.u32 %v1041, 16
      %v1143 = vrot.slane %v1141, 5
      %v1144 = vor.u32 %v1140, %v1143
      %v1145 = vrot.slane %v1144, 4
      %v1147 = vshll.u32 %v1042, 16
      %v1149 = vrot.slane %v1147, 5
      %v1150 = vsel %vm1088, %v1145, %v1149
      %v1151 = vshrl.u32 %v1042, 16
      %v1153 = vrot.slane %v1151, 4
      %v1154 = vor.u32 %v1153, %v1149
      %v1155 = vrot.slane %v1154, 4
      %v1157 = vshll.u32 %v1072, 16
      %v1159 = vrot.slane %v1157, 5
      %v1160 = vsel %vm1088, %v1155, %v1159
      %v1162 = vshrl.u32 %v1043, 16
      %v1164 = vrot.slane %v1162, 4
      %v1165 = vshll.u32 %v1043, 16
      %v1167 = vrot.slane %v1165, 5
      %v1168 = vor.u32 %v1164, %v1167
      %v1169 = vrot.slane %v1168, 4
      %v1171 = vshll.u32 %v1044, 16
      %v1173 = vrot.slane %v1171, 5
      %v1174 = vsel %vm1088, %v1169, %v1173
      %v1175 = vshrl.u32 %v1044, 16
      %v1177 = vrot.slane %v1175, 4
      %v1178 = vor.u32 %v1177, %v1173
      %v1179 = vrot.slane %v1178, 4
      %v1181 = vshll.u32 %v1073, 16
      %v1183 = vrot.slane %v1181, 5
      %v1184 = vsel %vm1088, %v1179, %v1183
      %v1186 = vshrl.u32 %v1045, 16
      %v1188 = vrot.slane %v1186, 4
      %v1189 = vshll.u32 %v1045, 16
      %v1191 = vrot.slane %v1189, 5
      %v1192 = vor.u32 %v1188, %v1191
      %v1193 = vrot.slane %v1192, 4
      %v1195 = vshll.u32 %v1046, 16
      %v1197 = vrot.slane %v1195, 5
      %v1198 = vsel %vm1088, %v1193, %v1197
      %v1199 = vshrl.u32 %v1046, 16
      %v1201 = vrot.slane %v1199, 4
      %v1202 = vor.u32 %v1201, %v1197
      %v1203 = vrot.slane %v1202, 4
      %v1205 = vshll.u32 %v1074, 16
      %v1207 = vrot.slane %v1205, 5
      %v1208 = vsel %vm1088, %v1203, %v1207
      %v1210 = vshrl.u32 %v1047, 16
      %v1212 = vrot.slane %v1210, 4
      %v1213 = vshll.u32 %v1047, 16
      %v1215 = vrot.slane %v1213, 5
      %v1216 = vor.u32 %v1212, %v1215
      %v1217 = vrot.slane %v1216, 4
      %v1219 = vshll.u32 %v1048, 16
      %v1221 = vrot.slane %v1219, 5
      %v1222 = vsel %vm1088, %v1217, %v1221
      %v1223 = vshrl.u32 %v1048, 16
      %v1225 = vrot.slane %v1223, 4
      %v1226 = vor.u32 %v1225, %v1221
      %v1227 = vrot.slane %v1226, 4
      %v1229 = vshll.u32 %v1075, 16
      %v1231 = vrot.slane %v1229, 5
      %v1232 = vsel %vm1088, %v1227, %v1231
      %v1234 = vshrl.u32 %v1049, 16
      %v1236 = vrot.slane %v1234, 4
      %v1237 = vshll.u32 %v1049, 16
      %v1239 = vrot.slane %v1237, 5
      %v1240 = vor.u32 %v1236, %v1239
      %v1241 = vrot.slane %v1240, 4
      %v1243 = vshll.u32 %v1050, 16
      %v1245 = vrot.slane %v1243, 5
      %v1246 = vsel %vm1088, %v1241, %v1245
      %v1247 = vshrl.u32 %v1050, 16
      %v1249 = vrot.slane %v1247, 4
      %v1250 = vor.u32 %v1249, %v1245
      %v1251 = vrot.slane %v1250, 4
      %v1253 = vshll.u32 %v1076, 16
      %v1255 = vrot.slane %v1253, 5
      %v1256 = vsel %vm1088, %v1251, %v1255
      %v1258 = vshrl.u32 %v1051, 16
      %v1260 = vrot.slane %v1258, 4
      %v1261 = vshll.u32 %v1051, 16
      %v1263 = vrot.slane %v1261, 5
      %v1264 = vor.u32 %v1260, %v1263
      %v1265 = vrot.slane %v1264, 4
      %v1267 = vshll.u32 %v1052, 16
      %v1269 = vrot.slane %v1267, 5
      %v1270 = vsel %vm1088, %v1265, %v1269
      %v1271 = vshrl.u32 %v1052, 16
      %v1273 = vrot.slane %v1271, 4
      %v1274 = vor.u32 %v1273, %v1269
      %v1275 = vrot.slane %v1274, 4
      %v1277 = vshll.u32 %v1077, 16
      %v1279 = vrot.slane %v1277, 5
      %v1280 = vsel %vm1088, %v1275, %v1279
      %v1282 = vshrl.u32 %v1053, 16
      %v1284 = vrot.slane %v1282, 4
      %v1285 = vshll.u32 %v1053, 16
      %v1287 = vrot.slane %v1285, 5
      %v1288 = vor.u32 %v1284, %v1287
      %v1289 = vrot.slane %v1288, 4
      %v1291 = vshll.u32 %v1054, 16
      %v1293 = vrot.slane %v1291, 5
      %v1294 = vsel %vm1088, %v1289, %v1293
      %v1295 = vshrl.u32 %v1054, 16
      %v1297 = vrot.slane %v1295, 4
      %v1298 = vor.u32 %v1297, %v1293
      %v1299 = vrot.slane %v1298, 4
      %v1301 = vshll.u32 %v1078, 16
      %v1303 = vrot.slane %v1301, 5
      %v1304 = vsel %vm1088, %v1299, %v1303
      %v1306 = vshrl.u32 %v1055, 16
      %v1308 = vrot.slane %v1306, 4
      %v1309 = vshll.u32 %v1055, 16
      %v1311 = vrot.slane %v1309, 5
      %v1312 = vor.u32 %v1308, %v1311
      %v1313 = vrot.slane %v1312, 4
      %v1315 = vshll.u32 %v1056, 16
      %v1317 = vrot.slane %v1315, 5
      %v1318 = vsel %vm1088, %v1313, %v1317
      %v1319 = vshrl.u32 %v1056, 16
      %v1321 = vrot.slane %v1319, 4
      %v1322 = vor.u32 %v1321, %v1317
      %v1323 = vrot.slane %v1322, 4
      %v1325 = vshll.u32 %v1079, 16
      %v1327 = vrot.slane %v1325, 5
      %v1328 = vsel %vm1088, %v1323, %v1327
      %v1330 = vshrl.u32 %v1057, 16
      %v1332 = vrot.slane %v1330, 4
      %v1333 = vshll.u32 %v1057, 16
      %v1335 = vrot.slane %v1333, 5
      %v1336 = vor.u32 %v1332, %v1335
      %v1337 = vrot.slane %v1336, 4
      %v1339 = vshll.u32 %v1058, 16
      %v1341 = vrot.slane %v1339, 5
      %v1342 = vsel %vm1088, %v1337, %v1341
      %v1343 = vshrl.u32 %v1058, 16
      %v1345 = vrot.slane %v1343, 4
      %v1346 = vor.u32 %v1345, %v1341
      %v1347 = vrot.slane %v1346, 4
      %v1349 = vshll.u32 %v1080, 16
      %v1351 = vrot.slane %v1349, 5
      %v1352 = vsel %vm1088, %v1347, %v1351
      %v1354 = vshrl.u32 %v1059, 16
      %v1356 = vrot.slane %v1354, 4
      %v1357 = vshll.u32 %v1059, 16
      %v1359 = vrot.slane %v1357, 5
      %v1360 = vor.u32 %v1356, %v1359
      %v1361 = vrot.slane %v1360, 4
      %v1363 = vshll.u32 %v1060, 16
      %v1365 = vrot.slane %v1363, 5
      %v1366 = vsel %vm1088, %v1361, %v1365
      %v1367 = vshrl.u32 %v1060, 16
      %v1369 = vrot.slane %v1367, 4
      %v1370 = vor.u32 %v1369, %v1365
      %v1371 = vrot.slane %v1370, 4
      %v1373 = vshll.u32 %v1081, 16
      %v1375 = vrot.slane %v1373, 5
      %v1376 = vsel %vm1088, %v1371, %v1375
      %v1378 = vshrl.u32 %v1061, 16
      %v1380 = vrot.slane %v1378, 4
      %v1381 = vshll.u32 %v1061, 16
      %v1383 = vrot.slane %v1381, 5
      %v1384 = vor.u32 %v1380, %v1383
      %v1385 = vrot.slane %v1384, 4
      %v1387 = vshll.u32 %v1062, 16
      %v1389 = vrot.slane %v1387, 5
      %v1390 = vsel %vm1088, %v1385, %v1389
      %v1391 = vshrl.u32 %v1062, 16
      %v1393 = vrot.slane %v1391, 4
      %v1394 = vor.u32 %v1393, %v1389
      %v1395 = vrot.slane %v1394, 4
      %v1397 = vshll.u32 %v1082, 16
      %v1399 = vrot.slane %v1397, 5
      %v1400 = vsel %vm1088, %v1395, %v1399
      %v1402 = vshrl.u32 %v1063, 16
      %v1404 = vrot.slane %v1402, 4
      %v1405 = vshll.u32 %v1063, 16
      %v1407 = vrot.slane %v1405, 5
      %v1408 = vor.u32 %v1404, %v1407
      %v1409 = vrot.slane %v1408, 4
      %v1411 = vshll.u32 %v1064, 16
      %v1413 = vrot.slane %v1411, 5
      %v1414 = vsel %vm1088, %v1409, %v1413
      %v1415 = vshrl.u32 %v1064, 16
      %v1417 = vrot.slane %v1415, 4
      %v1418 = vor.u32 %v1417, %v1413
      %v1419 = vrot.slane %v1418, 4
      %v1421 = vshll.u32 %v1083, 16
      %v1423 = vrot.slane %v1421, 5
      %v1424 = vsel %vm1088, %v1419, %v1423
      %v1426 = vshrl.u32 %v1065, 16
      %v1428 = vrot.slane %v1426, 4
      %v1429 = vshll.u32 %v1065, 16
      %v1431 = vrot.slane %v1429, 5
      %v1432 = vor.u32 %v1428, %v1431
      %v1433 = vrot.slane %v1432, 4
      %v1435 = vshll.u32 %v1066, 16
      %v1437 = vrot.slane %v1435, 5
      %v1438 = vsel %vm1088, %v1433, %v1437
      %v1439 = vshrl.u32 %v1066, 16
      %v1441 = vrot.slane %v1439, 4
      %v1442 = vor.u32 %v1441, %v1437
      %v1443 = vrot.slane %v1442, 4
      %v1445 = vshll.u32 %v1084, 16
      %v1447 = vrot.slane %v1445, 5
      %v1448 = vsel %vm1088, %v1443, %v1447
      %v1450 = vshrl.u32 %v1067, 16
      %v1452 = vrot.slane %v1450, 4
      %v1453 = vshll.u32 %v1067, 16
      %v1455 = vrot.slane %v1453, 5
      %v1456 = vor.u32 %v1452, %v1455
      %v1457 = vrot.slane %v1456, 4
      %v1459 = vshll.u32 %v1068, 16
      %v1461 = vrot.slane %v1459, 5
      %v1462 = vsel %vm1088, %v1457, %v1461
      %v1463 = vshrl.u32 %v1068, 16
      %v1465 = vrot.slane %v1463, 4
      %v1466 = vor.u32 %v1465, %v1461
      %v1467 = vrot.slane %v1466, 4
      %v1469 = vshll.u32 %v1085, 16
      %v1471 = vrot.slane %v1469, 5
      %v1472 = vsel %vm1088, %v1467, %v1471
      %s1473 = scalar_lea.vmem %s3, 2
      %v1474 = vld [vmem:[%s1473] sm:$0x3]
      %v1475 = vunpack.c.l.b16 %v1102
      %v1476 = vunpack.c.l.b16 %v1112
      %v1477 = vunpack.c.l.b16 %v1126
      %v1478 = vunpack.c.l.b16 %v1136
      %v1479 = vunpack.c.l.b16 %v1150
      %v1480 = vunpack.c.l.b16 %v1160
      %v1481 = vunpack.c.l.b16 %v1174
      %v1482 = vunpack.c.l.b16 %v1184
      %v1483 = vunpack.c.l.b16 %v1198
      %v1484 = vunpack.c.l.b16 %v1208
      %v1485 = vunpack.c.l.b16 %v1222
      %v1486 = vunpack.c.l.b16 %v1232
      %v1487 = vunpack.c.l.b16 %v1246
      %v1488 = vunpack.c.l.b16 %v1256
      %v1489 = vunpack.c.l.b16 %v1270
      %v1490 = vunpack.c.l.b16 %v1280
      %v1491 = vunpack.c.l.b16 %v1294
      %v1492 = vunpack.c.l.b16 %v1304
      %v1493 = vunpack.c.l.b16 %v1318
      %v1494 = vunpack.c.l.b16 %v1328
      %v1495 = vunpack.c.l.b16 %v1342
      %v1496 = vunpack.c.l.b16 %v1352
      %v1497 = vunpack.c.l.b16 %v1366
      %v1498 = vunpack.c.l.b16 %v1376
      %v1499 = vunpack.c.l.b16 %v1390
      %v1500 = vunpack.c.l.b16 %v1400
      %v1501 = vunpack.c.l.b16 %v1414
      %v1502 = vunpack.c.l.b16 %v1424
      %v1503 = vunpack.c.l.b16 %v1438
      %v1504 = vunpack.c.l.b16 %v1448
      %v1505 = vunpack.c.l.b16 %v1462
      %v1506 = vunpack.c.l.b16 %v1472
      %v1507 = vpack.c.b16 %v1476, %v1475
      %v1508 = vpack.c.b16 %v1478, %v1477
      %v1509 = vpack.c.b16 %v1480, %v1479
      %v1510 = vpack.c.b16 %v1482, %v1481
      %v1511 = vpack.c.b16 %v1484, %v1483
      %v1512 = vpack.c.b16 %v1486, %v1485
      %v1513 = vpack.c.b16 %v1488, %v1487
      %v1514 = vpack.c.b16 %v1490, %v1489
      %v1515 = vpack.c.b16 %v1492, %v1491
      %v1516 = vpack.c.b16 %v1494, %v1493
      %v1517 = vpack.c.b16 %v1496, %v1495
      %v1518 = vpack.c.b16 %v1498, %v1497
      %v1519 = vpack.c.b16 %v1500, %v1499
      %v1520 = vpack.c.b16 %v1502, %v1501
      %v1521 = vpack.c.b16 %v1504, %v1503
      %v1522 = vpack.c.b16 %v1506, %v1505
      %vm1523 = vcmask 31744
      %v1525 = vsel %vm1523, %v1507, 0
      %v1528 = vsel %vm1523, %v1508, 0
      %v1531 = vsel %vm1523, %v1509, 0
      %v1534 = vsel %vm1523, %v1510, 0
      %v1537 = vsel %vm1523, %v1511, 0
      %v1540 = vsel %vm1523, %v1512, 0
      %v1543 = vsel %vm1523, %v1513, 0
      %v1546 = vsel %vm1523, %v1514, 0
      %v1549 = vsel %vm1523, %v1515, 0
      %v1552 = vsel %vm1523, %v1516, 0
      %v1555 = vsel %vm1523, %v1517, 0
      %v1558 = vsel %vm1523, %v1518, 0
      %v1561 = vsel %vm1523, %v1519, 0
      %v1564 = vsel %vm1523, %v1520, 0
      %v1567 = vsel %vm1523, %v1521, 0
      %v1570 = vsel %vm1523, %v1522, 0
      %vm1572 = vcmask 1041408
      %v1574 = vsel %vm1572, %v1474, 0
      %1576 = vmatprep.subr.bf16.mxu0 0
      %1577 = vmatpush1.bf16.msra.mxu0 %v1574
      %1578 = vmatprep.subr.bf16.mxu0 0
      %1579 = vmatpush1.bf16.msra.mxu0 0
      %1580 = vmatprep.subr.bf16.mxu0 0
      %1581 = vmatpush1.bf16.msra.mxu0 0
      %1582 = vmatprep.subr.bf16.mxu0 0
      %1583 = vmatpush1.bf16.msra.mxu0 0
      %1584 = vmatprep.subr.bf16.mxu0 0
      %1585 = vmatpush1.bf16.msra.mxu0 0
      %1586 = vmatprep.subr.bf16.mxu0 0
      %1587 = vmatpush1.bf16.msra.mxu0 0
      %1588 = vmatprep.subr.bf16.mxu0 0
      %1589 = vmatpush1.bf16.msra.mxu0 0
      %1590 = vmatprep.subr.bf16.mxu0 0
      %1591 = vmatpush1.bf16.msra.mxu0 0
      %1592 = vmatprep.subr.bf16.mxu0 0
      %1593 = vmatpush1.bf16.msra.mxu0 0
      %1594 = vmatprep.subr.bf16.mxu0 0
      %1595 = vmatpush1.bf16.msra.mxu0 0
      %1596 = vmatprep.subr.bf16.mxu0 0
      %1597 = vmatpush1.bf16.msra.mxu0 0
      %1598 = vmatprep.subr.bf16.mxu0 0
      %1599 = vmatpush1.bf16.msra.mxu0 0
      %1600 = vmatprep.subr.bf16.mxu0 0
      %1601 = vmatpush1.bf16.msra.mxu0 0
      %1602 = vmatprep.subr.bf16.mxu0 0
      %1603 = vmatpush1.bf16.msra.mxu0 0
      %1604 = vmatprep.subr.bf16.mxu0 0
      %1605 = vmatpush1.bf16.msra.mxu0 0
      %1606 = vmatprep.subr.bf16.mxu0 0
      %1607 = vmatpush1.bf16.msra.mxu0 0
      %1608 = vmatprep.mubr.bf16.mxu0 0
      %1609 = vmatmul.mubr.bf16.gmra.mrb[0].mxu0 %v1525
      %v1610 = vpop.f32.mrb[0].mxu0
      %v1611 = vadd.f32 0.0, %v1610
      %v1612 = vpop.f32.mrb[0].mxu0
      %v1613 = vpop.f32.mrb[0].mxu0
      %v1614 = vadd.f32 0.0, %v1613
      %v1615 = vpop.f32.mrb[0].mxu0
      %1616 = vmatprep.mubr.bf16.mxu0 0
      %1617 = vmatmul.mubr.bf16.gmra.mrb[0].mxu0 %v1528
      %v1618 = vpop.f32.mrb[0].mxu0
      %v1619 = vadd.f32 0.0, %v1618
      %v1620 = vpop.f32.mrb[0].mxu0
      %v1621 = vpop.f32.mrb[0].mxu0
      %v1622 = vadd.f32 0.0, %v1621
      %v1623 = vpop.f32.mrb[0].mxu0
      %1624 = vmatprep.mubr.bf16.mxu0 0
      %1625 = vmatmul.mubr.bf16.gmra.mrb[0].mxu0 %v1531
      %v1626 = vpop.f32.mrb[0].mxu0
      %v1627 = vadd.f32 0.0, %v1626
      %v1628 = vpop.f32.mrb[0].mxu0
      %v1629 = vpop.f32.mrb[0].mxu0
      %v1630 = vadd.f32 0.0, %v1629
      %v1631 = vpop.f32.mrb[0].mxu0
      %1632 = vmatprep.mubr.bf16.mxu0 0
      %1633 = vmatmul.mubr.bf16.gmra.mrb[0].mxu0 %v1534
      %v1634 = vpop.f32.mrb[0].mxu0
      %v1635 = vadd.f32 0.0, %v1634
      %v1636 = vpop.f32.mrb[0].mxu0
      %v1637 = vpop.f32.mrb[0].mxu0
      %v1638 = vadd.f32 0.0, %v1637
      %v1639 = vpop.f32.mrb[0].mxu0
      %1640 = vmatprep.mubr.bf16.mxu0 0
      %1641 = vmatmul.mubr.bf16.gmra.mrb[0].mxu0 %v1537
      %v1642 = vpop.f32.mrb[0].mxu0
      %v1643 = vadd.f32 0.0, %v1642
      %v1644 = vpop.f32.mrb[0].mxu0
      %v1645 = vpop.f32.mrb[0].mxu0
      %v1646 = vadd.f32 0.0, %v1645
      %v1647 = vpop.f32.mrb[0].mxu0
      %1648 = vmatprep.mubr.bf16.mxu0 0
      %1649 = vmatmul.mubr.bf16.gmra.mrb[0].mxu0 %v1540
      %v1650 = vpop.f32.mrb[0].mxu0
      %v1651 = vadd.f32 0.0, %v1650
      %v1652 = vpop.f32.mrb[0].mxu0
      %v1653 = vpop.f32.mrb[0].mxu0
      %v1654 = vadd.f32 0.0, %v1653
      %v1655 = vpop.f32.mrb[0].mxu0
      %1656 = vmatprep.mubr.bf16.mxu0 0
      %1657 = vmatmul.mubr.bf16.gmra.mrb[0].mxu0 %v1543
      %v1658 = vpop.f32.mrb[0].mxu0
      %v1659 = vadd.f32 0.0, %v1658
      %v1660 = vpop.f32.mrb[0].mxu0
      %v1661 = vpop.f32.mrb[0].mxu0
      %v1662 = vadd.f32 0.0, %v1661
      %v1663 = vpop.f32.mrb[0].mxu0
      %1664 = vmatprep.mubr.bf16.mxu0 0
      %1665 = vmatmul.mubr.bf16.gmra.mrb[0].mxu0 %v1546
      %v1666 = vpop.f32.mrb[0].mxu0
      %v1667 = vadd.f32 0.0, %v1666
      %v1668 = vpop.f32.mrb[0].mxu0
      %v1669 = vpop.f32.mrb[0].mxu0
      %v1670 = vadd.f32 0.0, %v1669
      %v1671 = vpop.f32.mrb[0].mxu0
      %1672 = vmatprep.mubr.bf16.mxu0 0
      %1673 = vmatmul.mubr.bf16.gmra.mrb[0].mxu0 %v1549
      %v1674 = vpop.f32.mrb[0].mxu0
      %v1675 = vadd.f32 0.0, %v1674
      %v1676 = vpop.f32.mrb[0].mxu0
      %v1677 = vpop.f32.mrb[0].mxu0
      %v1678 = vadd.f32 0.0, %v1677
      %v1679 = vpop.f32.mrb[0].mxu0
      %1680 = vmatprep.mubr.bf16.mxu0 0
      %1681 = vmatmul.mubr.bf16.gmra.mrb[0].mxu0 %v1552
      %v1682 = vpop.f32.mrb[0].mxu0
      %v1683 = vadd.f32 0.0, %v1682
      %v1684 = vpop.f32.mrb[0].mxu0
      %v1685 = vpop.f32.mrb[0].mxu0
      %v1686 = vadd.f32 0.0, %v1685
      %v1687 = vpop.f32.mrb[0].mxu0
      %1688 = vmatprep.mubr.bf16.mxu0 0
      %1689 = vmatmul.mubr.bf16.gmra.mrb[0].mxu0 %v1555
      %v1690 = vpop.f32.mrb[0].mxu0
      %v1691 = vadd.f32 0.0, %v1690
      %v1692 = vpop.f32.mrb[0].mxu0
      %v1693 = vpop.f32.mrb[0].mxu0
      %v1694 = vadd.f32 0.0, %v1693
      %v1695 = vpop.f32.mrb[0].mxu0
      %1696 = vmatprep.mubr.bf16.mxu0 0
      %1697 = vmatmul.mubr.bf16.gmra.mrb[0].mxu0 %v1558
      %v1698 = vpop.f32.mrb[0].mxu0
      %v1699 = vadd.f32 0.0, %v1698
      %v1700 = vpop.f32.mrb[0].mxu0
      %v1701 = vpop.f32.mrb[0].mxu0
      %v1702 = vadd.f32 0.0, %v1701
      %v1703 = vpop.f32.mrb[0].mxu0
      %1704 = vmatprep.mubr.bf16.mxu0 0
      %1705 = vmatmul.mubr.bf16.gmra.mrb[0].mxu0 %v1561
      %v1706 = vpop.f32.mrb[0].mxu0
      %v1707 = vadd.f32 0.0, %v1706
      %v1708 = vpop.f32.mrb[0].mxu0
      %v1709 = vpop.f32.mrb[0].mxu0
      %v1710 = vadd.f32 0.0, %v1709
      %v1711 = vpop.f32.mrb[0].mxu0
      %1712 = vmatprep.mubr.bf16.mxu0 0
      %1713 = vmatmul.mubr.bf16.gmra.mrb[0].mxu0 %v1564
      %v1714 = vpop.f32.mrb[0].mxu0
      %v1715 = vadd.f32 0.0, %v1714
      %v1716 = vpop.f32.mrb[0].mxu0
      %v1717 = vpop.f32.mrb[0].mxu0
      %v1718 = vadd.f32 0.0, %v1717
      %v1719 = vpop.f32.mrb[0].mxu0
      %1720 = vmatprep.mubr.bf16.mxu0 0
      %1721 = vmatmul.mubr.bf16.gmra.mrb[0].mxu0 %v1567
      %v1722 = vpop.f32.mrb[0].mxu0
      %v1723 = vadd.f32 0.0, %v1722
      %v1724 = vpop.f32.mrb[0].mxu0
      %v1725 = vpop.f32.mrb[0].mxu0
      %v1726 = vadd.f32 0.0, %v1725
      %v1727 = vpop.f32.mrb[0].mxu0
      %1728 = vmatprep.mubr.bf16.mxu0 0
      %1729 = vmatmul.mubr.bf16.gmra.mrb[0].mxu0 %v1570
      %v1730 = vpop.f32.mrb[0].mxu0
      %v1731 = vadd.f32 0.0, %v1730
      %v1732 = vpop.f32.mrb[0].mxu0
      %v1733 = vpop.f32.mrb[0].mxu0
      %v1734 = vadd.f32 0.0, %v1733
      %v1735 = vpop.f32.mrb[0].mxu0
      %1736 = vdwg.mxu0
      %v1769 = vunpack.c.l.b16 %v1037
      %v1770 = vunpack.c.l.b16 %v1038
      %v1771 = vunpack.c.l.b16 %v1039
      %v1772 = vunpack.c.l.b16 %v1040
      %v1773 = vunpack.c.l.b16 %v1041
      %v1774 = vunpack.c.l.b16 %v1042
      %v1775 = vunpack.c.l.b16 %v1043
      %v1776 = vunpack.c.l.b16 %v1044
      %v1777 = vunpack.c.l.b16 %v1045
      %v1778 = vunpack.c.l.b16 %v1046
      %v1779 = vunpack.c.l.b16 %v1047
      %v1780 = vunpack.c.l.b16 %v1048
      %v1781 = vunpack.c.l.b16 %v1049
      %v1782 = vunpack.c.l.b16 %v1050
      %v1783 = vunpack.c.l.b16 %v1051
      %v1784 = vunpack.c.l.b16 %v1052
      %v1785 = vunpack.c.l.b16 %v1053
      %v1786 = vunpack.c.l.b16 %v1054
      %v1787 = vunpack.c.l.b16 %v1055
      %v1788 = vunpack.c.l.b16 %v1056
      %v1789 = vunpack.c.l.b16 %v1057
      %v1790 = vunpack.c.l.b16 %v1058
      %v1791 = vunpack.c.l.b16 %v1059
      %v1792 = vunpack.c.l.b16 %v1060
      %v1793 = vunpack.c.l.b16 %v1061
      %v1794 = vunpack.c.l.b16 %v1062
      %v1795 = vunpack.c.l.b16 %v1063
      %v1796 = vunpack.c.l.b16 %v1064
      %v1797 = vunpack.c.l.b16 %v1065
      %v1798 = vunpack.c.l.b16 %v1066
      %v1799 = vunpack.c.l.b16 %v1067
      %v1800 = vunpack.c.l.b16 %v1068
      %v1801 = vpack.c.b16 %v1770, %v1769
      %v1802 = vpack.c.b16 %v1772, %v1771
      %v1803 = vpack.c.b16 %v1774, %v1773
      %v1804 = vpack.c.b16 %v1776, %v1775
      %v1805 = vpack.c.b16 %v1778, %v1777
      %v1806 = vpack.c.b16 %v1780, %v1779
      %v1807 = vpack.c.b16 %v1782, %v1781
      %v1808 = vpack.c.b16 %v1784, %v1783
      %v1809 = vpack.c.b16 %v1786, %v1785
      %v1810 = vpack.c.b16 %v1788, %v1787
      %v1811 = vpack.c.b16 %v1790, %v1789
      %v1812 = vpack.c.b16 %v1792, %v1791
      %v1813 = vpack.c.b16 %v1794, %v1793
      %v1814 = vpack.c.b16 %v1796, %v1795
      %v1815 = vpack.c.b16 %v1798, %v1797
      %v1816 = vpack.c.b16 %v1800, %v1799
      %v1818 = vsel %vm1523, %v1801, 0
      %v1821 = vsel %vm1523, %v1802, 0
      %v1824 = vsel %vm1523, %v1803, 0
      %v1827 = vsel %vm1523, %v1804, 0
      %v1830 = vsel %vm1523, %v1805, 0
      %v1833 = vsel %vm1523, %v1806, 0
      %v1836 = vsel %vm1523, %v1807, 0
      %v1839 = vsel %vm1523, %v1808, 0
      %v1842 = vsel %vm1523, %v1809, 0
      %v1845 = vsel %vm1523, %v1810, 0
      %v1848 = vsel %vm1523, %v1811, 0
      %v1851 = vsel %vm1523, %v1812, 0
      %v1854 = vsel %vm1523, %v1813, 0
      %v1857 = vsel %vm1523, %v1814, 0
      %v1860 = vsel %vm1523, %v1815, 0
      %v1863 = vsel %vm1523, %v1816, 0
      %v1866 = vsel %vm1572, %v1069, 0
      %1868 = vmatprep.subr.bf16.mxu0 0
      %1869 = vmatpush1.bf16.msra.mxu0 %v1866
      %1870 = vmatprep.subr.bf16.mxu0 0
      %1871 = vmatpush1.bf16.msra.mxu0 0
      %1872 = vmatprep.subr.bf16.mxu0 0
      %1873 = vmatpush1.bf16.msra.mxu0 0
      %1874 = vmatprep.subr.bf16.mxu0 0
      %1875 = vmatpush1.bf16.msra.mxu0 0
      %1876 = vmatprep.subr.bf16.mxu0 0
      %1877 = vmatpush1.bf16.msra.mxu0 0
      %1878 = vmatprep.subr.bf16.mxu0 0
      %1879 = vmatpush1.bf16.msra.mxu0 0
      %1880 = vmatprep.subr.bf16.mxu0 0
      %1881 = vmatpush1.bf16.msra.mxu0 0
      %1882 = vmatprep.subr.bf16.mxu0 0
      %1883 = vmatpush1.bf16.msra.mxu0 0
      %1884 = vmatprep.subr.bf16.mxu0 0
      %1885 = vmatpush1.bf16.msra.mxu0 0
      %1886 = vmatprep.subr.bf16.mxu0 0
      %1887 = vmatpush1.bf16.msra.mxu0 0
      %1888 = vmatprep.subr.bf16.mxu0 0
      %1889 = vmatpush1.bf16.msra.mxu0 0
      %1890 = vmatprep.subr.bf16.mxu0 0
      %1891 = vmatpush1.bf16.msra.mxu0 0
      %1892 = vmatprep.subr.bf16.mxu0 0
      %1893 = vmatpush1.bf16.msra.mxu0 0
      %1894 = vmatprep.subr.bf16.mxu0 0
      %1895 = vmatpush1.bf16.msra.mxu0 0
      %1896 = vmatprep.subr.bf16.mxu0 0
      %1897 = vmatpush1.bf16.msra.mxu0 0
      %1898 = vmatprep.subr.bf16.mxu0 0
      %1899 = vmatpush1.bf16.msra.mxu0 0
      %1900 = vmatprep.mubr.bf16.mxu0 0
      %1901 = vmatmul.mubr.bf16.gmra.mrb[0].mxu0 %v1818
      %v1902 = vpop.f32.mrb[0].mxu0
      %v1903 = vadd.f32 %v1611, %v1902
      %v1904 = vpop.f32.mrb[0].mxu0
      %v1905 = vpop.f32.mrb[0].mxu0
      %v1906 = vadd.f32 %v1614, %v1905
      %v1907 = vpop.f32.mrb[0].mxu0
      %1908 = vmatprep.mubr.bf16.mxu0 0
      %1909 = vmatmul.mubr.bf16.gmra.mrb[0].mxu0 %v1821
      %v1910 = vpop.f32.mrb[0].mxu0
      %v1911 = vadd.f32 %v1619, %v1910
      %v1912 = vpop.f32.mrb[0].mxu0
      %v1913 = vpop.f32.mrb[0].mxu0
      %v1914 = vadd.f32 %v1622, %v1913
      %v1915 = vpop.f32.mrb[0].mxu0
      %1916 = vmatprep.mubr.bf16.mxu0 0
      %1917 = vmatmul.mubr.bf16.gmra.mrb[0].mxu0 %v1824
      %v1918 = vpop.f32.mrb[0].mxu0
      %v1919 = vadd.f32 %v1627, %v1918
      %v1920 = vpop.f32.mrb[0].mxu0
      %v1921 = vpop.f32.mrb[0].mxu0
      %v1922 = vadd.f32 %v1630, %v1921
      %v1923 = vpop.f32.mrb[0].mxu0
      %1924 = vmatprep.mubr.bf16.mxu0 0
      %1925 = vmatmul.mubr.bf16.gmra.mrb[0].mxu0 %v1827
      %v1926 = vpop.f32.mrb[0].mxu0
      %v1927 = vadd.f32 %v1635, %v1926
      %v1928 = vpop.f32.mrb[0].mxu0
      %v1929 = vpop.f32.mrb[0].mxu0
      %v1930 = vadd.f32 %v1638, %v1929
      %v1931 = vpop.f32.mrb[0].mxu0
      %1932 = vmatprep.mubr.bf16.mxu0 0
      %1933 = vmatmul.mubr.bf16.gmra.mrb[0].mxu0 %v1830
      %v1934 = vpop.f32.mrb[0].mxu0
      %v1935 = vadd.f32 %v1643, %v1934
      %v1936 = vpop.f32.mrb[0].mxu0
      %v1937 = vpop.f32.mrb[0].mxu0
      %v1938 = vadd.f32 %v1646, %v1937
      %v1939 = vpop.f32.mrb[0].mxu0
      %1940 = vmatprep.mubr.bf16.mxu0 0
      %1941 = vmatmul.mubr.bf16.gmra.mrb[0].mxu0 %v1833
      %v1942 = vpop.f32.mrb[0].mxu0
      %v1943 = vadd.f32 %v1651, %v1942
      %v1944 = vpop.f32.mrb[0].mxu0
      %v1945 = vpop.f32.mrb[0].mxu0
      %v1946 = vadd.f32 %v1654, %v1945
      %v1947 = vpop.f32.mrb[0].mxu0
      %1948 = vmatprep.mubr.bf16.mxu0 0
      %1949 = vmatmul.mubr.bf16.gmra.mrb[0].mxu0 %v1836
      %v1950 = vpop.f32.mrb[0].mxu0
      %v1951 = vadd.f32 %v1659, %v1950
      %v1952 = vpop.f32.mrb[0].mxu0
      %v1953 = vpop.f32.mrb[0].mxu0
      %v1954 = vadd.f32 %v1662, %v1953
      %v1955 = vpop.f32.mrb[0].mxu0
      %1956 = vmatprep.mubr.bf16.mxu0 0
      %1957 = vmatmul.mubr.bf16.gmra.mrb[0].mxu0 %v1839
      %v1958 = vpop.f32.mrb[0].mxu0
      %v1959 = vadd.f32 %v1667, %v1958
      %v1960 = vpop.f32.mrb[0].mxu0
      %v1961 = vpop.f32.mrb[0].mxu0
      %v1962 = vadd.f32 %v1670, %v1961
      %v1963 = vpop.f32.mrb[0].mxu0
      %1964 = vmatprep.mubr.bf16.mxu0 0
      %1965 = vmatmul.mubr.bf16.gmra.mrb[0].mxu0 %v1842
      %v1966 = vpop.f32.mrb[0].mxu0
      %v1967 = vadd.f32 %v1675, %v1966
      %v1968 = vpop.f32.mrb[0].mxu0
      %v1969 = vpop.f32.mrb[0].mxu0
      %v1970 = vadd.f32 %v1678, %v1969
      %v1971 = vpop.f32.mrb[0].mxu0
      %1972 = vmatprep.mubr.bf16.mxu0 0
      %1973 = vmatmul.mubr.bf16.gmra.mrb[0].mxu0 %v1845
      %v1974 = vpop.f32.mrb[0].mxu0
      %v1975 = vadd.f32 %v1683, %v1974
      %v1976 = vpop.f32.mrb[0].mxu0
      %v1977 = vpop.f32.mrb[0].mxu0
      %v1978 = vadd.f32 %v1686, %v1977
      %v1979 = vpop.f32.mrb[0].mxu0
      %1980 = vmatprep.mubr.bf16.mxu0 0
      %1981 = vmatmul.mubr.bf16.gmra.mrb[0].mxu0 %v1848
      %v1982 = vpop.f32.mrb[0].mxu0
      %v1983 = vadd.f32 %v1691, %v1982
      %v1984 = vpop.f32.mrb[0].mxu0
      %v1985 = vpop.f32.mrb[0].mxu0
      %v1986 = vadd.f32 %v1694, %v1985
      %v1987 = vpop.f32.mrb[0].mxu0
      %1988 = vmatprep.mubr.bf16.mxu0 0
      %1989 = vmatmul.mubr.bf16.gmra.mrb[0].mxu0 %v1851
      %v1990 = vpop.f32.mrb[0].mxu0
      %v1991 = vadd.f32 %v1699, %v1990
      %v1992 = vpop.f32.mrb[0].mxu0
      %v1993 = vpop.f32.mrb[0].mxu0
      %v1994 = vadd.f32 %v1702, %v1993
      %v1995 = vpop.f32.mrb[0].mxu0
      %1996 = vmatprep.mubr.bf16.mxu0 0
      %1997 = vmatmul.mubr.bf16.gmra.mrb[0].mxu0 %v1854
      %v1998 = vpop.f32.mrb[0].mxu0
      %v1999 = vadd.f32 %v1707, %v1998
      %v2000 = vpop.f32.mrb[0].mxu0
      %v2001 = vpop.f32.mrb[0].mxu0
      %v2002 = vadd.f32 %v1710, %v2001
      %v2003 = vpop.f32.mrb[0].mxu0
      %2004 = vmatprep.mubr.bf16.mxu0 0
      %2005 = vmatmul.mubr.bf16.gmra.mrb[0].mxu0 %v1857
      %v2006 = vpop.f32.mrb[0].mxu0
      %v2007 = vadd.f32 %v1715, %v2006
      %v2008 = vpop.f32.mrb[0].mxu0
      %v2009 = vpop.f32.mrb[0].mxu0
      %v2010 = vadd.f32 %v1718, %v2009
      %v2011 = vpop.f32.mrb[0].mxu0
      %2012 = vmatprep.mubr.bf16.mxu0 0
      %2013 = vmatmul.mubr.bf16.gmra.mrb[0].mxu0 %v1860
      %v2014 = vpop.f32.mrb[0].mxu0
      %v2015 = vadd.f32 %v1723, %v2014
      %v2016 = vpop.f32.mrb[0].mxu0
      %v2017 = vpop.f32.mrb[0].mxu0
      %v2018 = vadd.f32 %v1726, %v2017
      %v2019 = vpop.f32.mrb[0].mxu0
      %2020 = vmatprep.mubr.bf16.mxu0 0
      %2021 = vmatmul.mubr.bf16.gmra.mrb[0].mxu0 %v1863
      %v2022 = vpop.f32.mrb[0].mxu0
      %v2023 = vadd.f32 %v1731, %v2022
      %v2024 = vpop.f32.mrb[0].mxu0
      %v2025 = vpop.f32.mrb[0].mxu0
      %v2026 = vadd.f32 %v1734, %v2025
      %v2027 = vpop.f32.mrb[0].mxu0
      %2028 = vdwg.mxu0
      %v2029 = vld [vmem:[#allocation2] sm:$0xe]
      %v2030 = vld [vmem:[#allocation2 + $0xc] sm:$0xe]
      %v2031 = vld [vmem:[#allocation2 + $0x18] sm:$0xe]
      %v2032 = vld [vmem:[#allocation2 + $0x24] sm:$0xe]
      %v2033 = vld [vmem:[#allocation2 + $0x30] sm:$0xe]
      %v2034 = vld [vmem:[#allocation2 + $0x3c] sm:$0xe]
      %v2035 = vld [vmem:[#allocation2 + $0x48] sm:$0xe]
      %v2036 = vld [vmem:[#allocation2 + $0x54] sm:$0xe]
      %v2037 = vld [vmem:[#allocation2 + $0x60] sm:$0xe]
      %v2038 = vld [vmem:[#allocation2 + $0x6c] sm:$0xe]
      %v2039 = vld [vmem:[#allocation2 + $0x78] sm:$0xe]
      %v2040 = vld [vmem:[#allocation2 + $0x84] sm:$0xe]
      %v2041 = vld [vmem:[#allocation2 + $0x90] sm:$0xe]
      %v2042 = vld [vmem:[#allocation2 + $0x9c] sm:$0xe]
      %v2043 = vld [vmem:[#allocation2 + $0xa8] sm:$0xe]
      %v2044 = vld [vmem:[#allocation2 + $0xb4] sm:$0xe]
      %vm2077 = vcmask 1042432
      %vm2078 = vcmask 1046532
      %vm2079 = vmor %vm2077, %vm2078
      %v2080 = vrot.slane %v2029, 5
      %v2081 = vrot.slane %v2080, 4
      %v2082 = vrot.slane %v1038, 5
      %v2083 = vsel %vm2079, %v2081, %v2082
      %v2084 = vrot.slane %v2082, 4
      %v2085 = vrot.slane %v1070, 5
      %v2086 = vsel %vm2079, %v2084, %v2085
      %v2087 = vrot.slane %v2030, 5
      %v2088 = vrot.slane %v2087, 4
      %v2089 = vrot.slane %v1040, 5
      %v2090 = vsel %vm2079, %v2088, %v2089
      %v2091 = vrot.slane %v2089, 4
      %v2092 = vrot.slane %v1071, 5
      %v2093 = vsel %vm2079, %v2091, %v2092
      %v2094 = vrot.slane %v2031, 5
      %v2095 = vrot.slane %v2094, 4
      %v2096 = vrot.slane %v1042, 5
      %v2097 = vsel %vm2079, %v2095, %v2096
      %v2098 = vrot.slane %v2096, 4
      %v2099 = vrot.slane %v1072, 5
      %v2100 = vsel %vm2079, %v2098, %v2099
      %v2101 = vrot.slane %v2032, 5
      %v2102 = vrot.slane %v2101, 4
      %v2103 = vrot.slane %v1044, 5
      %v2104 = vsel %vm2079, %v2102, %v2103
      %v2105 = vrot.slane %v2103, 4
      %v2106 = vrot.slane %v1073, 5
      %v2107 = vsel %vm2079, %v2105, %v2106
      %v2108 = vrot.slane %v2033, 5
      %v2109 = vrot.slane %v2108, 4
      %v2110 = vrot.slane %v1046, 5
      %v2111 = vsel %vm2079, %v2109, %v2110
      %v2112 = vrot.slane %v2110, 4
      %v2113 = vrot.slane %v1074, 5
      %v2114 = vsel %vm2079, %v2112, %v2113
      %v2115 = vrot.slane %v2034, 5
      %v2116 = vrot.slane %v2115, 4
      %v2117 = vrot.slane %v1048, 5
      %v2118 = vsel %vm2079, %v2116, %v2117
      %v2119 = vrot.slane %v2117, 4
      %v2120 = vrot.slane %v1075, 5
      %v2121 = vsel %vm2079, %v2119, %v2120
      %v2122 = vrot.slane %v2035, 5
      %v2123 = vrot.slane %v2122, 4
      %v2124 = vrot.slane %v1050, 5
      %v2125 = vsel %vm2079, %v2123, %v2124
      %v2126 = vrot.slane %v2124, 4
      %v2127 = vrot.slane %v1076, 5
      %v2128 = vsel %vm2079, %v2126, %v2127
      %v2129 = vrot.slane %v2036, 5
      %v2130 = vrot.slane %v2129, 4
      %v2131 = vrot.slane %v1052, 5
      %v2132 = vsel %vm2079, %v2130, %v2131
      %v2133 = vrot.slane %v2131, 4
      %v2134 = vrot.slane %v1077, 5
      %v2135 = vsel %vm2079, %v2133, %v2134
      %v2136 = vrot.slane %v2037, 5
      %v2137 = vrot.slane %v2136, 4
      %v2138 = vrot.slane %v1054, 5
      %v2139 = vsel %vm2079, %v2137, %v2138
      %v2140 = vrot.slane %v2138, 4
      %v2141 = vrot.slane %v1078, 5
      %v2142 = vsel %vm2079, %v2140, %v2141
      %v2143 = vrot.slane %v2038, 5
      %v2144 = vrot.slane %v2143, 4
      %v2145 = vrot.slane %v1056, 5
      %v2146 = vsel %vm2079, %v2144, %v2145
      %v2147 = vrot.slane %v2145, 4
      %v2148 = vrot.slane %v1079, 5
      %v2149 = vsel %vm2079, %v2147, %v2148
      %v2150 = vrot.slane %v2039, 5
      %v2151 = vrot.slane %v2150, 4
      %v2152 = vrot.slane %v1058, 5
      %v2153 = vsel %vm2079, %v2151, %v2152
      %v2154 = vrot.slane %v2152, 4
      %v2155 = vrot.slane %v1080, 5
      %v2156 = vsel %vm2079, %v2154, %v2155
      %v2157 = vrot.slane %v2040, 5
      %v2158 = vrot.slane %v2157, 4
      %v2159 = vrot.slane %v1060, 5
      %v2160 = vsel %vm2079, %v2158, %v2159
      %v2161 = vrot.slane %v2159, 4
      %v2162 = vrot.slane %v1081, 5
      %v2163 = vsel %vm2079, %v2161, %v2162
      %v2164 = vrot.slane %v2041, 5
      %v2165 = vrot.slane %v2164, 4
      %v2166 = vrot.slane %v1062, 5
      %v2167 = vsel %vm2079, %v2165, %v2166
      %v2168 = vrot.slane %v2166, 4
      %v2169 = vrot.slane %v1082, 5
      %v2170 = vsel %vm2079, %v2168, %v2169
      %v2171 = vrot.slane %v2042, 5
      %v2172 = vrot.slane %v2171, 4
      %v2173 = vrot.slane %v1064, 5
      %v2174 = vsel %vm2079, %v2172, %v2173
      %v2175 = vrot.slane %v2173, 4
      %v2176 = vrot.slane %v1083, 5
      %v2177 = vsel %vm2079, %v2175, %v2176
      %v2178 = vrot.slane %v2043, 5
      %v2179 = vrot.slane %v2178, 4
      %v2180 = vrot.slane %v1066, 5
      %v2181 = vsel %vm2079, %v2179, %v2180
      %v2182 = vrot.slane %v2180, 4
      %v2183 = vrot.slane %v1084, 5
      %v2184 = vsel %vm2079, %v2182, %v2183
      %v2185 = vrot.slane %v2044, 5
      %v2186 = vrot.slane %v2185, 4
      %v2187 = vrot.slane %v1068, 5
      %v2188 = vsel %vm2079, %v2186, %v2187
      %v2189 = vrot.slane %v2187, 4
      %v2190 = vrot.slane %v1085, 5
      %v2191 = vsel %vm2079, %v2189, %v2190
      %s2192 = scalar_lea.vmem %s3, 4
      %v2193 = vld [vmem:[%s2192] sm:$0x3]
      %v2194 = vunpack.c.l.b16 %v2083
      %v2195 = vunpack.c.l.b16 %v2086
      %v2196 = vunpack.c.l.b16 %v2090
      %v2197 = vunpack.c.l.b16 %v2093
      %v2198 = vunpack.c.l.b16 %v2097
      %v2199 = vunpack.c.l.b16 %v2100
      %v2200 = vunpack.c.l.b16 %v2104
      %v2201 = vunpack.c.l.b16 %v2107
      %v2202 = vunpack.c.l.b16 %v2111
      %v2203 = vunpack.c.l.b16 %v2114
      %v2204 = vunpack.c.l.b16 %v2118
      %v2205 = vunpack.c.l.b16 %v2121
      %v2206 = vunpack.c.l.b16 %v2125
      %v2207 = vunpack.c.l.b16 %v2128
      %v2208 = vunpack.c.l.b16 %v2132
      %v2209 = vunpack.c.l.b16 %v2135
      %v2210 = vunpack.c.l.b16 %v2139
      %v2211 = vunpack.c.l.b16 %v2142
      %v2212 = vunpack.c.l.b16 %v2146
      %v2213 = vunpack.c.l.b16 %v2149
      %v2214 = vunpack.c.l.b16 %v2153
      %v2215 = vunpack.c.l.b16 %v2156
      %v2216 = vunpack.c.l.b16 %v2160
      %v2217 = vunpack.c.l.b16 %v2163
      %v2218 = vunpack.c.l.b16 %v2167
      %v2219 = vunpack.c.l.b16 %v2170
      %v2220 = vunpack.c.l.b16 %v2174
      %v2221 = vunpack.c.l.b16 %v2177
      %v2222 = vunpack.c.l.b16 %v2181
      %v2223 = vunpack.c.l.b16 %v2184
      %v2224 = vunpack.c.l.b16 %v2188
      %v2225 = vunpack.c.l.b16 %v2191
      %v2226 = vpack.c.b16 %v2195, %v2194
      %v2227 = vpack.c.b16 %v2197, %v2196
      %v2228 = vpack.c.b16 %v2199, %v2198
      %v2229 = vpack.c.b16 %v2201, %v2200
      %v2230 = vpack.c.b16 %v2203, %v2202
      %v2231 = vpack.c.b16 %v2205, %v2204
      %v2232 = vpack.c.b16 %v2207, %v2206
      %v2233 = vpack.c.b16 %v2209, %v2208
      %v2234 = vpack.c.b16 %v2211, %v2210
      %v2235 = vpack.c.b16 %v2213, %v2212
      %v2236 = vpack.c.b16 %v2215, %v2214
      %v2237 = vpack.c.b16 %v2217, %v2216
      %v2238 = vpack.c.b16 %v2219, %v2218
      %v2239 = vpack.c.b16 %v2221, %v2220
      %v2240 = vpack.c.b16 %v2223, %v2222
      %v2241 = vpack.c.b16 %v2225, %v2224
      %v2243 = vsel %vm1523, %v2226, 0
      %v2246 = vsel %vm1523, %v2227, 0
      %v2249 = vsel %vm1523, %v2228, 0
      %v2252 = vsel %vm1523, %v2229, 0
      %v2255 = vsel %vm1523, %v2230, 0
      %v2258 = vsel %vm1523, %v2231, 0
      %v2261 = vsel %vm1523, %v2232, 0
      %v2264 = vsel %vm1523, %v2233, 0
      %v2267 = vsel %vm1523, %v2234, 0
      %v2270 = vsel %vm1523, %v2235, 0
      %v2273 = vsel %vm1523, %v2236, 0
      %v2276 = vsel %vm1523, %v2237, 0
      %v2279 = vsel %vm1523, %v2238, 0
      %v2282 = vsel %vm1523, %v2239, 0
      %v2285 = vsel %vm1523, %v2240, 0
      %v2288 = vsel %vm1523, %v2241, 0
      %v2291 = vsel %vm1572, %v2193, 0
      %2293 = vmatprep.subr.bf16.mxu0 0
      %2294 = vmatpush1.bf16.msra.mxu0 %v2291
      %2295 = vmatprep.subr.bf16.mxu0 0
      %2296 = vmatpush1.bf16.msra.mxu0 0
      %2297 = vmatprep.subr.bf16.mxu0 0
      %2298 = vmatpush1.bf16.msra.mxu0 0
      %2299 = vmatprep.subr.bf16.mxu0 0
      %2300 = vmatpush1.bf16.msra.mxu0 0
      %2301 = vmatprep.subr.bf16.mxu0 0
      %2302 = vmatpush1.bf16.msra.mxu0 0
      %2303 = vmatprep.subr.bf16.mxu0 0
      %2304 = vmatpush1.bf16.msra.mxu0 0
      %2305 = vmatprep.subr.bf16.mxu0 0
      %2306 = vmatpush1.bf16.msra.mxu0 0
      %2307 = vmatprep.subr.bf16.mxu0 0
      %2308 = vmatpush1.bf16.msra.mxu0 0
      %2309 = vmatprep.subr.bf16.mxu0 0
      %2310 = vmatpush1.bf16.msra.mxu0 0
      %2311 = vmatprep.subr.bf16.mxu0 0
      %2312 = vmatpush1.bf16.msra.mxu0 0
      %2313 = vmatprep.subr.bf16.mxu0 0
      %2314 = vmatpush1.bf16.msra.mxu0 0
      %2315 = vmatprep.subr.bf16.mxu0 0
      %2316 = vmatpush1.bf16.msra.mxu0 0
      %2317 = vmatprep.subr.bf16.mxu0 0
      %2318 = vmatpush1.bf16.msra.mxu0 0
      %2319 = vmatprep.subr.bf16.mxu0 0
      %2320 = vmatpush1.bf16.msra.mxu0 0
      %2321 = vmatprep.subr.bf16.mxu0 0
      %2322 = vmatpush1.bf16.msra.mxu0 0
      %2323 = vmatprep.subr.bf16.mxu0 0
      %2324 = vmatpush1.bf16.msra.mxu0 0
      %2325 = vmatprep.mubr.bf16.mxu0 0
      %2326 = vmatmul.mubr.bf16.gmra.mrb[0].mxu0 %v2243
      %v2327 = vpop.f32.mrb[0].mxu0
      %v2328 = vadd.f32 0.0, %v2327
      %v2329 = vpop.f32.mrb[0].mxu0
      %v2330 = vpop.f32.mrb[0].mxu0
      %v2331 = vadd.f32 0.0, %v2330
      %v2332 = vpop.f32.mrb[0].mxu0
      %2333 = vmatprep.mubr.bf16.mxu0 0
      %2334 = vmatmul.mubr.bf16.gmra.mrb[0].mxu0 %v2246
      %v2335 = vpop.f32.mrb[0].mxu0
      %v2336 = vadd.f32 0.0, %v2335
      %v2337 = vpop.f32.mrb[0].mxu0
      %v2338 = vpop.f32.mrb[0].mxu0
      %v2339 = vadd.f32 0.0, %v2338
      %v2340 = vpop.f32.mrb[0].mxu0
      %2341 = vmatprep.mubr.bf16.mxu0 0
      %2342 = vmatmul.mubr.bf16.gmra.mrb[0].mxu0 %v2249
      %v2343 = vpop.f32.mrb[0].mxu0
      %v2344 = vadd.f32 0.0, %v2343
      %v2345 = vpop.f32.mrb[0].mxu0
      %v2346 = vpop.f32.mrb[0].mxu0
      %v2347 = vadd.f32 0.0, %v2346
      %v2348 = vpop.f32.mrb[0].mxu0
      %2349 = vmatprep.mubr.bf16.mxu0 0
      %2350 = vmatmul.mubr.bf16.gmra.mrb[0].mxu0 %v2252
      %v2351 = vpop.f32.mrb[0].mxu0
      %v2352 = vadd.f32 0.0, %v2351
      %v2353 = vpop.f32.mrb[0].mxu0
      %v2354 = vpop.f32.mrb[0].mxu0
      %v2355 = vadd.f32 0.0, %v2354
      %v2356 = vpop.f32.mrb[0].mxu0
      %2357 = vmatprep.mubr.bf16.mxu0 0
      %2358 = vmatmul.mubr.bf16.gmra.mrb[0].mxu0 %v2255
      %v2359 = vpop.f32.mrb[0].mxu0
      %v2360 = vadd.f32 0.0, %v2359
      %v2361 = vpop.f32.mrb[0].mxu0
      %v2362 = vpop.f32.mrb[0].mxu0
      %v2363 = vadd.f32 0.0, %v2362
      %v2364 = vpop.f32.mrb[0].mxu0
      %2365 = vmatprep.mubr.bf16.mxu0 0
      %2366 = vmatmul.mubr.bf16.gmra.mrb[0].mxu0 %v2258
      %v2367 = vpop.f32.mrb[0].mxu0
      %v2368 = vadd.f32 0.0, %v2367
      %v2369 = vpop.f32.mrb[0].mxu0
      %v2370 = vpop.f32.mrb[0].mxu0
      %v2371 = vadd.f32 0.0, %v2370
      %v2372 = vpop.f32.mrb[0].mxu0
      %2373 = vmatprep.mubr.bf16.mxu0 0
      %2374 = vmatmul.mubr.bf16.gmra.mrb[0].mxu0 %v2261
      %v2375 = vpop.f32.mrb[0].mxu0
      %v2376 = vadd.f32 0.0, %v2375
      %v2377 = vpop.f32.mrb[0].mxu0
      %v2378 = vpop.f32.mrb[0].mxu0
      %v2379 = vadd.f32 0.0, %v2378
      %v2380 = vpop.f32.mrb[0].mxu0
      %2381 = vmatprep.mubr.bf16.mxu0 0
      %2382 = vmatmul.mubr.bf16.gmra.mrb[0].mxu0 %v2264
      %v2383 = vpop.f32.mrb[0].mxu0
      %v2384 = vadd.f32 0.0, %v2383
      %v2385 = vpop.f32.mrb[0].mxu0
      %v2386 = vpop.f32.mrb[0].mxu0
      %v2387 = vadd.f32 0.0, %v2386
      %v2388 = vpop.f32.mrb[0].mxu0
      %2389 = vmatprep.mubr.bf16.mxu0 0
      %2390 = vmatmul.mubr.bf16.gmra.mrb[0].mxu0 %v2267
      %v2391 = vpop.f32.mrb[0].mxu0
      %v2392 = vadd.f32 0.0, %v2391
      %v2393 = vpop.f32.mrb[0].mxu0
      %v2394 = vpop.f32.mrb[0].mxu0
      %v2395 = vadd.f32 0.0, %v2394
      %v2396 = vpop.f32.mrb[0].mxu0
      %2397 = vmatprep.mubr.bf16.mxu0 0
      %2398 = vmatmul.mubr.bf16.gmra.mrb[0].mxu0 %v2270
      %v2399 = vpop.f32.mrb[0].mxu0
      %v2400 = vadd.f32 0.0, %v2399
      %v2401 = vpop.f32.mrb[0].mxu0
      %v2402 = vpop.f32.mrb[0].mxu0
      %v2403 = vadd.f32 0.0, %v2402
      %v2404 = vpop.f32.mrb[0].mxu0
      %2405 = vmatprep.mubr.bf16.mxu0 0
      %2406 = vmatmul.mubr.bf16.gmra.mrb[0].mxu0 %v2273
      %v2407 = vpop.f32.mrb[0].mxu0
      %v2408 = vadd.f32 0.0, %v2407
      %v2409 = vpop.f32.mrb[0].mxu0
      %v2410 = vpop.f32.mrb[0].mxu0
      %v2411 = vadd.f32 0.0, %v2410
      %v2412 = vpop.f32.mrb[0].mxu0
      %2413 = vmatprep.mubr.bf16.mxu0 0
      %2414 = vmatmul.mubr.bf16.gmra.mrb[0].mxu0 %v2276
      %v2415 = vpop.f32.mrb[0].mxu0
      %v2416 = vadd.f32 0.0, %v2415
      %v2417 = vpop.f32.mrb[0].mxu0
      %v2418 = vpop.f32.mrb[0].mxu0
      %v2419 = vadd.f32 0.0, %v2418
      %v2420 = vpop.f32.mrb[0].mxu0
      %2421 = vmatprep.mubr.bf16.mxu0 0
      %2422 = vmatmul.mubr.bf16.gmra.mrb[0].mxu0 %v2279
      %v2423 = vpop.f32.mrb[0].mxu0
      %v2424 = vadd.f32 0.0, %v2423
      %v2425 = vpop.f32.mrb[0].mxu0
      %v2426 = vpop.f32.mrb[0].mxu0
      %v2427 = vadd.f32 0.0, %v2426
      %v2428 = vpop.f32.mrb[0].mxu0
      %2429 = vmatprep.mubr.bf16.mxu0 0
      %2430 = vmatmul.mubr.bf16.gmra.mrb[0].mxu0 %v2282
      %v2431 = vpop.f32.mrb[0].mxu0
      %v2432 = vadd.f32 0.0, %v2431
      %v2433 = vpop.f32.mrb[0].mxu0
      %v2434 = vpop.f32.mrb[0].mxu0
      %v2435 = vadd.f32 0.0, %v2434
      %v2436 = vpop.f32.mrb[0].mxu0
      %2437 = vmatprep.mubr.bf16.mxu0 0
      %2438 = vmatmul.mubr.bf16.gmra.mrb[0].mxu0 %v2285
      %v2439 = vpop.f32.mrb[0].mxu0
      %v2440 = vadd.f32 0.0, %v2439
      %v2441 = vpop.f32.mrb[0].mxu0
      %v2442 = vpop.f32.mrb[0].mxu0
      %v2443 = vadd.f32 0.0, %v2442
      %v2444 = vpop.f32.mrb[0].mxu0
      %2445 = vmatprep.mubr.bf16.mxu0 0
      %2446 = vmatmul.mubr.bf16.gmra.mrb[0].mxu0 %v2288
      %v2447 = vpop.f32.mrb[0].mxu0
      %v2448 = vadd.f32 0.0, %v2447
      %v2449 = vpop.f32.mrb[0].mxu0
      %v2450 = vpop.f32.mrb[0].mxu0
      %v2451 = vadd.f32 0.0, %v2450
      %v2452 = vpop.f32.mrb[0].mxu0
      %2453 = vdwg.mxu0
      %v2454 = vadd.f32 %v1903, %v2328
      %v2455 = vadd.f32 %v1906, %v2331
      %v2456 = vadd.f32 %v1911, %v2336
      %v2457 = vadd.f32 %v1914, %v2339
      %v2458 = vadd.f32 %v1919, %v2344
      %v2459 = vadd.f32 %v1922, %v2347
      %v2460 = vadd.f32 %v1927, %v2352
      %v2461 = vadd.f32 %v1930, %v2355
      %v2462 = vadd.f32 %v1935, %v2360
      %v2463 = vadd.f32 %v1938, %v2363
      %v2464 = vadd.f32 %v1943, %v2368
      %v2465 = vadd.f32 %v1946, %v2371
      %v2466 = vadd.f32 %v1951, %v2376
      %v2467 = vadd.f32 %v1954, %v2379
      %v2468 = vadd.f32 %v1959, %v2384
      %v2469 = vadd.f32 %v1962, %v2387
      %v2470 = vadd.f32 %v1967, %v2392
      %v2471 = vadd.f32 %v1970, %v2395
      %v2472 = vadd.f32 %v1975, %v2400
      %v2473 = vadd.f32 %v1978, %v2403
      %v2474 = vadd.f32 %v1983, %v2408
      %v2475 = vadd.f32 %v1986, %v2411
      %v2476 = vadd.f32 %v1991, %v2416
      %v2477 = vadd.f32 %v1994, %v2419
      %v2478 = vadd.f32 %v1999, %v2424
      %v2479 = vadd.f32 %v2002, %v2427
      %v2480 = vadd.f32 %v2007, %v2432
      %v2481 = vadd.f32 %v2010, %v2435
      %v2482 = vadd.f32 %v2015, %v2440
      %v2483 = vadd.f32 %v2018, %v2443
      %v2484 = vadd.f32 %v2023, %v2448
      %v2485 = vadd.f32 %v2026, %v2451
      %v2486 = vld [vmem:[%s851] sm:$0xf]
      %v2487 = vld [vmem:[%s851 + $0x4] sm:$0xf]
      %v2488 = vld [vmem:[%s851 + $0xc] sm:$0xf]
      %v2489 = vld [vmem:[%s851 + $0x10] sm:$0xf]
      %v2490 = vld [vmem:[%s851 + $0x18] sm:$0xf]
      %v2491 = vld [vmem:[%s851 + $0x1c] sm:$0xf]
      %v2492 = vld [vmem:[%s851 + $0x24] sm:$0xf]
      %v2493 = vld [vmem:[%s851 + $0x28] sm:$0xf]
      %v2494 = vld [vmem:[%s851 + $0x30] sm:$0xf]
      %v2495 = vld [vmem:[%s851 + $0x34] sm:$0xf]
      %v2496 = vld [vmem:[%s851 + $0x3c] sm:$0xf]
      %v2497 = vld [vmem:[%s851 + $0x40] sm:$0xf]
      %v2498 = vld [vmem:[%s851 + $0x48] sm:$0xf]
      %v2499 = vld [vmem:[%s851 + $0x4c] sm:$0xf]
      %v2500 = vld [vmem:[%s851 + $0x54] sm:$0xf]
      %v2501 = vld [vmem:[%s851 + $0x58] sm:$0xf]
      %v2502 = vld [vmem:[%s851 + $0x60] sm:$0xf]
      %v2503 = vld [vmem:[%s851 + $0x64] sm:$0xf]
      %v2504 = vld [vmem:[%s851 + $0x6c] sm:$0xf]
      %v2505 = vld [vmem:[%s851 + $0x70] sm:$0xf]
      %v2506 = vld [vmem:[%s851 + $0x78] sm:$0xf]
      %v2507 = vld [vmem:[%s851 + $0x7c] sm:$0xf]
      %v2508 = vld [vmem:[%s851 + $0x84] sm:$0xf]
      %v2509 = vld [vmem:[%s851 + $0x88] sm:$0xf]
      %v2510 = vld [vmem:[%s851 + $0x90] sm:$0xf]
      %v2511 = vld [vmem:[%s851 + $0x94] sm:$0xf]
      %v2512 = vld [vmem:[%s851 + $0x9c] sm:$0xf]
      %v2513 = vld [vmem:[%s851 + $0xa0] sm:$0xf]
      %v2514 = vld [vmem:[%s851 + $0xa8] sm:$0xf]
      %v2515 = vld [vmem:[%s851 + $0xac] sm:$0xf]
      %v2516 = vld [vmem:[%s851 + $0xb4] sm:$0xf]
      %v2517 = vld [vmem:[%s851 + $0xb8] sm:$0xf]
      %s2518 = scalar_lea.vmem %s3, 6
      %v2519 = vld [vmem:[%s2518] sm:$0x3]
      %v2552 = vunpack.c.l.b16 %v2486
      %v2553 = vunpack.c.l.b16 %v2487
      %v2554 = vunpack.c.l.b16 %v2488
      %v2555 = vunpack.c.l.b16 %v2489
      %v2556 = vunpack.c.l.b16 %v2490
      %v2557 = vunpack.c.l.b16 %v2491
      %v2558 = vunpack.c.l.b16 %v2492
      %v2559 = vunpack.c.l.b16 %v2493
      %v2560 = vunpack.c.l.b16 %v2494
      %v2561 = vunpack.c.l.b16 %v2495
      %v2562 = vunpack.c.l.b16 %v2496
      %v2563 = vunpack.c.l.b16 %v2497
      %v2564 = vunpack.c.l.b16 %v2498
      %v2565 = vunpack.c.l.b16 %v2499
      %v2566 = vunpack.c.l.b16 %v2500
      %v2567 = vunpack.c.l.b16 %v2501
      %v2568 = vunpack.c.l.b16 %v2502
      %v2569 = vunpack.c.l.b16 %v2503
      %v2570 = vunpack.c.l.b16 %v2504
      %v2571 = vunpack.c.l.b16 %v2505
      %v2572 = vunpack.c.l.b16 %v2506
      %v2573 = vunpack.c.l.b16 %v2507
      %v2574 = vunpack.c.l.b16 %v2508
      %v2575 = vunpack.c.l.b16 %v2509
      %v2576 = vunpack.c.l.b16 %v2510
      %v2577 = vunpack.c.l.b16 %v2511
      %v2578 = vunpack.c.l.b16 %v2512
      %v2579 = vunpack.c.l.b16 %v2513
      %v2580 = vunpack.c.l.b16 %v2514
      %v2581 = vunpack.c.l.b16 %v2515
      %v2582 = vunpack.c.l.b16 %v2516
      %v2583 = vunpack.c.l.b16 %v2517
      %v2584 = vpack.c.b16 %v2553, %v2552
      %v2585 = vpack.c.b16 %v2555, %v2554
      %v2586 = vpack.c.b16 %v2557, %v2556
      %v2587 = vpack.c.b16 %v2559, %v2558
      %v2588 = vpack.c.b16 %v2561, %v2560
      %v2589 = vpack.c.b16 %v2563, %v2562
      %v2590 = vpack.c.b16 %v2565, %v2564
      %v2591 = vpack.c.b16 %v2567, %v2566
      %v2592 = vpack.c.b16 %v2569, %v2568
      %v2593 = vpack.c.b16 %v2571, %v2570
      %v2594 = vpack.c.b16 %v2573, %v2572
      %v2595 = vpack.c.b16 %v2575, %v2574
      %v2596 = vpack.c.b16 %v2577, %v2576
      %v2597 = vpack.c.b16 %v2579, %v2578
      %v2598 = vpack.c.b16 %v2581, %v2580
      %v2599 = vpack.c.b16 %v2583, %v2582
      %v2601 = vsel %vm1523, %v2584, 0
      %v2604 = vsel %vm1523, %v2585, 0
      %v2607 = vsel %vm1523, %v2586, 0
      %v2610 = vsel %vm1523, %v2587, 0
      %v2613 = vsel %vm1523, %v2588, 0
      %v2616 = vsel %vm1523, %v2589, 0
      %v2619 = vsel %vm1523, %v2590, 0
      %v2622 = vsel %vm1523, %v2591, 0
      %v2625 = vsel %vm1523, %v2592, 0
      %v2628 = vsel %vm1523, %v2593, 0
      %v2631 = vsel %vm1523, %v2594, 0
      %v2634 = vsel %vm1523, %v2595, 0
      %v2637 = vsel %vm1523, %v2596, 0
      %v2640 = vsel %vm1523, %v2597, 0
      %v2643 = vsel %vm1523, %v2598, 0
      %v2646 = vsel %vm1523, %v2599, 0
      %v2649 = vsel %vm1572, %v2519, 0
      %2651 = vmatprep.subr.bf16.mxu0 0
      %2652 = vmatpush1.bf16.msra.mxu0 %v2649
      %2653 = vmatprep.subr.bf16.mxu0 0
      %2654 = vmatpush1.bf16.msra.mxu0 0
      %2655 = vmatprep.subr.bf16.mxu0 0
      %2656 = vmatpush1.bf16.msra.mxu0 0
      %2657 = vmatprep.subr.bf16.mxu0 0
      %2658 = vmatpush1.bf16.msra.mxu0 0
      %2659 = vmatprep.subr.bf16.mxu0 0
      %2660 = vmatpush1.bf16.msra.mxu0 0
      %2661 = vmatprep.subr.bf16.mxu0 0
      %2662 = vmatpush1.bf16.msra.mxu0 0
      %2663 = vmatprep.subr.bf16.mxu0 0
      %2664 = vmatpush1.bf16.msra.mxu0 0
      %2665 = vmatprep.subr.bf16.mxu0 0
      %2666 = vmatpush1.bf16.msra.mxu0 0
      %2667 = vmatprep.subr.bf16.mxu0 0
      %2668 = vmatpush1.bf16.msra.mxu0 0
      %2669 = vmatprep.subr.bf16.mxu0 0
      %2670 = vmatpush1.bf16.msra.mxu0 0
      %2671 = vmatprep.subr.bf16.mxu0 0
      %2672 = vmatpush1.bf16.msra.mxu0 0
      %2673 = vmatprep.subr.bf16.mxu0 0
      %2674 = vmatpush1.bf16.msra.mxu0 0
      %2675 = vmatprep.subr.bf16.mxu0 0
      %2676 = vmatpush1.bf16.msra.mxu0 0
      %2677 = vmatprep.subr.bf16.mxu0 0
      %2678 = vmatpush1.bf16.msra.mxu0 0
      %2679 = vmatprep.subr.bf16.mxu0 0
      %2680 = vmatpush1.bf16.msra.mxu0 0
      %2681 = vmatprep.subr.bf16.mxu0 0
      %2682 = vmatpush1.bf16.msra.mxu0 0
      %2683 = vmatprep.mubr.bf16.mxu0 0
      %2684 = vmatmul.mubr.bf16.gmra.mrb[0].mxu0 %v2601
      %v2685 = vpop.f32.mrb[0].mxu0
      %v2686 = vadd.f32 0.0, %v2685
      %v2687 = vpop.f32.mrb[0].mxu0
      %v2688 = vpop.f32.mrb[0].mxu0
      %v2689 = vadd.f32 0.0, %v2688
      %v2690 = vpop.f32.mrb[0].mxu0
      %2691 = vmatprep.mubr.bf16.mxu0 0
      %2692 = vmatmul.mubr.bf16.gmra.mrb[0].mxu0 %v2604
      %v2693 = vpop.f32.mrb[0].mxu0
      %v2694 = vadd.f32 0.0, %v2693
      %v2695 = vpop.f32.mrb[0].mxu0
      %v2696 = vpop.f32.mrb[0].mxu0
      %v2697 = vadd.f32 0.0, %v2696
      %v2698 = vpop.f32.mrb[0].mxu0
      %2699 = vmatprep.mubr.bf16.mxu0 0
      %2700 = vmatmul.mubr.bf16.gmra.mrb[0].mxu0 %v2607
      %v2701 = vpop.f32.mrb[0].mxu0
      %v2702 = vadd.f32 0.0, %v2701
      %v2703 = vpop.f32.mrb[0].mxu0
      %v2704 = vpop.f32.mrb[0].mxu0
      %v2705 = vadd.f32 0.0, %v2704
      %v2706 = vpop.f32.mrb[0].mxu0
      %2707 = vmatprep.mubr.bf16.mxu0 0
      %2708 = vmatmul.mubr.bf16.gmra.mrb[0].mxu0 %v2610
      %v2709 = vpop.f32.mrb[0].mxu0
      %v2710 = vadd.f32 0.0, %v2709
      %v2711 = vpop.f32.mrb[0].mxu0
      %v2712 = vpop.f32.mrb[0].mxu0
      %v2713 = vadd.f32 0.0, %v2712
      %v2714 = vpop.f32.mrb[0].mxu0
      %2715 = vmatprep.mubr.bf16.mxu0 0
      %2716 = vmatmul.mubr.bf16.gmra.mrb[0].mxu0 %v2613
      %v2717 = vpop.f32.mrb[0].mxu0
      %v2718 = vadd.f32 0.0, %v2717
      %v2719 = vpop.f32.mrb[0].mxu0
      %v2720 = vpop.f32.mrb[0].mxu0
      %v2721 = vadd.f32 0.0, %v2720
      %v2722 = vpop.f32.mrb[0].mxu0
      %2723 = vmatprep.mubr.bf16.mxu0 0
      %2724 = vmatmul.mubr.bf16.gmra.mrb[0].mxu0 %v2616
      %v2725 = vpop.f32.mrb[0].mxu0
      %v2726 = vadd.f32 0.0, %v2725
      %v2727 = vpop.f32.mrb[0].mxu0
      %v2728 = vpop.f32.mrb[0].mxu0
      %v2729 = vadd.f32 0.0, %v2728
      %v2730 = vpop.f32.mrb[0].mxu0
      %2731 = vmatprep.mubr.bf16.mxu0 0
      %2732 = vmatmul.mubr.bf16.gmra.mrb[0].mxu0 %v2619
      %v2733 = vpop.f32.mrb[0].mxu0
      %v2734 = vadd.f32 0.0, %v2733
      %v2735 = vpop.f32.mrb[0].mxu0
      %v2736 = vpop.f32.mrb[0].mxu0
      %v2737 = vadd.f32 0.0, %v2736
      %v2738 = vpop.f32.mrb[0].mxu0
      %2739 = vmatprep.mubr.bf16.mxu0 0
      %2740 = vmatmul.mubr.bf16.gmra.mrb[0].mxu0 %v2622
      %v2741 = vpop.f32.mrb[0].mxu0
      %v2742 = vadd.f32 0.0, %v2741
      %v2743 = vpop.f32.mrb[0].mxu0
      %v2744 = vpop.f32.mrb[0].mxu0
      %v2745 = vadd.f32 0.0, %v2744
      %v2746 = vpop.f32.mrb[0].mxu0
      %2747 = vmatprep.mubr.bf16.mxu0 0
      %2748 = vmatmul.mubr.bf16.gmra.mrb[0].mxu0 %v2625
      %v2749 = vpop.f32.mrb[0].mxu0
      %v2750 = vadd.f32 0.0, %v2749
      %v2751 = vpop.f32.mrb[0].mxu0
      %v2752 = vpop.f32.mrb[0].mxu0
      %v2753 = vadd.f32 0.0, %v2752
      %v2754 = vpop.f32.mrb[0].mxu0
      %2755 = vmatprep.mubr.bf16.mxu0 0
      %2756 = vmatmul.mubr.bf16.gmra.mrb[0].mxu0 %v2628
      %v2757 = vpop.f32.mrb[0].mxu0
      %v2758 = vadd.f32 0.0, %v2757
      %v2759 = vpop.f32.mrb[0].mxu0
      %v2760 = vpop.f32.mrb[0].mxu0
      %v2761 = vadd.f32 0.0, %v2760
      %v2762 = vpop.f32.mrb[0].mxu0
      %2763 = vmatprep.mubr.bf16.mxu0 0
      %2764 = vmatmul.mubr.bf16.gmra.mrb[0].mxu0 %v2631
      %v2765 = vpop.f32.mrb[0].mxu0
      %v2766 = vadd.f32 0.0, %v2765
      %v2767 = vpop.f32.mrb[0].mxu0
      %v2768 = vpop.f32.mrb[0].mxu0
      %v2769 = vadd.f32 0.0, %v2768
      %v2770 = vpop.f32.mrb[0].mxu0
      %2771 = vmatprep.mubr.bf16.mxu0 0
      %2772 = vmatmul.mubr.bf16.gmra.mrb[0].mxu0 %v2634
      %v2773 = vpop.f32.mrb[0].mxu0
      %v2774 = vadd.f32 0.0, %v2773
      %v2775 = vpop.f32.mrb[0].mxu0
      %v2776 = vpop.f32.mrb[0].mxu0
      %v2777 = vadd.f32 0.0, %v2776
      %v2778 = vpop.f32.mrb[0].mxu0
      %2779 = vmatprep.mubr.bf16.mxu0 0
      %2780 = vmatmul.mubr.bf16.gmra.mrb[0].mxu0 %v2637
      %v2781 = vpop.f32.mrb[0].mxu0
      %v2782 = vadd.f32 0.0, %v2781
      %v2783 = vpop.f32.mrb[0].mxu0
      %v2784 = vpop.f32.mrb[0].mxu0
      %v2785 = vadd.f32 0.0, %v2784
      %v2786 = vpop.f32.mrb[0].mxu0
      %2787 = vmatprep.mubr.bf16.mxu0 0
      %2788 = vmatmul.mubr.bf16.gmra.mrb[0].mxu0 %v2640
      %v2789 = vpop.f32.mrb[0].mxu0
      %v2790 = vadd.f32 0.0, %v2789
      %v2791 = vpop.f32.mrb[0].mxu0
      %v2792 = vpop.f32.mrb[0].mxu0
      %v2793 = vadd.f32 0.0, %v2792
      %v2794 = vpop.f32.mrb[0].mxu0
      %2795 = vmatprep.mubr.bf16.mxu0 0
      %2796 = vmatmul.mubr.bf16.gmra.mrb[0].mxu0 %v2643
      %v2797 = vpop.f32.mrb[0].mxu0
      %v2798 = vadd.f32 0.0, %v2797
      %v2799 = vpop.f32.mrb[0].mxu0
      %v2800 = vpop.f32.mrb[0].mxu0
      %v2801 = vadd.f32 0.0, %v2800
      %v2802 = vpop.f32.mrb[0].mxu0
      %2803 = vmatprep.mubr.bf16.mxu0 0
      %2804 = vmatmul.mubr.bf16.gmra.mrb[0].mxu0 %v2646
      %v2805 = vpop.f32.mrb[0].mxu0
      %v2806 = vadd.f32 0.0, %v2805
      %v2807 = vpop.f32.mrb[0].mxu0
      %v2808 = vpop.f32.mrb[0].mxu0
      %v2809 = vadd.f32 0.0, %v2808
      %v2810 = vpop.f32.mrb[0].mxu0
      %2811 = vdwg.mxu0
      %v2812 = vadd.f32 %v2454, %v2686
      %v2813 = vadd.f32 %v2455, %v2689
      %v2814 = vadd.f32 %v2456, %v2694
      %v2815 = vadd.f32 %v2457, %v2697
      %v2816 = vadd.f32 %v2458, %v2702
      %v2817 = vadd.f32 %v2459, %v2705
      %v2818 = vadd.f32 %v2460, %v2710
      %v2819 = vadd.f32 %v2461, %v2713
      %v2820 = vadd.f32 %v2462, %v2718
      %v2821 = vadd.f32 %v2463, %v2721
      %v2822 = vadd.f32 %v2464, %v2726
      %v2823 = vadd.f32 %v2465, %v2729
      %v2824 = vadd.f32 %v2466, %v2734
      %v2825 = vadd.f32 %v2467, %v2737
      %v2826 = vadd.f32 %v2468, %v2742
      %v2827 = vadd.f32 %v2469, %v2745
      %v2828 = vadd.f32 %v2470, %v2750
      %v2829 = vadd.f32 %v2471, %v2753
      %v2830 = vadd.f32 %v2472, %v2758
      %v2831 = vadd.f32 %v2473, %v2761
      %v2832 = vadd.f32 %v2474, %v2766
      %v2833 = vadd.f32 %v2475, %v2769
      %v2834 = vadd.f32 %v2476, %v2774
      %v2835 = vadd.f32 %v2477, %v2777
      %v2836 = vadd.f32 %v2478, %v2782
      %v2837 = vadd.f32 %v2479, %v2785
      %v2838 = vadd.f32 %v2480, %v2790
      %v2839 = vadd.f32 %v2481, %v2793
      %v2840 = vadd.f32 %v2482, %v2798
      %v2841 = vadd.f32 %v2483, %v2801
      %v2842 = vadd.f32 %v2484, %v2806
      %v2843 = vadd.f32 %v2485, %v2809
      %v2844 = vld [vmem:[%s851] sm:$0xf]
      %v2845 = vld [vmem:[%s851 + $0x4] sm:$0xf]
      %v2846 = vld [vmem:[%s851 + $0x8] sm:$0x1]
      %v2847 = vld [vmem:[%s851 + $0xc] sm:$0xf]
      %v2848 = vld [vmem:[%s851 + $0x10] sm:$0xf]
      %v2849 = vld [vmem:[%s851 + $0x14] sm:$0x1]
      %v2850 = vld [vmem:[%s851 + $0x18] sm:$0xf]
      %v2851 = vld [vmem:[%s851 + $0x1c] sm:$0xf]
      %v2852 = vld [vmem:[%s851 + $0x20] sm:$0x1]
      %v2853 = vld [vmem:[%s851 + $0x24] sm:$0xf]
      %v2854 = vld [vmem:[%s851 + $0x28] sm:$0xf]
      %v2855 = vld [vmem:[%s851 + $0x2c] sm:$0x1]
      %v2856 = vld [vmem:[%s851 + $0x30] sm:$0xf]
      %v2857 = vld [vmem:[%s851 + $0x34] sm:$0xf]
      %v2858 = vld [vmem:[%s851 + $0x38] sm:$0x1]
      %v2859 = vld [vmem:[%s851 + $0x3c] sm:$0xf]
      %v2860 = vld [vmem:[%s851 + $0x40] sm:$0xf]
      %v2861 = vld [vmem:[%s851 + $0x44] sm:$0x1]
      %v2862 = vld [vmem:[%s851 + $0x48] sm:$0xf]
      %v2863 = vld [vmem:[%s851 + $0x4c] sm:$0xf]
      %v2864 = vld [vmem:[%s851 + $0x50] sm:$0x1]
      %v2865 = vld [vmem:[%s851 + $0x54] sm:$0xf]
      %v2866 = vld [vmem:[%s851 + $0x58] sm:$0xf]
      %v2867 = vld [vmem:[%s851 + $0x5c] sm:$0x1]
      %v2868 = vld [vmem:[%s851 + $0x60] sm:$0xf]
      %v2869 = vld [vmem:[%s851 + $0x64] sm:$0xf]
      %v2870 = vld [vmem:[%s851 + $0x68] sm:$0x1]
      %v2871 = vld [vmem:[%s851 + $0x6c] sm:$0xf]
      %v2872 = vld [vmem:[%s851 + $0x70] sm:$0xf]
      %v2873 = vld [vmem:[%s851 + $0x74] sm:$0x1]
      %v2874 = vld [vmem:[%s851 + $0x78] sm:$0xf]
      %v2875 = vld [vmem:[%s851 + $0x7c] sm:$0xf]
      %v2876 = vld [vmem:[%s851 + $0x80] sm:$0x1]
      %v2877 = vld [vmem:[%s851 + $0x84] sm:$0xf]
      %v2878 = vld [vmem:[%s851 + $0x88] sm:$0xf]
      %v2879 = vld [vmem:[%s851 + $0x8c] sm:$0x1]
      %v2880 = vld [vmem:[%s851 + $0x90] sm:$0xf]
      %v2881 = vld [vmem:[%s851 + $0x94] sm:$0xf]
      %v2882 = vld [vmem:[%s851 + $0x98] sm:$0x1]
      %v2883 = vld [vmem:[%s851 + $0x9c] sm:$0xf]
      %v2884 = vld [vmem:[%s851 + $0xa0] sm:$0xf]
      %v2885 = vld [vmem:[%s851 + $0xa4] sm:$0x1]
      %v2886 = vld [vmem:[%s851 + $0xa8] sm:$0xf]
      %v2887 = vld [vmem:[%s851 + $0xac] sm:$0xf]
      %v2888 = vld [vmem:[%s851 + $0xb0] sm:$0x1]
      %v2889 = vld [vmem:[%s851 + $0xb4] sm:$0xf]
      %v2890 = vld [vmem:[%s851 + $0xb8] sm:$0xf]
      %v2891 = vld [vmem:[%s851 + $0xbc] sm:$0x1]
      %v2893 = vshrl.u32 %v2844, 16
      %v2895 = vrot.slane %v2893, 4
      %v2896 = vshll.u32 %v2844, 16
      %v2898 = vrot.slane %v2896, 5
      %v2899 = vor.u32 %v2895, %v2898
      %v2900 = vrot.slane %v2899, 4
      %v2902 = vshll.u32 %v2845, 16
      %v2904 = vrot.slane %v2902, 5
      %v2905 = vsel %vm1088, %v2900, %v2904
      %v2906 = vshrl.u32 %v2845, 16
      %v2908 = vrot.slane %v2906, 4
      %v2909 = vor.u32 %v2908, %v2904
      %v2910 = vrot.slane %v2909, 4
      %v2912 = vshll.u32 %v2846, 16
      %v2914 = vrot.slane %v2912, 5
      %v2915 = vsel %vm1088, %v2910, %v2914
      %v2917 = vshrl.u32 %v2847, 16
      %v2919 = vrot.slane %v2917, 4
      %v2920 = vshll.u32 %v2847, 16
      %v2922 = vrot.slane %v2920, 5
      %v2923 = vor.u32 %v2919, %v2922
      %v2924 = vrot.slane %v2923, 4
      %v2926 = vshll.u32 %v2848, 16
      %v2928 = vrot.slane %v2926, 5
      %v2929 = vsel %vm1088, %v2924, %v2928
      %v2930 = vshrl.u32 %v2848, 16
      %v2932 = vrot.slane %v2930, 4
      %v2933 = vor.u32 %v2932, %v2928
      %v2934 = vrot.slane %v2933, 4
      %v2936 = vshll.u32 %v2849, 16
      %v2938 = vrot.slane %v2936, 5
      %v2939 = vsel %vm1088, %v2934, %v2938
      %v2941 = vshrl.u32 %v2850, 16
      %v2943 = vrot.slane %v2941, 4
      %v2944 = vshll.u32 %v2850, 16
      %v2946 = vrot.slane %v2944, 5
      %v2947 = vor.u32 %v2943, %v2946
      %v2948 = vrot.slane %v2947, 4
      %v2950 = vshll.u32 %v2851, 16
      %v2952 = vrot.slane %v2950, 5
      %v2953 = vsel %vm1088, %v2948, %v2952
      %v2954 = vshrl.u32 %v2851, 16
      %v2956 = vrot.slane %v2954, 4
      %v2957 = vor.u32 %v2956, %v2952
      %v2958 = vrot.slane %v2957, 4
      %v2960 = vshll.u32 %v2852, 16
      %v2962 = vrot.slane %v2960, 5
      %v2963 = vsel %vm1088, %v2958, %v2962
      %v2965 = vshrl.u32 %v2853, 16
      %v2967 = vrot.slane %v2965, 4
      %v2968 = vshll.u32 %v2853, 16
      %v2970 = vrot.slane %v2968, 5
      %v2971 = vor.u32 %v2967, %v2970
      %v2972 = vrot.slane %v2971, 4
      %v2974 = vshll.u32 %v2854, 16
      %v2976 = vrot.slane %v2974, 5
      %v2977 = vsel %vm1088, %v2972, %v2976
      %v2978 = vshrl.u32 %v2854, 16
      %v2980 = vrot.slane %v2978, 4
      %v2981 = vor.u32 %v2980, %v2976
      %v2982 = vrot.slane %v2981, 4
      %v2984 = vshll.u32 %v2855, 16
      %v2986 = vrot.slane %v2984, 5
      %v2987 = vsel %vm1088, %v2982, %v2986
      %v2989 = vshrl.u32 %v2856, 16
      %v2991 = vrot.slane %v2989, 4
      %v2992 = vshll.u32 %v2856, 16
      %v2994 = vrot.slane %v2992, 5
      %v2995 = vor.u32 %v2991, %v2994
      %v2996 = vrot.slane %v2995, 4
      %v2998 = vshll.u32 %v2857, 16
      %v3000 = vrot.slane %v2998, 5
      %v3001 = vsel %vm1088, %v2996, %v3000
      %v3002 = vshrl.u32 %v2857, 16
      %v3004 = vrot.slane %v3002, 4
      %v3005 = vor.u32 %v3004, %v3000
      %v3006 = vrot.slane %v3005, 4
      %v3008 = vshll.u32 %v2858, 16
      %v3010 = vrot.slane %v3008, 5
      %v3011 = vsel %vm1088, %v3006, %v3010
      %v3013 = vshrl.u32 %v2859, 16
      %v3015 = vrot.slane %v3013, 4
      %v3016 = vshll.u32 %v2859, 16
      %v3018 = vrot.slane %v3016, 5
      %v3019 = vor.u32 %v3015, %v3018
      %v3020 = vrot.slane %v3019, 4
      %v3022 = vshll.u32 %v2860, 16
      %v3024 = vrot.slane %v3022, 5
      %v3025 = vsel %vm1088, %v3020, %v3024
      %v3026 = vshrl.u32 %v2860, 16
      %v3028 = vrot.slane %v3026, 4
      %v3029 = vor.u32 %v3028, %v3024
      %v3030 = vrot.slane %v3029, 4
      %v3032 = vshll.u32 %v2861, 16
      %v3034 = vrot.slane %v3032, 5
      %v3035 = vsel %vm1088, %v3030, %v3034
      %v3037 = vshrl.u32 %v2862, 16
      %v3039 = vrot.slane %v3037, 4
      %v3040 = vshll.u32 %v2862, 16
      %v3042 = vrot.slane %v3040, 5
      %v3043 = vor.u32 %v3039, %v3042
      %v3044 = vrot.slane %v3043, 4
      %v3046 = vshll.u32 %v2863, 16
      %v3048 = vrot.slane %v3046, 5
      %v3049 = vsel %vm1088, %v3044, %v3048
      %v3050 = vshrl.u32 %v2863, 16
      %v3052 = vrot.slane %v3050, 4
      %v3053 = vor.u32 %v3052, %v3048
      %v3054 = vrot.slane %v3053, 4
      %v3056 = vshll.u32 %v2864, 16
      %v3058 = vrot.slane %v3056, 5
      %v3059 = vsel %vm1088, %v3054, %v3058
      %v3061 = vshrl.u32 %v2865, 16
      %v3063 = vrot.slane %v3061, 4
      %v3064 = vshll.u32 %v2865, 16
      %v3066 = vrot.slane %v3064, 5
      %v3067 = vor.u32 %v3063, %v3066
      %v3068 = vrot.slane %v3067, 4
      %v3070 = vshll.u32 %v2866, 16
      %v3072 = vrot.slane %v3070, 5
      %v3073 = vsel %vm1088, %v3068, %v3072
      %v3074 = vshrl.u32 %v2866, 16
      %v3076 = vrot.slane %v3074, 4
      %v3077 = vor.u32 %v3076, %v3072
      %v3078 = vrot.slane %v3077, 4
      %v3080 = vshll.u32 %v2867, 16
      %v3082 = vrot.slane %v3080, 5
      %v3083 = vsel %vm1088, %v3078, %v3082
      %v3085 = vshrl.u32 %v2868, 16
      %v3087 = vrot.slane %v3085, 4
      %v3088 = vshll.u32 %v2868, 16
      %v3090 = vrot.slane %v3088, 5
      %v3091 = vor.u32 %v3087, %v3090
      %v3092 = vrot.slane %v3091, 4
      %v3094 = vshll.u32 %v2869, 16
      %v3096 = vrot.slane %v3094, 5
      %v3097 = vsel %vm1088, %v3092, %v3096
      %v3098 = vshrl.u32 %v2869, 16
      %v3100 = vrot.slane %v3098, 4
      %v3101 = vor.u32 %v3100, %v3096
      %v3102 = vrot.slane %v3101, 4
      %v3104 = vshll.u32 %v2870, 16
      %v3106 = vrot.slane %v3104, 5
      %v3107 = vsel %vm1088, %v3102, %v3106
      %v3109 = vshrl.u32 %v2871, 16
      %v3111 = vrot.slane %v3109, 4
      %v3112 = vshll.u32 %v2871, 16
      %v3114 = vrot.slane %v3112, 5
      %v3115 = vor.u32 %v3111, %v3114
      %v3116 = vrot.slane %v3115, 4
      %v3118 = vshll.u32 %v2872, 16
      %v3120 = vrot.slane %v3118, 5
      %v3121 = vsel %vm1088, %v3116, %v3120
      %v3122 = vshrl.u32 %v2872, 16
      %v3124 = vrot.slane %v3122, 4
      %v3125 = vor.u32 %v3124, %v3120
      %v3126 = vrot.slane %v3125, 4
      %v3128 = vshll.u32 %v2873, 16
      %v3130 = vrot.slane %v3128, 5
      %v3131 = vsel %vm1088, %v3126, %v3130
      %v3133 = vshrl.u32 %v2874, 16
      %v3135 = vrot.slane %v3133, 4
      %v3136 = vshll.u32 %v2874, 16
      %v3138 = vrot.slane %v3136, 5
      %v3139 = vor.u32 %v3135, %v3138
      %v3140 = vrot.slane %v3139, 4
      %v3142 = vshll.u32 %v2875, 16
      %v3144 = vrot.slane %v3142, 5
      %v3145 = vsel %vm1088, %v3140, %v3144
      %v3146 = vshrl.u32 %v2875, 16
      %v3148 = vrot.slane %v3146, 4
      %v3149 = vor.u32 %v3148, %v3144
      %v3150 = vrot.slane %v3149, 4
      %v3152 = vshll.u32 %v2876, 16
      %v3154 = vrot.slane %v3152, 5
      %v3155 = vsel %vm1088, %v3150, %v3154
      %v3157 = vshrl.u32 %v2877, 16
      %v3159 = vrot.slane %v3157, 4
      %v3160 = vshll.u32 %v2877, 16
      %v3162 = vrot.slane %v3160, 5
      %v3163 = vor.u32 %v3159, %v3162
      %v3164 = vrot.slane %v3163, 4
      %v3166 = vshll.u32 %v2878, 16
      %v3168 = vrot.slane %v3166, 5
      %v3169 = vsel %vm1088, %v3164, %v3168
      %v3170 = vshrl.u32 %v2878, 16
      %v3172 = vrot.slane %v3170, 4
      %v3173 = vor.u32 %v3172, %v3168
      %v3174 = vrot.slane %v3173, 4
      %v3176 = vshll.u32 %v2879, 16
      %v3178 = vrot.slane %v3176, 5
      %v3179 = vsel %vm1088, %v3174, %v3178
      %v3181 = vshrl.u32 %v2880, 16
      %v3183 = vrot.slane %v3181, 4
      %v3184 = vshll.u32 %v2880, 16
      %v3186 = vrot.slane %v3184, 5
      %v3187 = vor.u32 %v3183, %v3186
      %v3188 = vrot.slane %v3187, 4
      %v3190 = vshll.u32 %v2881, 16
      %v3192 = vrot.slane %v3190, 5
      %v3193 = vsel %vm1088, %v3188, %v3192
      %v3194 = vshrl.u32 %v2881, 16
      %v3196 = vrot.slane %v3194, 4
      %v3197 = vor.u32 %v3196, %v3192
      %v3198 = vrot.slane %v3197, 4
      %v3200 = vshll.u32 %v2882, 16
      %v3202 = vrot.slane %v3200, 5
      %v3203 = vsel %vm1088, %v3198, %v3202
      %v3205 = vshrl.u32 %v2883, 16
      %v3207 = vrot.slane %v3205, 4
      %v3208 = vshll.u32 %v2883, 16
      %v3210 = vrot.slane %v3208, 5
      %v3211 = vor.u32 %v3207, %v3210
      %v3212 = vrot.slane %v3211, 4
      %v3214 = vshll.u32 %v2884, 16
      %v3216 = vrot.slane %v3214, 5
      %v3217 = vsel %vm1088, %v3212, %v3216
      %v3218 = vshrl.u32 %v2884, 16
      %v3220 = vrot.slane %v3218, 4
      %v3221 = vor.u32 %v3220, %v3216
      %v3222 = vrot.slane %v3221, 4
      %v3224 = vshll.u32 %v2885, 16
      %v3226 = vrot.slane %v3224, 5
      %v3227 = vsel %vm1088, %v3222, %v3226
      %v3229 = vshrl.u32 %v2886, 16
      %v3231 = vrot.slane %v3229, 4
      %v3232 = vshll.u32 %v2886, 16
      %v3234 = vrot.slane %v3232, 5
      %v3235 = vor.u32 %v3231, %v3234
      %v3236 = vrot.slane %v3235, 4
      %v3238 = vshll.u32 %v2887, 16
      %v3240 = vrot.slane %v3238, 5
      %v3241 = vsel %vm1088, %v3236, %v3240
      %v3242 = vshrl.u32 %v2887, 16
      %v3244 = vrot.slane %v3242, 4
      %v3245 = vor.u32 %v3244, %v3240
      %v3246 = vrot.slane %v3245, 4
      %v3248 = vshll.u32 %v2888, 16
      %v3250 = vrot.slane %v3248, 5
      %v3251 = vsel %vm1088, %v3246, %v3250
      %v3253 = vshrl.u32 %v2889, 16
      %v3255 = vrot.slane %v3253, 4
      %v3256 = vshll.u32 %v2889, 16
      %v3258 = vrot.slane %v3256, 5
      %v3259 = vor.u32 %v3255, %v3258
      %v3260 = vrot.slane %v3259, 4
      %v3262 = vshll.u32 %v2890, 16
      %v3264 = vrot.slane %v3262, 5
      %v3265 = vsel %vm1088, %v3260, %v3264
      %v3266 = vshrl.u32 %v2890, 16
      %v3268 = vrot.slane %v3266, 4
      %v3269 = vor.u32 %v3268, %v3264
      %v3270 = vrot.slane %v3269, 4
      %v3272 = vshll.u32 %v2891, 16
      %v3274 = vrot.slane %v3272, 5
      %v3275 = vsel %vm1088, %v3270, %v3274
      %s3276 = scalar_lea.vmem %s3, 8
      %v3277 = vld [vmem:[%s3276] sm:$0x3]
      %v3278 = vunpack.c.l.b16 %v2905
      %v3279 = vunpack.c.l.b16 %v2915
      %v3280 = vunpack.c.l.b16 %v2929
      %v3281 = vunpack.c.l.b16 %v2939
      %v3282 = vunpack.c.l.b16 %v2953
      %v3283 = vunpack.c.l.b16 %v2963
      %v3284 = vunpack.c.l.b16 %v2977
      %v3285 = vunpack.c.l.b16 %v2987
      %v3286 = vunpack.c.l.b16 %v3001
      %v3287 = vunpack.c.l.b16 %v3011
      %v3288 = vunpack.c.l.b16 %v3025
      %v3289 = vunpack.c.l.b16 %v3035
      %v3290 = vunpack.c.l.b16 %v3049
      %v3291 = vunpack.c.l.b16 %v3059
      %v3292 = vunpack.c.l.b16 %v3073
      %v3293 = vunpack.c.l.b16 %v3083
      %v3294 = vunpack.c.l.b16 %v3097
      %v3295 = vunpack.c.l.b16 %v3107
      %v3296 = vunpack.c.l.b16 %v3121
      %v3297 = vunpack.c.l.b16 %v3131
      %v3298 = vunpack.c.l.b16 %v3145
      %v3299 = vunpack.c.l.b16 %v3155
      %v3300 = vunpack.c.l.b16 %v3169
      %v3301 = vunpack.c.l.b16 %v3179
      %v3302 = vunpack.c.l.b16 %v3193
      %v3303 = vunpack.c.l.b16 %v3203
      %v3304 = vunpack.c.l.b16 %v3217
      %v3305 = vunpack.c.l.b16 %v3227
      %v3306 = vunpack.c.l.b16 %v3241
      %v3307 = vunpack.c.l.b16 %v3251
      %v3308 = vunpack.c.l.b16 %v3265
      %v3309 = vunpack.c.l.b16 %v3275
      %v3310 = vpack.c.b16 %v3279, %v3278
      %v3311 = vpack.c.b16 %v3281, %v3280
      %v3312 = vpack.c.b16 %v3283, %v3282
      %v3313 = vpack.c.b16 %v3285, %v3284
      %v3314 = vpack.c.b16 %v3287, %v3286
      %v3315 = vpack.c.b16 %v3289, %v3288
      %v3316 = vpack.c.b16 %v3291, %v3290
      %v3317 = vpack.c.b16 %v3293, %v3292
      %v3318 = vpack.c.b16 %v3295, %v3294
      %v3319 = vpack.c.b16 %v3297, %v3296
      %v3320 = vpack.c.b16 %v3299, %v3298
      %v3321 = vpack.c.b16 %v3301, %v3300
      %v3322 = vpack.c.b16 %v3303, %v3302
      %v3323 = vpack.c.b16 %v3305, %v3304
      %v3324 = vpack.c.b16 %v3307, %v3306
      %v3325 = vpack.c.b16 %v3309, %v3308
      %v3327 = vsel %vm1523, %v3310, 0
      %v3330 = vsel %vm1523, %v3311, 0
      %v3333 = vsel %vm1523, %v3312, 0
      %v3336 = vsel %vm1523, %v3313, 0
      %v3339 = vsel %vm1523, %v3314, 0
      %v3342 = vsel %vm1523, %v3315, 0
      %v3345 = vsel %vm1523, %v3316, 0
      %v3348 = vsel %vm1523, %v3317, 0
      %v3351 = vsel %vm1523, %v3318, 0
      %v3354 = vsel %vm1523, %v3319, 0
      %v3357 = vsel %vm1523, %v3320, 0
      %v3360 = vsel %vm1523, %v3321, 0
      %v3363 = vsel %vm1523, %v3322, 0
      %v3366 = vsel %vm1523, %v3323, 0
      %v3369 = vsel %vm1523, %v3324, 0
      %v3372 = vsel %vm1523, %v3325, 0
      %v3375 = vsel %vm1572, %v3277, 0
      %3377 = vmatprep.subr.bf16.mxu0 0
      %3378 = vmatpush1.bf16.msra.mxu0 %v3375
      %3379 = vmatprep.subr.bf16.mxu0 0
      %3380 = vmatpush1.bf16.msra.mxu0 0
      %3381 = vmatprep.subr.bf16.mxu0 0
      %3382 = vmatpush1.bf16.msra.mxu0 0
      %3383 = vmatprep.subr.bf16.mxu0 0
      %3384 = vmatpush1.bf16.msra.mxu0 0
      %3385 = vmatprep.subr.bf16.mxu0 0
      %3386 = vmatpush1.bf16.msra.mxu0 0
      %3387 = vmatprep.subr.bf16.mxu0 0
      %3388 = vmatpush1.bf16.msra.mxu0 0
      %3389 = vmatprep.subr.bf16.mxu0 0
      %3390 = vmatpush1.bf16.msra.mxu0 0
      %3391 = vmatprep.subr.bf16.mxu0 0
      %3392 = vmatpush1.bf16.msra.mxu0 0
      %3393 = vmatprep.subr.bf16.mxu0 0
      %3394 = vmatpush1.bf16.msra.mxu0 0
      %3395 = vmatprep.subr.bf16.mxu0 0
      %3396 = vmatpush1.bf16.msra.mxu0 0
      %3397 = vmatprep.subr.bf16.mxu0 0
      %3398 = vmatpush1.bf16.msra.mxu0 0
      %3399 = vmatprep.subr.bf16.mxu0 0
      %3400 = vmatpush1.bf16.msra.mxu0 0
      %3401 = vmatprep.subr.bf16.mxu0 0
      %3402 = vmatpush1.bf16.msra.mxu0 0
      %3403 = vmatprep.subr.bf16.mxu0 0
      %3404 = vmatpush1.bf16.msra.mxu0 0
      %3405 = vmatprep.subr.bf16.mxu0 0
      %3406 = vmatpush1.bf16.msra.mxu0 0
      %3407 = vmatprep.subr.bf16.mxu0 0
      %3408 = vmatpush1.bf16.msra.mxu0 0
      %3409 = vmatprep.mubr.bf16.mxu0 0
      %3410 = vmatmul.mubr.bf16.gmra.mrb[0].mxu0 %v3327
      %v3411 = vpop.f32.mrb[0].mxu0
      %v3412 = vadd.f32 0.0, %v3411
      %v3413 = vpop.f32.mrb[0].mxu0
      %v3414 = vpop.f32.mrb[0].mxu0
      %v3415 = vadd.f32 0.0, %v3414
      %v3416 = vpop.f32.mrb[0].mxu0
      %3417 = vmatprep.mubr.bf16.mxu0 0
      %3418 = vmatmul.mubr.bf16.gmra.mrb[0].mxu0 %v3330
      %v3419 = vpop.f32.mrb[0].mxu0
      %v3420 = vadd.f32 0.0, %v3419
      %v3421 = vpop.f32.mrb[0].mxu0
      %v3422 = vpop.f32.mrb[0].mxu0
      %v3423 = vadd.f32 0.0, %v3422
      %v3424 = vpop.f32.mrb[0].mxu0
      %3425 = vmatprep.mubr.bf16.mxu0 0
      %3426 = vmatmul.mubr.bf16.gmra.mrb[0].mxu0 %v3333
      %v3427 = vpop.f32.mrb[0].mxu0
      %v3428 = vadd.f32 0.0, %v3427
      %v3429 = vpop.f32.mrb[0].mxu0
      %v3430 = vpop.f32.mrb[0].mxu0
      %v3431 = vadd.f32 0.0, %v3430
      %v3432 = vpop.f32.mrb[0].mxu0
      %3433 = vmatprep.mubr.bf16.mxu0 0
      %3434 = vmatmul.mubr.bf16.gmra.mrb[0].mxu0 %v3336
      %v3435 = vpop.f32.mrb[0].mxu0
      %v3436 = vadd.f32 0.0, %v3435
      %v3437 = vpop.f32.mrb[0].mxu0
      %v3438 = vpop.f32.mrb[0].mxu0
      %v3439 = vadd.f32 0.0, %v3438
      %v3440 = vpop.f32.mrb[0].mxu0
      %3441 = vmatprep.mubr.bf16.mxu0 0
      %3442 = vmatmul.mubr.bf16.gmra.mrb[0].mxu0 %v3339
      %v3443 = vpop.f32.mrb[0].mxu0
      %v3444 = vadd.f32 0.0, %v3443
      %v3445 = vpop.f32.mrb[0].mxu0
      %v3446 = vpop.f32.mrb[0].mxu0
      %v3447 = vadd.f32 0.0, %v3446
      %v3448 = vpop.f32.mrb[0].mxu0
      %3449 = vmatprep.mubr.bf16.mxu0 0
      %3450 = vmatmul.mubr.bf16.gmra.mrb[0].mxu0 %v3342
      %v3451 = vpop.f32.mrb[0].mxu0
      %v3452 = vadd.f32 0.0, %v3451
      %v3453 = vpop.f32.mrb[0].mxu0
      %v3454 = vpop.f32.mrb[0].mxu0
      %v3455 = vadd.f32 0.0, %v3454
      %v3456 = vpop.f32.mrb[0].mxu0
      %3457 = vmatprep.mubr.bf16.mxu0 0
      %3458 = vmatmul.mubr.bf16.gmra.mrb[0].mxu0 %v3345
      %v3459 = vpop.f32.mrb[0].mxu0
      %v3460 = vadd.f32 0.0, %v3459
      %v3461 = vpop.f32.mrb[0].mxu0
      %v3462 = vpop.f32.mrb[0].mxu0
      %v3463 = vadd.f32 0.0, %v3462
      %v3464 = vpop.f32.mrb[0].mxu0
      %3465 = vmatprep.mubr.bf16.mxu0 0
      %3466 = vmatmul.mubr.bf16.gmra.mrb[0].mxu0 %v3348
      %v3467 = vpop.f32.mrb[0].mxu0
      %v3468 = vadd.f32 0.0, %v3467
      %v3469 = vpop.f32.mrb[0].mxu0
      %v3470 = vpop.f32.mrb[0].mxu0
      %v3471 = vadd.f32 0.0, %v3470
      %v3472 = vpop.f32.mrb[0].mxu0
      %3473 = vmatprep.mubr.bf16.mxu0 0
      %3474 = vmatmul.mubr.bf16.gmra.mrb[0].mxu0 %v3351
      %v3475 = vpop.f32.mrb[0].mxu0
      %v3476 = vadd.f32 0.0, %v3475
      %v3477 = vpop.f32.mrb[0].mxu0
      %v3478 = vpop.f32.mrb[0].mxu0
      %v3479 = vadd.f32 0.0, %v3478
      %v3480 = vpop.f32.mrb[0].mxu0
      %3481 = vmatprep.mubr.bf16.mxu0 0
      %3482 = vmatmul.mubr.bf16.gmra.mrb[0].mxu0 %v3354
      %v3483 = vpop.f32.mrb[0].mxu0
      %v3484 = vadd.f32 0.0, %v3483
      %v3485 = vpop.f32.mrb[0].mxu0
      %v3486 = vpop.f32.mrb[0].mxu0
      %v3487 = vadd.f32 0.0, %v3486
      %v3488 = vpop.f32.mrb[0].mxu0
      %3489 = vmatprep.mubr.bf16.mxu0 0
      %3490 = vmatmul.mubr.bf16.gmra.mrb[0].mxu0 %v3357
      %v3491 = vpop.f32.mrb[0].mxu0
      %v3492 = vadd.f32 0.0, %v3491
      %v3493 = vpop.f32.mrb[0].mxu0
      %v3494 = vpop.f32.mrb[0].mxu0
      %v3495 = vadd.f32 0.0, %v3494
      %v3496 = vpop.f32.mrb[0].mxu0
      %3497 = vmatprep.mubr.bf16.mxu0 0
      %3498 = vmatmul.mubr.bf16.gmra.mrb[0].mxu0 %v3360
      %v3499 = vpop.f32.mrb[0].mxu0
      %v3500 = vadd.f32 0.0, %v3499
      %v3501 = vpop.f32.mrb[0].mxu0
      %v3502 = vpop.f32.mrb[0].mxu0
      %v3503 = vadd.f32 0.0, %v3502
      %v3504 = vpop.f32.mrb[0].mxu0
      %3505 = vmatprep.mubr.bf16.mxu0 0
      %3506 = vmatmul.mubr.bf16.gmra.mrb[0].mxu0 %v3363
      %v3507 = vpop.f32.mrb[0].mxu0
      %v3508 = vadd.f32 0.0, %v3507
      %v3509 = vpop.f32.mrb[0].mxu0
      %v3510 = vpop.f32.mrb[0].mxu0
      %v3511 = vadd.f32 0.0, %v3510
      %v3512 = vpop.f32.mrb[0].mxu0
      %3513 = vmatprep.mubr.bf16.mxu0 0
      %3514 = vmatmul.mubr.bf16.gmra.mrb[0].mxu0 %v3366
      %v3515 = vpop.f32.mrb[0].mxu0
      %v3516 = vadd.f32 0.0, %v3515
      %v3517 = vpop.f32.mrb[0].mxu0
      %v3518 = vpop.f32.mrb[0].mxu0
      %v3519 = vadd.f32 0.0, %v3518
      %v3520 = vpop.f32.mrb[0].mxu0
      %3521 = vmatprep.mubr.bf16.mxu0 0
      %3522 = vmatmul.mubr.bf16.gmra.mrb[0].mxu0 %v3369
      %v3523 = vpop.f32.mrb[0].mxu0
      %v3524 = vadd.f32 0.0, %v3523
      %v3525 = vpop.f32.mrb[0].mxu0
      %v3526 = vpop.f32.mrb[0].mxu0
      %v3527 = vadd.f32 0.0, %v3526
      %v3528 = vpop.f32.mrb[0].mxu0
      %3529 = vmatprep.mubr.bf16.mxu0 0
      %3530 = vmatmul.mubr.bf16.gmra.mrb[0].mxu0 %v3372
      %v3531 = vpop.f32.mrb[0].mxu0
      %v3532 = vadd.f32 0.0, %v3531
      %v3533 = vpop.f32.mrb[0].mxu0
      %v3534 = vpop.f32.mrb[0].mxu0
      %v3535 = vadd.f32 0.0, %v3534
      %v3536 = vpop.f32.mrb[0].mxu0
      %3537 = vdwg.mxu0
      %v3538 = vadd.f32 %v2812, %v3412
      %v3539 = vadd.f32 %v2813, %v3415
      %v3540 = vadd.f32 %v2814, %v3420
      %v3541 = vadd.f32 %v2815, %v3423
      %v3542 = vadd.f32 %v2816, %v3428
      %v3543 = vadd.f32 %v2817, %v3431
      %v3544 = vadd.f32 %v2818, %v3436
      %v3545 = vadd.f32 %v2819, %v3439
      %v3546 = vadd.f32 %v2820, %v3444
      %v3547 = vadd.f32 %v2821, %v3447
      %v3548 = vadd.f32 %v2822, %v3452
      %v3549 = vadd.f32 %v2823, %v3455
      %v3550 = vadd.f32 %v2824, %v3460
      %v3551 = vadd.f32 %v2825, %v3463
      %v3552 = vadd.f32 %v2826, %v3468
      %v3553 = vadd.f32 %v2827, %v3471
      %v3554 = vadd.f32 %v2828, %v3476
      %v3555 = vadd.f32 %v2829, %v3479
      %v3556 = vadd.f32 %v2830, %v3484
      %v3557 = vadd.f32 %v2831, %v3487
      %v3558 = vadd.f32 %v2832, %v3492
      %v3559 = vadd.f32 %v2833, %v3495
      %v3560 = vadd.f32 %v2834, %v3500
      %v3561 = vadd.f32 %v2835, %v3503
      %v3562 = vadd.f32 %v2836, %v3508
      %v3563 = vadd.f32 %v2837, %v3511
      %v3564 = vadd.f32 %v2838, %v3516
      %v3565 = vadd.f32 %v2839, %v3519
      %v3566 = vadd.f32 %v2840, %v3524
      %v3567 = vadd.f32 %v2841, %v3527
      %v3568 = vadd.f32 %v2842, %v3532
      %v3569 = vadd.f32 %v2843, %v3535
      %v3570 = vld [vmem:[%s851] sm:$0xe]
      %v3571 = vld [vmem:[%s851 + $0xc] sm:$0xe]
      %v3572 = vld [vmem:[%s851 + $0x18] sm:$0xe]
      %v3573 = vld [vmem:[%s851 + $0x24] sm:$0xe]
      %v3574 = vld [vmem:[%s851 + $0x30] sm:$0xe]
      %v3575 = vld [vmem:[%s851 + $0x3c] sm:$0xe]
      %v3576 = vld [vmem:[%s851 + $0x48] sm:$0xe]
      %v3577 = vld [vmem:[%s851 + $0x54] sm:$0xe]
      %v3578 = vld [vmem:[%s851 + $0x60] sm:$0xe]
      %v3579 = vld [vmem:[%s851 + $0x6c] sm:$0xe]
      %v3580 = vld [vmem:[%s851 + $0x78] sm:$0xe]
      %v3581 = vld [vmem:[%s851 + $0x84] sm:$0xe]
      %v3582 = vld [vmem:[%s851 + $0x90] sm:$0xe]
      %v3583 = vld [vmem:[%s851 + $0x9c] sm:$0xe]
      %v3584 = vld [vmem:[%s851 + $0xa8] sm:$0xe]
      %v3585 = vld [vmem:[%s851 + $0xb4] sm:$0xe]
      %v3634 = vrot.slane %v3570, 5
      %v3635 = vrot.slane %v3634, 4
      %v3636 = vrot.slane %v2845, 5
      %v3637 = vsel %vm2079, %v3635, %v3636
      %v3638 = vrot.slane %v3636, 4
      %v3639 = vrot.slane %v2846, 5
      %v3640 = vsel %vm2079, %v3638, %v3639
      %v3641 = vrot.slane %v3571, 5
      %v3642 = vrot.slane %v3641, 4
      %v3643 = vrot.slane %v2848, 5
      %v3644 = vsel %vm2079, %v3642, %v3643
      %v3645 = vrot.slane %v3643, 4
      %v3646 = vrot.slane %v2849, 5
      %v3647 = vsel %vm2079, %v3645, %v3646
      %v3648 = vrot.slane %v3572, 5
      %v3649 = vrot.slane %v3648, 4
      %v3650 = vrot.slane %v2851, 5
      %v3651 = vsel %vm2079, %v3649, %v3650
      %v3652 = vrot.slane %v3650, 4
      %v3653 = vrot.slane %v2852, 5
      %v3654 = vsel %vm2079, %v3652, %v3653
      %v3655 = vrot.slane %v3573, 5
      %v3656 = vrot.slane %v3655, 4
      %v3657 = vrot.slane %v2854, 5
      %v3658 = vsel %vm2079, %v3656, %v3657
      %v3659 = vrot.slane %v3657, 4
      %v3660 = vrot.slane %v2855, 5
      %v3661 = vsel %vm2079, %v3659, %v3660
      %v3662 = vrot.slane %v3574, 5
      %v3663 = vrot.slane %v3662, 4
      %v3664 = vrot.slane %v2857, 5
      %v3665 = vsel %vm2079, %v3663, %v3664
      %v3666 = vrot.slane %v3664, 4
      %v3667 = vrot.slane %v2858, 5
      %v3668 = vsel %vm2079, %v3666, %v3667
      %v3669 = vrot.slane %v3575, 5
      %v3670 = vrot.slane %v3669, 4
      %v3671 = vrot.slane %v2860, 5
      %v3672 = vsel %vm2079, %v3670, %v3671
      %v3673 = vrot.slane %v3671, 4
      %v3674 = vrot.slane %v2861, 5
      %v3675 = vsel %vm2079, %v3673, %v3674
      %v3676 = vrot.slane %v3576, 5
      %v3677 = vrot.slane %v3676, 4
      %v3678 = vrot.slane %v2863, 5
      %v3679 = vsel %vm2079, %v3677, %v3678
      %v3680 = vrot.slane %v3678, 4
      %v3681 = vrot.slane %v2864, 5
      %v3682 = vsel %vm2079, %v3680, %v3681
      %v3683 = vrot.slane %v3577, 5
      %v3684 = vrot.slane %v3683, 4
      %v3685 = vrot.slane %v2866, 5
      %v3686 = vsel %vm2079, %v3684, %v3685
      %v3687 = vrot.slane %v3685, 4
      %v3688 = vrot.slane %v2867, 5
      %v3689 = vsel %vm2079, %v3687, %v3688
      %v3690 = vrot.slane %v3578, 5
      %v3691 = vrot.slane %v3690, 4
      %v3692 = vrot.slane %v2869, 5
      %v3693 = vsel %vm2079, %v3691, %v3692
      %v3694 = vrot.slane %v3692, 4
      %v3695 = vrot.slane %v2870, 5
      %v3696 = vsel %vm2079, %v3694, %v3695
      %v3697 = vrot.slane %v3579, 5
      %v3698 = vrot.slane %v3697, 4
      %v3699 = vrot.slane %v2872, 5
      %v3700 = vsel %vm2079, %v3698, %v3699
      %v3701 = vrot.slane %v3699, 4
      %v3702 = vrot.slane %v2873, 5
      %v3703 = vsel %vm2079, %v3701, %v3702
      %v3704 = vrot.slane %v3580, 5
      %v3705 = vrot.slane %v3704, 4
      %v3706 = vrot.slane %v2875, 5
      %v3707 = vsel %vm2079, %v3705, %v3706
      %v3708 = vrot.slane %v3706, 4
      %v3709 = vrot.slane %v2876, 5
      %v3710 = vsel %vm2079, %v3708, %v3709
      %v3711 = vrot.slane %v3581, 5
      %v3712 = vrot.slane %v3711, 4
      %v3713 = vrot.slane %v2878, 5
      %v3714 = vsel %vm2079, %v3712, %v3713
      %v3715 = vrot.slane %v3713, 4
      %v3716 = vrot.slane %v2879, 5
      %v3717 = vsel %vm2079, %v3715, %v3716
      %v3718 = vrot.slane %v3582, 5
      %v3719 = vrot.slane %v3718, 4
      %v3720 = vrot.slane %v2881, 5
      %v3721 = vsel %vm2079, %v3719, %v3720
      %v3722 = vrot.slane %v3720, 4
      %v3723 = vrot.slane %v2882, 5
      %v3724 = vsel %vm2079, %v3722, %v3723
      %v3725 = vrot.slane %v3583, 5
      %v3726 = vrot.slane %v3725, 4
      %v3727 = vrot.slane %v2884, 5
      %v3728 = vsel %vm2079, %v3726, %v3727
      %v3729 = vrot.slane %v3727, 4
      %v3730 = vrot.slane %v2885, 5
      %v3731 = vsel %vm2079, %v3729, %v3730
      %v3732 = vrot.slane %v3584, 5
      %v3733 = vrot.slane %v3732, 4
      %v3734 = vrot.slane %v2887, 5
      %v3735 = vsel %vm2079, %v3733, %v3734
      %v3736 = vrot.slane %v3734, 4
      %v3737 = vrot.slane %v2888, 5
      %v3738 = vsel %vm2079, %v3736, %v3737
      %v3739 = vrot.slane %v3585, 5
      %v3740 = vrot.slane %v3739, 4
      %v3741 = vrot.slane %v2890, 5
      %v3742 = vsel %vm2079, %v3740, %v3741
      %v3743 = vrot.slane %v3741, 4
      %v3744 = vrot.slane %v2891, 5
      %v3745 = vsel %vm2079, %v3743, %v3744
      %s3746 = scalar_lea.vmem %s3, 10
      %v3747 = vld [vmem:[%s3746] sm:$0x3]
      %v3748 = vunpack.c.l.b16 %v3637
      %v3749 = vunpack.c.l.b16 %v3640
      %v3750 = vunpack.c.l.b16 %v3644
      %v3751 = vunpack.c.l.b16 %v3647
      %v3752 = vunpack.c.l.b16 %v3651
      %v3753 = vunpack.c.l.b16 %v3654
      %v3754 = vunpack.c.l.b16 %v3658
      %v3755 = vunpack.c.l.b16 %v3661
      %v3756 = vunpack.c.l.b16 %v3665
      %v3757 = vunpack.c.l.b16 %v3668
      %v3758 = vunpack.c.l.b16 %v3672
      %v3759 = vunpack.c.l.b16 %v3675
      %v3760 = vunpack.c.l.b16 %v3679
      %v3761 = vunpack.c.l.b16 %v3682
      %v3762 = vunpack.c.l.b16 %v3686
      %v3763 = vunpack.c.l.b16 %v3689
      %v3764 = vunpack.c.l.b16 %v3693
      %v3765 = vunpack.c.l.b16 %v3696
      %v3766 = vunpack.c.l.b16 %v3700
      %v3767 = vunpack.c.l.b16 %v3703
      %v3768 = vunpack.c.l.b16 %v3707
      %v3769 = vunpack.c.l.b16 %v3710
      %v3770 = vunpack.c.l.b16 %v3714
      %v3771 = vunpack.c.l.b16 %v3717
      %v3772 = vunpack.c.l.b16 %v3721
      %v3773 = vunpack.c.l.b16 %v3724
      %v3774 = vunpack.c.l.b16 %v3728
      %v3775 = vunpack.c.l.b16 %v3731
      %v3776 = vunpack.c.l.b16 %v3735
      %v3777 = vunpack.c.l.b16 %v3738
      %v3778 = vunpack.c.l.b16 %v3742
      %v3779 = vunpack.c.l.b16 %v3745
      %v3780 = vpack.c.b16 %v3749, %v3748
      %v3781 = vpack.c.b16 %v3751, %v3750
      %v3782 = vpack.c.b16 %v3753, %v3752
      %v3783 = vpack.c.b16 %v3755, %v3754
      %v3784 = vpack.c.b16 %v3757, %v3756
      %v3785 = vpack.c.b16 %v3759, %v3758
      %v3786 = vpack.c.b16 %v3761, %v3760
      %v3787 = vpack.c.b16 %v3763, %v3762
      %v3788 = vpack.c.b16 %v3765, %v3764
      %v3789 = vpack.c.b16 %v3767, %v3766
      %v3790 = vpack.c.b16 %v3769, %v3768
      %v3791 = vpack.c.b16 %v3771, %v3770
      %v3792 = vpack.c.b16 %v3773, %v3772
      %v3793 = vpack.c.b16 %v3775, %v3774
      %v3794 = vpack.c.b16 %v3777, %v3776
      %v3795 = vpack.c.b16 %v3779, %v3778
      %v3797 = vsel %vm1523, %v3780, 0
      %v3800 = vsel %vm1523, %v3781, 0
      %v3803 = vsel %vm1523, %v3782, 0
      %v3806 = vsel %vm1523, %v3783, 0
      %v3809 = vsel %vm1523, %v3784, 0
      %v3812 = vsel %vm1523, %v3785, 0
      %v3815 = vsel %vm1523, %v3786, 0
      %v3818 = vsel %vm1523, %v3787, 0
      %v3821 = vsel %vm1523, %v3788, 0
      %v3824 = vsel %vm1523, %v3789, 0
      %v3827 = vsel %vm1523, %v3790, 0
      %v3830 = vsel %vm1523, %v3791, 0
      %v3833 = vsel %vm1523, %v3792, 0
      %v3836 = vsel %vm1523, %v3793, 0
      %v3839 = vsel %vm1523, %v3794, 0
      %v3842 = vsel %vm1523, %v3795, 0
      %v3845 = vsel %vm1572, %v3747, 0
      %3847 = vmatprep.subr.bf16.mxu0 0
      %3848 = vmatpush1.bf16.msra.mxu0 %v3845
      %3849 = vmatprep.subr.bf16.mxu0 0
      %3850 = vmatpush1.bf16.msra.mxu0 0
      %3851 = vmatprep.subr.bf16.mxu0 0
      %3852 = vmatpush1.bf16.msra.mxu0 0
      %3853 = vmatprep.subr.bf16.mxu0 0
      %3854 = vmatpush1.bf16.msra.mxu0 0
      %3855 = vmatprep.subr.bf16.mxu0 0
      %3856 = vmatpush1.bf16.msra.mxu0 0
      %3857 = vmatprep.subr.bf16.mxu0 0
      %3858 = vmatpush1.bf16.msra.mxu0 0
      %3859 = vmatprep.subr.bf16.mxu0 0
      %3860 = vmatpush1.bf16.msra.mxu0 0
      %3861 = vmatprep.subr.bf16.mxu0 0
      %3862 = vmatpush1.bf16.msra.mxu0 0
      %3863 = vmatprep.subr.bf16.mxu0 0
      %3864 = vmatpush1.bf16.msra.mxu0 0
      %3865 = vmatprep.subr.bf16.mxu0 0
      %3866 = vmatpush1.bf16.msra.mxu0 0
      %3867 = vmatprep.subr.bf16.mxu0 0
      %3868 = vmatpush1.bf16.msra.mxu0 0
      %3869 = vmatprep.subr.bf16.mxu0 0
      %3870 = vmatpush1.bf16.msra.mxu0 0
      %3871 = vmatprep.subr.bf16.mxu0 0
      %3872 = vmatpush1.bf16.msra.mxu0 0
      %3873 = vmatprep.subr.bf16.mxu0 0
      %3874 = vmatpush1.bf16.msra.mxu0 0
      %3875 = vmatprep.subr.bf16.mxu0 0
      %3876 = vmatpush1.bf16.msra.mxu0 0
      %3877 = vmatprep.subr.bf16.mxu0 0
      %3878 = vmatpush1.bf16.msra.mxu0 0
      %3879 = vmatprep.mubr.bf16.mxu0 0
      %3880 = vmatmul.mubr.bf16.gmra.mrb[0].mxu0 %v3797
      %v3881 = vpop.f32.mrb[0].mxu0
      %v3882 = vadd.f32 0.0, %v3881
      %v3883 = vpop.f32.mrb[0].mxu0
      %v3884 = vpop.f32.mrb[0].mxu0
      %v3885 = vadd.f32 0.0, %v3884
      %v3886 = vpop.f32.mrb[0].mxu0
      %3887 = vmatprep.mubr.bf16.mxu0 0
      %3888 = vmatmul.mubr.bf16.gmra.mrb[0].mxu0 %v3800
      %v3889 = vpop.f32.mrb[0].mxu0
      %v3890 = vadd.f32 0.0, %v3889
      %v3891 = vpop.f32.mrb[0].mxu0
      %v3892 = vpop.f32.mrb[0].mxu0
      %v3893 = vadd.f32 0.0, %v3892
      %v3894 = vpop.f32.mrb[0].mxu0
      %3895 = vmatprep.mubr.bf16.mxu0 0
      %3896 = vmatmul.mubr.bf16.gmra.mrb[0].mxu0 %v3803
      %v3897 = vpop.f32.mrb[0].mxu0
      %v3898 = vadd.f32 0.0, %v3897
      %v3899 = vpop.f32.mrb[0].mxu0
      %v3900 = vpop.f32.mrb[0].mxu0
      %v3901 = vadd.f32 0.0, %v3900
      %v3902 = vpop.f32.mrb[0].mxu0
      %3903 = vmatprep.mubr.bf16.mxu0 0
      %3904 = vmatmul.mubr.bf16.gmra.mrb[0].mxu0 %v3806
      %v3905 = vpop.f32.mrb[0].mxu0
      %v3906 = vadd.f32 0.0, %v3905
      %v3907 = vpop.f32.mrb[0].mxu0
      %v3908 = vpop.f32.mrb[0].mxu0
      %v3909 = vadd.f32 0.0, %v3908
      %v3910 = vpop.f32.mrb[0].mxu0
      %3911 = vmatprep.mubr.bf16.mxu0 0
      %3912 = vmatmul.mubr.bf16.gmra.mrb[0].mxu0 %v3809
      %v3913 = vpop.f32.mrb[0].mxu0
      %v3914 = vadd.f32 0.0, %v3913
      %v3915 = vpop.f32.mrb[0].mxu0
      %v3916 = vpop.f32.mrb[0].mxu0
      %v3917 = vadd.f32 0.0, %v3916
      %v3918 = vpop.f32.mrb[0].mxu0
      %3919 = vmatprep.mubr.bf16.mxu0 0
      %3920 = vmatmul.mubr.bf16.gmra.mrb[0].mxu0 %v3812
      %v3921 = vpop.f32.mrb[0].mxu0
      %v3922 = vadd.f32 0.0, %v3921
      %v3923 = vpop.f32.mrb[0].mxu0
      %v3924 = vpop.f32.mrb[0].mxu0
      %v3925 = vadd.f32 0.0, %v3924
      %v3926 = vpop.f32.mrb[0].mxu0
      %3927 = vmatprep.mubr.bf16.mxu0 0
      %3928 = vmatmul.mubr.bf16.gmra.mrb[0].mxu0 %v3815
      %v3929 = vpop.f32.mrb[0].mxu0
      %v3930 = vadd.f32 0.0, %v3929
      %v3931 = vpop.f32.mrb[0].mxu0
      %v3932 = vpop.f32.mrb[0].mxu0
      %v3933 = vadd.f32 0.0, %v3932
      %v3934 = vpop.f32.mrb[0].mxu0
      %3935 = vmatprep.mubr.bf16.mxu0 0
      %3936 = vmatmul.mubr.bf16.gmra.mrb[0].mxu0 %v3818
      %v3937 = vpop.f32.mrb[0].mxu0
      %v3938 = vadd.f32 0.0, %v3937
      %v3939 = vpop.f32.mrb[0].mxu0
      %v3940 = vpop.f32.mrb[0].mxu0
      %v3941 = vadd.f32 0.0, %v3940
      %v3942 = vpop.f32.mrb[0].mxu0
      %3943 = vmatprep.mubr.bf16.mxu0 0
      %3944 = vmatmul.mubr.bf16.gmra.mrb[0].mxu0 %v3821
      %v3945 = vpop.f32.mrb[0].mxu0
      %v3946 = vadd.f32 0.0, %v3945
      %v3947 = vpop.f32.mrb[0].mxu0
      %v3948 = vpop.f32.mrb[0].mxu0
      %v3949 = vadd.f32 0.0, %v3948
      %v3950 = vpop.f32.mrb[0].mxu0
      %3951 = vmatprep.mubr.bf16.mxu0 0
      %3952 = vmatmul.mubr.bf16.gmra.mrb[0].mxu0 %v3824
      %v3953 = vpop.f32.mrb[0].mxu0
      %v3954 = vadd.f32 0.0, %v3953
      %v3955 = vpop.f32.mrb[0].mxu0
      %v3956 = vpop.f32.mrb[0].mxu0
      %v3957 = vadd.f32 0.0, %v3956
      %v3958 = vpop.f32.mrb[0].mxu0
      %3959 = vmatprep.mubr.bf16.mxu0 0
      %3960 = vmatmul.mubr.bf16.gmra.mrb[0].mxu0 %v3827
      %v3961 = vpop.f32.mrb[0].mxu0
      %v3962 = vadd.f32 0.0, %v3961
      %v3963 = vpop.f32.mrb[0].mxu0
      %v3964 = vpop.f32.mrb[0].mxu0
      %v3965 = vadd.f32 0.0, %v3964
      %v3966 = vpop.f32.mrb[0].mxu0
      %3967 = vmatprep.mubr.bf16.mxu0 0
      %3968 = vmatmul.mubr.bf16.gmra.mrb[0].mxu0 %v3830
      %v3969 = vpop.f32.mrb[0].mxu0
      %v3970 = vadd.f32 0.0, %v3969
      %v3971 = vpop.f32.mrb[0].mxu0
      %v3972 = vpop.f32.mrb[0].mxu0
      %v3973 = vadd.f32 0.0, %v3972
      %v3974 = vpop.f32.mrb[0].mxu0
      %3975 = vmatprep.mubr.bf16.mxu0 0
      %3976 = vmatmul.mubr.bf16.gmra.mrb[0].mxu0 %v3833
      %v3977 = vpop.f32.mrb[0].mxu0
      %v3978 = vadd.f32 0.0, %v3977
      %v3979 = vpop.f32.mrb[0].mxu0
      %v3980 = vpop.f32.mrb[0].mxu0
      %v3981 = vadd.f32 0.0, %v3980
      %v3982 = vpop.f32.mrb[0].mxu0
      %3983 = vmatprep.mubr.bf16.mxu0 0
      %3984 = vmatmul.mubr.bf16.gmra.mrb[0].mxu0 %v3836
      %v3985 = vpop.f32.mrb[0].mxu0
      %v3986 = vadd.f32 0.0, %v3985
      %v3987 = vpop.f32.mrb[0].mxu0
      %v3988 = vpop.f32.mrb[0].mxu0
      %v3989 = vadd.f32 0.0, %v3988
      %v3990 = vpop.f32.mrb[0].mxu0
      %3991 = vmatprep.mubr.bf16.mxu0 0
      %3992 = vmatmul.mubr.bf16.gmra.mrb[0].mxu0 %v3839
      %v3993 = vpop.f32.mrb[0].mxu0
      %v3994 = vadd.f32 0.0, %v3993
      %v3995 = vpop.f32.mrb[0].mxu0
      %v3996 = vpop.f32.mrb[0].mxu0
      %v3997 = vadd.f32 0.0, %v3996
      %v3998 = vpop.f32.mrb[0].mxu0
      %3999 = vmatprep.mubr.bf16.mxu0 0
      %4000 = vmatmul.mubr.bf16.gmra.mrb[0].mxu0 %v3842
      %v4001 = vpop.f32.mrb[0].mxu0
      %v4002 = vadd.f32 0.0, %v4001
      %v4003 = vpop.f32.mrb[0].mxu0
      %v4004 = vpop.f32.mrb[0].mxu0
      %v4005 = vadd.f32 0.0, %v4004
      %v4006 = vpop.f32.mrb[0].mxu0
      %4007 = vdwg.mxu0
      %v4008 = vadd.f32 %v3538, %v3882
      %v4009 = vadd.f32 %v3539, %v3885
      %v4010 = vadd.f32 %v3540, %v3890
      %v4011 = vadd.f32 %v3541, %v3893
      %v4012 = vadd.f32 %v3542, %v3898
      %v4013 = vadd.f32 %v3543, %v3901
      %v4014 = vadd.f32 %v3544, %v3906
      %v4015 = vadd.f32 %v3545, %v3909
      %v4016 = vadd.f32 %v3546, %v3914
      %v4017 = vadd.f32 %v3547, %v3917
      %v4018 = vadd.f32 %v3548, %v3922
      %v4019 = vadd.f32 %v3549, %v3925
      %v4020 = vadd.f32 %v3550, %v3930
      %v4021 = vadd.f32 %v3551, %v3933
      %v4022 = vadd.f32 %v3552, %v3938
      %v4023 = vadd.f32 %v3553, %v3941
      %v4024 = vadd.f32 %v3554, %v3946
      %v4025 = vadd.f32 %v3555, %v3949
      %v4026 = vadd.f32 %v3556, %v3954
      %v4027 = vadd.f32 %v3557, %v3957
      %v4028 = vadd.f32 %v3558, %v3962
      %v4029 = vadd.f32 %v3559, %v3965
      %v4030 = vadd.f32 %v3560, %v3970
      %v4031 = vadd.f32 %v3561, %v3973
      %v4032 = vadd.f32 %v3562, %v3978
      %v4033 = vadd.f32 %v3563, %v3981
      %v4034 = vadd.f32 %v3564, %v3986
      %v4035 = vadd.f32 %v3565, %v3989
      %v4036 = vadd.f32 %v3566, %v3994
      %v4037 = vadd.f32 %v3567, %v3997
      %v4038 = vadd.f32 %v3568, %v4002
      %v4039 = vadd.f32 %v3569, %v4005
      %s4040 = scalar_lea.vmem [#allocation2], 24
      %v4041 = vld [vmem:[%s4040] sm:$0xf]
      %v4042 = vld [vmem:[%s4040 + $0x4] sm:$0xf]
      %v4043 = vld [vmem:[%s4040 + $0xc] sm:$0xf]
      %v4044 = vld [vmem:[%s4040 + $0x10] sm:$0xf]
      %v4045 = vld [vmem:[%s4040 + $0x18] sm:$0xf]
      %v4046 = vld [vmem:[%s4040 + $0x1c] sm:$0xf]
      %v4047 = vld [vmem:[%s4040 + $0x24] sm:$0xf]
      %v4048 = vld [vmem:[%s4040 + $0x28] sm:$0xf]
      %v4049 = vld [vmem:[%s4040 + $0x30] sm:$0xf]
      %v4050 = vld [vmem:[%s4040 + $0x34] sm:$0xf]
      %v4051 = vld [vmem:[%s4040 + $0x3c] sm:$0xf]
      %v4052 = vld [vmem:[%s4040 + $0x40] sm:$0xf]
      %v4053 = vld [vmem:[%s4040 + $0x48] sm:$0xf]
      %v4054 = vld [vmem:[%s4040 + $0x4c] sm:$0xf]
      %v4055 = vld [vmem:[%s4040 + $0x54] sm:$0xf]
      %v4056 = vld [vmem:[%s4040 + $0x58] sm:$0xf]
      %v4057 = vld [vmem:[%s4040 + $0x60] sm:$0xf]
      %v4058 = vld [vmem:[%s4040 + $0x64] sm:$0xf]
      %v4059 = vld [vmem:[%s4040 + $0x6c] sm:$0xf]
      %v4060 = vld [vmem:[%s4040 + $0x70] sm:$0xf]
      %v4061 = vld [vmem:[%s4040 + $0x78] sm:$0xf]
      %v4062 = vld [vmem:[%s4040 + $0x7c] sm:$0xf]
      %v4063 = vld [vmem:[%s4040 + $0x84] sm:$0xf]
      %v4064 = vld [vmem:[%s4040 + $0x88] sm:$0xf]
      %v4065 = vld [vmem:[%s4040 + $0x90] sm:$0xf]
      %v4066 = vld [vmem:[%s4040 + $0x94] sm:$0xf]
      %v4067 = vld [vmem:[%s4040 + $0x9c] sm:$0xf]
      %v4068 = vld [vmem:[%s4040 + $0xa0] sm:$0xf]
      %v4069 = vld [vmem:[%s4040 + $0xa8] sm:$0xf]
      %v4070 = vld [vmem:[%s4040 + $0xac] sm:$0xf]
      %v4071 = vld [vmem:[%s4040 + $0xb4] sm:$0xf]
      %v4072 = vld [vmem:[%s4040 + $0xb8] sm:$0xf]
      %s4073 = scalar_lea.vmem %s3, 12
      %v4074 = vld [vmem:[%s4073] sm:$0x3]
      %v4107 = vunpack.c.l.b16 %v4041
      %v4108 = vunpack.c.l.b16 %v4042
      %v4109 = vunpack.c.l.b16 %v4043
      %v4110 = vunpack.c.l.b16 %v4044
      %v4111 = vunpack.c.l.b16 %v4045
      %v4112 = vunpack.c.l.b16 %v4046
      %v4113 = vunpack.c.l.b16 %v4047
      %v4114 = vunpack.c.l.b16 %v4048
      %v4115 = vunpack.c.l.b16 %v4049
      %v4116 = vunpack.c.l.b16 %v4050
      %v4117 = vunpack.c.l.b16 %v4051
      %v4118 = vunpack.c.l.b16 %v4052
      %v4119 = vunpack.c.l.b16 %v4053
      %v4120 = vunpack.c.l.b16 %v4054
      %v4121 = vunpack.c.l.b16 %v4055
      %v4122 = vunpack.c.l.b16 %v4056
      %v4123 = vunpack.c.l.b16 %v4057
      %v4124 = vunpack.c.l.b16 %v4058
      %v4125 = vunpack.c.l.b16 %v4059
      %v4126 = vunpack.c.l.b16 %v4060
      %v4127 = vunpack.c.l.b16 %v4061
      %v4128 = vunpack.c.l.b16 %v4062
      %v4129 = vunpack.c.l.b16 %v4063
      %v4130 = vunpack.c.l.b16 %v4064
      %v4131 = vunpack.c.l.b16 %v4065
      %v4132 = vunpack.c.l.b16 %v4066
      %v4133 = vunpack.c.l.b16 %v4067
      %v4134 = vunpack.c.l.b16 %v4068
      %v4135 = vunpack.c.l.b16 %v4069
      %v4136 = vunpack.c.l.b16 %v4070
      %v4137 = vunpack.c.l.b16 %v4071
      %v4138 = vunpack.c.l.b16 %v4072
      %v4139 = vpack.c.b16 %v4108, %v4107
      %v4140 = vpack.c.b16 %v4110, %v4109
      %v4141 = vpack.c.b16 %v4112, %v4111
      %v4142 = vpack.c.b16 %v4114, %v4113
      %v4143 = vpack.c.b16 %v4116, %v4115
      %v4144 = vpack.c.b16 %v4118, %v4117
      %v4145 = vpack.c.b16 %v4120, %v4119
      %v4146 = vpack.c.b16 %v4122, %v4121
      %v4147 = vpack.c.b16 %v4124, %v4123
      %v4148 = vpack.c.b16 %v4126, %v4125
      %v4149 = vpack.c.b16 %v4128, %v4127
      %v4150 = vpack.c.b16 %v4130, %v4129
      %v4151 = vpack.c.b16 %v4132, %v4131
      %v4152 = vpack.c.b16 %v4134, %v4133
      %v4153 = vpack.c.b16 %v4136, %v4135
      %v4154 = vpack.c.b16 %v4138, %v4137
      %v4156 = vsel %vm1523, %v4139, 0
      %v4159 = vsel %vm1523, %v4140, 0
      %v4162 = vsel %vm1523, %v4141, 0
      %v4165 = vsel %vm1523, %v4142, 0
      %v4168 = vsel %vm1523, %v4143, 0
      %v4171 = vsel %vm1523, %v4144, 0
      %v4174 = vsel %vm1523, %v4145, 0
      %v4177 = vsel %vm1523, %v4146, 0
      %v4180 = vsel %vm1523, %v4147, 0
      %v4183 = vsel %vm1523, %v4148, 0
      %v4186 = vsel %vm1523, %v4149, 0
      %v4189 = vsel %vm1523, %v4150, 0
      %v4192 = vsel %vm1523, %v4151, 0
      %v4195 = vsel %vm1523, %v4152, 0
      %v4198 = vsel %vm1523, %v4153, 0
      %v4201 = vsel %vm1523, %v4154, 0
      %v4204 = vsel %vm1572, %v4074, 0
      %4206 = vmatprep.subr.bf16.mxu0 0
      %4207 = vmatpush1.bf16.msra.mxu0 %v4204
      %4208 = vmatprep.subr.bf16.mxu0 0
      %4209 = vmatpush1.bf16.msra.mxu0 0
      %4210 = vmatprep.subr.bf16.mxu0 0
      %4211 = vmatpush1.bf16.msra.mxu0 0
      %4212 = vmatprep.subr.bf16.mxu0 0
      %4213 = vmatpush1.bf16.msra.mxu0 0
      %4214 = vmatprep.subr.bf16.mxu0 0
      %4215 = vmatpush1.bf16.msra.mxu0 0
      %4216 = vmatprep.subr.bf16.mxu0 0
      %4217 = vmatpush1.bf16.msra.mxu0 0
      %4218 = vmatprep.subr.bf16.mxu0 0
      %4219 = vmatpush1.bf16.msra.mxu0 0
      %4220 = vmatprep.subr.bf16.mxu0 0
      %4221 = vmatpush1.bf16.msra.mxu0 0
      %4222 = vmatprep.subr.bf16.mxu0 0
      %4223 = vmatpush1.bf16.msra.mxu0 0
      %4224 = vmatprep.subr.bf16.mxu0 0
      %4225 = vmatpush1.bf16.msra.mxu0 0
      %4226 = vmatprep.subr.bf16.mxu0 0
      %4227 = vmatpush1.bf16.msra.mxu0 0
      %4228 = vmatprep.subr.bf16.mxu0 0
      %4229 = vmatpush1.bf16.msra.mxu0 0
      %4230 = vmatprep.subr.bf16.mxu0 0
      %4231 = vmatpush1.bf16.msra.mxu0 0
      %4232 = vmatprep.subr.bf16.mxu0 0
      %4233 = vmatpush1.bf16.msra.mxu0 0
      %4234 = vmatprep.subr.bf16.mxu0 0
      %4235 = vmatpush1.bf16.msra.mxu0 0
      %4236 = vmatprep.subr.bf16.mxu0 0
      %4237 = vmatpush1.bf16.msra.mxu0 0
      %4238 = vmatprep.mubr.bf16.mxu0 0
      %4239 = vmatmul.mubr.bf16.gmra.mrb[0].mxu0 %v4156
      %v4240 = vpop.f32.mrb[0].mxu0
      %v4241 = vadd.f32 0.0, %v4240
      %v4242 = vpop.f32.mrb[0].mxu0
      %v4243 = vpop.f32.mrb[0].mxu0
      %v4244 = vadd.f32 0.0, %v4243
      %v4245 = vpop.f32.mrb[0].mxu0
      %4246 = vmatprep.mubr.bf16.mxu0 0
      %4247 = vmatmul.mubr.bf16.gmra.mrb[0].mxu0 %v4159
      %v4248 = vpop.f32.mrb[0].mxu0
      %v4249 = vadd.f32 0.0, %v4248
      %v4250 = vpop.f32.mrb[0].mxu0
      %v4251 = vpop.f32.mrb[0].mxu0
      %v4252 = vadd.f32 0.0, %v4251
      %v4253 = vpop.f32.mrb[0].mxu0
      %4254 = vmatprep.mubr.bf16.mxu0 0
      %4255 = vmatmul.mubr.bf16.gmra.mrb[0].mxu0 %v4162
      %v4256 = vpop.f32.mrb[0].mxu0
      %v4257 = vadd.f32 0.0, %v4256
      %v4258 = vpop.f32.mrb[0].mxu0
      %v4259 = vpop.f32.mrb[0].mxu0
      %v4260 = vadd.f32 0.0, %v4259
      %v4261 = vpop.f32.mrb[0].mxu0
      %4262 = vmatprep.mubr.bf16.mxu0 0
      %4263 = vmatmul.mubr.bf16.gmra.mrb[0].mxu0 %v4165
      %v4264 = vpop.f32.mrb[0].mxu0
      %v4265 = vadd.f32 0.0, %v4264
      %v4266 = vpop.f32.mrb[0].mxu0
      %v4267 = vpop.f32.mrb[0].mxu0
      %v4268 = vadd.f32 0.0, %v4267
      %v4269 = vpop.f32.mrb[0].mxu0
      %4270 = vmatprep.mubr.bf16.mxu0 0
      %4271 = vmatmul.mubr.bf16.gmra.mrb[0].mxu0 %v4168
      %v4272 = vpop.f32.mrb[0].mxu0
      %v4273 = vadd.f32 0.0, %v4272
      %v4274 = vpop.f32.mrb[0].mxu0
      %v4275 = vpop.f32.mrb[0].mxu0
      %v4276 = vadd.f32 0.0, %v4275
      %v4277 = vpop.f32.mrb[0].mxu0
      %4278 = vmatprep.mubr.bf16.mxu0 0
      %4279 = vmatmul.mubr.bf16.gmra.mrb[0].mxu0 %v4171
      %v4280 = vpop.f32.mrb[0].mxu0
      %v4281 = vadd.f32 0.0, %v4280
      %v4282 = vpop.f32.mrb[0].mxu0
      %v4283 = vpop.f32.mrb[0].mxu0
      %v4284 = vadd.f32 0.0, %v4283
      %v4285 = vpop.f32.mrb[0].mxu0
      %4286 = vmatprep.mubr.bf16.mxu0 0
      %4287 = vmatmul.mubr.bf16.gmra.mrb[0].mxu0 %v4174
      %v4288 = vpop.f32.mrb[0].mxu0
      %v4289 = vadd.f32 0.0, %v4288
      %v4290 = vpop.f32.mrb[0].mxu0
      %v4291 = vpop.f32.mrb[0].mxu0
      %v4292 = vadd.f32 0.0, %v4291
      %v4293 = vpop.f32.mrb[0].mxu0
      %4294 = vmatprep.mubr.bf16.mxu0 0
      %4295 = vmatmul.mubr.bf16.gmra.mrb[0].mxu0 %v4177
      %v4296 = vpop.f32.mrb[0].mxu0
      %v4297 = vadd.f32 0.0, %v4296
      %v4298 = vpop.f32.mrb[0].mxu0
      %v4299 = vpop.f32.mrb[0].mxu0
      %v4300 = vadd.f32 0.0, %v4299
      %v4301 = vpop.f32.mrb[0].mxu0
      %4302 = vmatprep.mubr.bf16.mxu0 0
      %4303 = vmatmul.mubr.bf16.gmra.mrb[0].mxu0 %v4180
      %v4304 = vpop.f32.mrb[0].mxu0
      %v4305 = vadd.f32 0.0, %v4304
      %v4306 = vpop.f32.mrb[0].mxu0
      %v4307 = vpop.f32.mrb[0].mxu0
      %v4308 = vadd.f32 0.0, %v4307
      %v4309 = vpop.f32.mrb[0].mxu0
      %4310 = vmatprep.mubr.bf16.mxu0 0
      %4311 = vmatmul.mubr.bf16.gmra.mrb[0].mxu0 %v4183
      %v4312 = vpop.f32.mrb[0].mxu0
      %v4313 = vadd.f32 0.0, %v4312
      %v4314 = vpop.f32.mrb[0].mxu0
      %v4315 = vpop.f32.mrb[0].mxu0
      %v4316 = vadd.f32 0.0, %v4315
      %v4317 = vpop.f32.mrb[0].mxu0
      %4318 = vmatprep.mubr.bf16.mxu0 0
      %4319 = vmatmul.mubr.bf16.gmra.mrb[0].mxu0 %v4186
      %v4320 = vpop.f32.mrb[0].mxu0
      %v4321 = vadd.f32 0.0, %v4320
      %v4322 = vpop.f32.mrb[0].mxu0
      %v4323 = vpop.f32.mrb[0].mxu0
      %v4324 = vadd.f32 0.0, %v4323
      %v4325 = vpop.f32.mrb[0].mxu0
      %4326 = vmatprep.mubr.bf16.mxu0 0
      %4327 = vmatmul.mubr.bf16.gmra.mrb[0].mxu0 %v4189
      %v4328 = vpop.f32.mrb[0].mxu0
      %v4329 = vadd.f32 0.0, %v4328
      %v4330 = vpop.f32.mrb[0].mxu0
      %v4331 = vpop.f32.mrb[0].mxu0
      %v4332 = vadd.f32 0.0, %v4331
      %v4333 = vpop.f32.mrb[0].mxu0
      %4334 = vmatprep.mubr.bf16.mxu0 0
      %4335 = vmatmul.mubr.bf16.gmra.mrb[0].mxu0 %v4192
      %v4336 = vpop.f32.mrb[0].mxu0
      %v4337 = vadd.f32 0.0, %v4336
      %v4338 = vpop.f32.mrb[0].mxu0
      %v4339 = vpop.f32.mrb[0].mxu0
      %v4340 = vadd.f32 0.0, %v4339
      %v4341 = vpop.f32.mrb[0].mxu0
      %4342 = vmatprep.mubr.bf16.mxu0 0
      %4343 = vmatmul.mubr.bf16.gmra.mrb[0].mxu0 %v4195
      %v4344 = vpop.f32.mrb[0].mxu0
      %v4345 = vadd.f32 0.0, %v4344
      %v4346 = vpop.f32.mrb[0].mxu0
      %v4347 = vpop.f32.mrb[0].mxu0
      %v4348 = vadd.f32 0.0, %v4347
      %v4349 = vpop.f32.mrb[0].mxu0
      %4350 = vmatprep.mubr.bf16.mxu0 0
      %4351 = vmatmul.mubr.bf16.gmra.mrb[0].mxu0 %v4198
      %v4352 = vpop.f32.mrb[0].mxu0
      %v4353 = vadd.f32 0.0, %v4352
      %v4354 = vpop.f32.mrb[0].mxu0
      %v4355 = vpop.f32.mrb[0].mxu0
      %v4356 = vadd.f32 0.0, %v4355
      %v4357 = vpop.f32.mrb[0].mxu0
      %4358 = vmatprep.mubr.bf16.mxu0 0
      %4359 = vmatmul.mubr.bf16.gmra.mrb[0].mxu0 %v4201
      %v4360 = vpop.f32.mrb[0].mxu0
      %v4361 = vadd.f32 0.0, %v4360
      %v4362 = vpop.f32.mrb[0].mxu0
      %v4363 = vpop.f32.mrb[0].mxu0
      %v4364 = vadd.f32 0.0, %v4363
      %v4365 = vpop.f32.mrb[0].mxu0
      %4366 = vdwg.mxu0
      %v4367 = vadd.f32 %v4008, %v4241
      %v4368 = vadd.f32 %v4009, %v4244
      %v4369 = vadd.f32 %v4010, %v4249
      %v4370 = vadd.f32 %v4011, %v4252
      %v4371 = vadd.f32 %v4012, %v4257
      %v4372 = vadd.f32 %v4013, %v4260
      %v4373 = vadd.f32 %v4014, %v4265
      %v4374 = vadd.f32 %v4015, %v4268
      %v4375 = vadd.f32 %v4016, %v4273
      %v4376 = vadd.f32 %v4017, %v4276
      %v4377 = vadd.f32 %v4018, %v4281
      %v4378 = vadd.f32 %v4019, %v4284
      %v4379 = vadd.f32 %v4020, %v4289
      %v4380 = vadd.f32 %v4021, %v4292
      %v4381 = vadd.f32 %v4022, %v4297
      %v4382 = vadd.f32 %v4023, %v4300
      %v4383 = vadd.f32 %v4024, %v4305
      %v4384 = vadd.f32 %v4025, %v4308
      %v4385 = vadd.f32 %v4026, %v4313
      %v4386 = vadd.f32 %v4027, %v4316
      %v4387 = vadd.f32 %v4028, %v4321
      %v4388 = vadd.f32 %v4029, %v4324
      %v4389 = vadd.f32 %v4030, %v4329
      %v4390 = vadd.f32 %v4031, %v4332
      %v4391 = vadd.f32 %v4032, %v4337
      %v4392 = vadd.f32 %v4033, %v4340
      %v4393 = vadd.f32 %v4034, %v4345
      %v4394 = vadd.f32 %v4035, %v4348
      %v4395 = vadd.f32 %v4036, %v4353
      %v4396 = vadd.f32 %v4037, %v4356
      %v4397 = vadd.f32 %v4038, %v4361
      %v4398 = vadd.f32 %v4039, %v4364
      %v4399 = vld [vmem:[%s4040] sm:$0xf]
      %v4400 = vld [vmem:[%s4040 + $0x4] sm:$0xf]
      %v4401 = vld [vmem:[%s4040 + $0x8] sm:$0x1]
      %v4402 = vld [vmem:[%s4040 + $0xc] sm:$0xf]
      %v4403 = vld [vmem:[%s4040 + $0x10] sm:$0xf]
      %v4404 = vld [vmem:[%s4040 + $0x14] sm:$0x1]
      %v4405 = vld [vmem:[%s4040 + $0x18] sm:$0xf]
      %v4406 = vld [vmem:[%s4040 + $0x1c] sm:$0xf]
      %v4407 = vld [vmem:[%s4040 + $0x20] sm:$0x1]
      %v4408 = vld [vmem:[%s4040 + $0x24] sm:$0xf]
      %v4409 = vld [vmem:[%s4040 + $0x28] sm:$0xf]
      %v4410 = vld [vmem:[%s4040 + $0x2c] sm:$0x1]
      %v4411 = vld [vmem:[%s4040 + $0x30] sm:$0xf]
      %v4412 = vld [vmem:[%s4040 + $0x34] sm:$0xf]
      %v4413 = vld [vmem:[%s4040 + $0x38] sm:$0x1]
      %v4414 = vld [vmem:[%s4040 + $0x3c] sm:$0xf]
      %v4415 = vld [vmem:[%s4040 + $0x40] sm:$0xf]
      %v4416 = vld [vmem:[%s4040 + $0x44] sm:$0x1]
      %v4417 = vld [vmem:[%s4040 + $0x48] sm:$0xf]
      %v4418 = vld [vmem:[%s4040 + $0x4c] sm:$0xf]
      %v4419 = vld [vmem:[%s4040 + $0x50] sm:$0x1]
      %v4420 = vld [vmem:[%s4040 + $0x54] sm:$0xf]
      %v4421 = vld [vmem:[%s4040 + $0x58] sm:$0xf]
      %v4422 = vld [vmem:[%s4040 + $0x5c] sm:$0x1]
      %v4423 = vld [vmem:[%s4040 + $0x60] sm:$0xf]
      %v4424 = vld [vmem:[%s4040 + $0x64] sm:$0xf]
      %v4425 = vld [vmem:[%s4040 + $0x68] sm:$0x1]
      %v4426 = vld [vmem:[%s4040 + $0x6c] sm:$0xf]
      %v4427 = vld [vmem:[%s4040 + $0x70] sm:$0xf]
      %v4428 = vld [vmem:[%s4040 + $0x74] sm:$0x1]
      %v4429 = vld [vmem:[%s4040 + $0x78] sm:$0xf]
      %v4430 = vld [vmem:[%s4040 + $0x7c] sm:$0xf]
      %v4431 = vld [vmem:[%s4040 + $0x80] sm:$0x1]
      %v4432 = vld [vmem:[%s4040 + $0x84] sm:$0xf]
      %v4433 = vld [vmem:[%s4040 + $0x88] sm:$0xf]
      %v4434 = vld [vmem:[%s4040 + $0x8c] sm:$0x1]
      %v4435 = vld [vmem:[%s4040 + $0x90] sm:$0xf]
      %v4436 = vld [vmem:[%s4040 + $0x94] sm:$0xf]
      %v4437 = vld [vmem:[%s4040 + $0x98] sm:$0x1]
      %v4438 = vld [vmem:[%s4040 + $0x9c] sm:$0xf]
      %v4439 = vld [vmem:[%s4040 + $0xa0] sm:$0xf]
      %v4440 = vld [vmem:[%s4040 + $0xa4] sm:$0x1]
      %v4441 = vld [vmem:[%s4040 + $0xa8] sm:$0xf]
      %v4442 = vld [vmem:[%s4040 + $0xac] sm:$0xf]
      %v4443 = vld [vmem:[%s4040 + $0xb0] sm:$0x1]
      %v4444 = vld [vmem:[%s4040 + $0xb4] sm:$0xf]
      %v4445 = vld [vmem:[%s4040 + $0xb8] sm:$0xf]
      %v4446 = vld [vmem:[%s4040 + $0xbc] sm:$0x1]
      %v4448 = vshrl.u32 %v4399, 16
      %v4450 = vrot.slane %v4448, 4
      %v4451 = vshll.u32 %v4399, 16
      %v4453 = vrot.slane %v4451, 5
      %v4454 = vor.u32 %v4450, %v4453
      %v4455 = vrot.slane %v4454, 4
      %v4457 = vshll.u32 %v4400, 16
      %v4459 = vrot.slane %v4457, 5
      %v4460 = vsel %vm1088, %v4455, %v4459
      %v4461 = vshrl.u32 %v4400, 16
      %v4463 = vrot.slane %v4461, 4
      %v4464 = vor.u32 %v4463, %v4459
      %v4465 = vrot.slane %v4464, 4
      %v4467 = vshll.u32 %v4401, 16
      %v4469 = vrot.slane %v4467, 5
      %v4470 = vsel %vm1088, %v4465, %v4469
      %v4472 = vshrl.u32 %v4402, 16
      %v4474 = vrot.slane %v4472, 4
      %v4475 = vshll.u32 %v4402, 16
      %v4477 = vrot.slane %v4475, 5
      %v4478 = vor.u32 %v4474, %v4477
      %v4479 = vrot.slane %v4478, 4
      %v4481 = vshll.u32 %v4403, 16
      %v4483 = vrot.slane %v4481, 5
      %v4484 = vsel %vm1088, %v4479, %v4483
      %v4485 = vshrl.u32 %v4403, 16
      %v4487 = vrot.slane %v4485, 4
      %v4488 = vor.u32 %v4487, %v4483
      %v4489 = vrot.slane %v4488, 4
      %v4491 = vshll.u32 %v4404, 16
      %v4493 = vrot.slane %v4491, 5
      %v4494 = vsel %vm1088, %v4489, %v4493
      %v4496 = vshrl.u32 %v4405, 16
      %v4498 = vrot.slane %v4496, 4
      %v4499 = vshll.u32 %v4405, 16
      %v4501 = vrot.slane %v4499, 5
      %v4502 = vor.u32 %v4498, %v4501
      %v4503 = vrot.slane %v4502, 4
      %v4505 = vshll.u32 %v4406, 16
      %v4507 = vrot.slane %v4505, 5
      %v4508 = vsel %vm1088, %v4503, %v4507
      %v4509 = vshrl.u32 %v4406, 16
      %v4511 = vrot.slane %v4509, 4
      %v4512 = vor.u32 %v4511, %v4507
      %v4513 = vrot.slane %v4512, 4
      %v4515 = vshll.u32 %v4407, 16
      %v4517 = vrot.slane %v4515, 5
      %v4518 = vsel %vm1088, %v4513, %v4517
      %v4520 = vshrl.u32 %v4408, 16
      %v4522 = vrot.slane %v4520, 4
      %v4523 = vshll.u32 %v4408, 16
      %v4525 = vrot.slane %v4523, 5
      %v4526 = vor.u32 %v4522, %v4525
      %v4527 = vrot.slane %v4526, 4
      %v4529 = vshll.u32 %v4409, 16
      %v4531 = vrot.slane %v4529, 5
      %v4532 = vsel %vm1088, %v4527, %v4531
      %v4533 = vshrl.u32 %v4409, 16
      %v4535 = vrot.slane %v4533, 4
      %v4536 = vor.u32 %v4535, %v4531
      %v4537 = vrot.slane %v4536, 4
      %v4539 = vshll.u32 %v4410, 16
      %v4541 = vrot.slane %v4539, 5
      %v4542 = vsel %vm1088, %v4537, %v4541
      %v4544 = vshrl.u32 %v4411, 16
      %v4546 = vrot.slane %v4544, 4
      %v4547 = vshll.u32 %v4411, 16
      %v4549 = vrot.slane %v4547, 5
      %v4550 = vor.u32 %v4546, %v4549
      %v4551 = vrot.slane %v4550, 4
      %v4553 = vshll.u32 %v4412, 16
      %v4555 = vrot.slane %v4553, 5
      %v4556 = vsel %vm1088, %v4551, %v4555
      %v4557 = vshrl.u32 %v4412, 16
      %v4559 = vrot.slane %v4557, 4
      %v4560 = vor.u32 %v4559, %v4555
      %v4561 = vrot.slane %v4560, 4
      %v4563 = vshll.u32 %v4413, 16
      %v4565 = vrot.slane %v4563, 5
      %v4566 = vsel %vm1088, %v4561, %v4565
      %v4568 = vshrl.u32 %v4414, 16
      %v4570 = vrot.slane %v4568, 4
      %v4571 = vshll.u32 %v4414, 16
      %v4573 = vrot.slane %v4571, 5
      %v4574 = vor.u32 %v4570, %v4573
      %v4575 = vrot.slane %v4574, 4
      %v4577 = vshll.u32 %v4415, 16
      %v4579 = vrot.slane %v4577, 5
      %v4580 = vsel %vm1088, %v4575, %v4579
      %v4581 = vshrl.u32 %v4415, 16
      %v4583 = vrot.slane %v4581, 4
      %v4584 = vor.u32 %v4583, %v4579
      %v4585 = vrot.slane %v4584, 4
      %v4587 = vshll.u32 %v4416, 16
      %v4589 = vrot.slane %v4587, 5
      %v4590 = vsel %vm1088, %v4585, %v4589
      %v4592 = vshrl.u32 %v4417, 16
      %v4594 = vrot.slane %v4592, 4
      %v4595 = vshll.u32 %v4417, 16
      %v4597 = vrot.slane %v4595, 5
      %v4598 = vor.u32 %v4594, %v4597
      %v4599 = vrot.slane %v4598, 4
      %v4601 = vshll.u32 %v4418, 16
      %v4603 = vrot.slane %v4601, 5
      %v4604 = vsel %vm1088, %v4599, %v4603
      %v4605 = vshrl.u32 %v4418, 16
      %v4607 = vrot.slane %v4605, 4
      %v4608 = vor.u32 %v4607, %v4603
      %v4609 = vrot.slane %v4608, 4
      %v4611 = vshll.u32 %v4419, 16
      %v4613 = vrot.slane %v4611, 5
      %v4614 = vsel %vm1088, %v4609, %v4613
      %v4616 = vshrl.u32 %v4420, 16
      %v4618 = vrot.slane %v4616, 4
      %v4619 = vshll.u32 %v4420, 16
      %v4621 = vrot.slane %v4619, 5
      %v4622 = vor.u32 %v4618, %v4621
      %v4623 = vrot.slane %v4622, 4
      %v4625 = vshll.u32 %v4421, 16
      %v4627 = vrot.slane %v4625, 5
      %v4628 = vsel %vm1088, %v4623, %v4627
      %v4629 = vshrl.u32 %v4421, 16
      %v4631 = vrot.slane %v4629, 4
      %v4632 = vor.u32 %v4631, %v4627
      %v4633 = vrot.slane %v4632, 4
      %v4635 = vshll.u32 %v4422, 16
      %v4637 = vrot.slane %v4635, 5
      %v4638 = vsel %vm1088, %v4633, %v4637
      %v4640 = vshrl.u32 %v4423, 16
      %v4642 = vrot.slane %v4640, 4
      %v4643 = vshll.u32 %v4423, 16
      %v4645 = vrot.slane %v4643, 5
      %v4646 = vor.u32 %v4642, %v4645
      %v4647 = vrot.slane %v4646, 4
      %v4649 = vshll.u32 %v4424, 16
      %v4651 = vrot.slane %v4649, 5
      %v4652 = vsel %vm1088, %v4647, %v4651
      %v4653 = vshrl.u32 %v4424, 16
      %v4655 = vrot.slane %v4653, 4
      %v4656 = vor.u32 %v4655, %v4651
      %v4657 = vrot.slane %v4656, 4
      %v4659 = vshll.u32 %v4425, 16
      %v4661 = vrot.slane %v4659, 5
      %v4662 = vsel %vm1088, %v4657, %v4661
      %v4664 = vshrl.u32 %v4426, 16
      %v4666 = vrot.slane %v4664, 4
      %v4667 = vshll.u32 %v4426, 16
      %v4669 = vrot.slane %v4667, 5
      %v4670 = vor.u32 %v4666, %v4669
      %v4671 = vrot.slane %v4670, 4
      %v4673 = vshll.u32 %v4427, 16
      %v4675 = vrot.slane %v4673, 5
      %v4676 = vsel %vm1088, %v4671, %v4675
      %v4677 = vshrl.u32 %v4427, 16
      %v4679 = vrot.slane %v4677, 4
      %v4680 = vor.u32 %v4679, %v4675
      %v4681 = vrot.slane %v4680, 4
      %v4683 = vshll.u32 %v4428, 16
      %v4685 = vrot.slane %v4683, 5
      %v4686 = vsel %vm1088, %v4681, %v4685
      %v4688 = vshrl.u32 %v4429, 16
      %v4690 = vrot.slane %v4688, 4
      %v4691 = vshll.u32 %v4429, 16
      %v4693 = vrot.slane %v4691, 5
      %v4694 = vor.u32 %v4690, %v4693
      %v4695 = vrot.slane %v4694, 4
      %v4697 = vshll.u32 %v4430, 16
      %v4699 = vrot.slane %v4697, 5
      %v4700 = vsel %vm1088, %v4695, %v4699
      %v4701 = vshrl.u32 %v4430, 16
      %v4703 = vrot.slane %v4701, 4
      %v4704 = vor.u32 %v4703, %v4699
      %v4705 = vrot.slane %v4704, 4
      %v4707 = vshll.u32 %v4431, 16
      %v4709 = vrot.slane %v4707, 5
      %v4710 = vsel %vm1088, %v4705, %v4709
      %v4712 = vshrl.u32 %v4432, 16
      %v4714 = vrot.slane %v4712, 4
      %v4715 = vshll.u32 %v4432, 16
      %v4717 = vrot.slane %v4715, 5
      %v4718 = vor.u32 %v4714, %v4717
      %v4719 = vrot.slane %v4718, 4
      %v4721 = vshll.u32 %v4433, 16
      %v4723 = vrot.slane %v4721, 5
      %v4724 = vsel %vm1088, %v4719, %v4723
      %v4725 = vshrl.u32 %v4433, 16
      %v4727 = vrot.slane %v4725, 4
      %v4728 = vor.u32 %v4727, %v4723
      %v4729 = vrot.slane %v4728, 4
      %v4731 = vshll.u32 %v4434, 16
      %v4733 = vrot.slane %v4731, 5
      %v4734 = vsel %vm1088, %v4729, %v4733
      %v4736 = vshrl.u32 %v4435, 16
      %v4738 = vrot.slane %v4736, 4
      %v4739 = vshll.u32 %v4435, 16
      %v4741 = vrot.slane %v4739, 5
      %v4742 = vor.u32 %v4738, %v4741
      %v4743 = vrot.slane %v4742, 4
      %v4745 = vshll.u32 %v4436, 16
      %v4747 = vrot.slane %v4745, 5
      %v4748 = vsel %vm1088, %v4743, %v4747
      %v4749 = vshrl.u32 %v4436, 16
      %v4751 = vrot.slane %v4749, 4
      %v4752 = vor.u32 %v4751, %v4747
      %v4753 = vrot.slane %v4752, 4
      %v4755 = vshll.u32 %v4437, 16
      %v4757 = vrot.slane %v4755, 5
      %v4758 = vsel %vm1088, %v4753, %v4757
      %v4760 = vshrl.u32 %v4438, 16
      %v4762 = vrot.slane %v4760, 4
      %v4763 = vshll.u32 %v4438, 16
      %v4765 = vrot.slane %v4763, 5
      %v4766 = vor.u32 %v4762, %v4765
      %v4767 = vrot.slane %v4766, 4
      %v4769 = vshll.u32 %v4439, 16
      %v4771 = vrot.slane %v4769, 5
      %v4772 = vsel %vm1088, %v4767, %v4771
      %v4773 = vshrl.u32 %v4439, 16
      %v4775 = vrot.slane %v4773, 4
      %v4776 = vor.u32 %v4775, %v4771
      %v4777 = vrot.slane %v4776, 4
      %v4779 = vshll.u32 %v4440, 16
      %v4781 = vrot.slane %v4779, 5
      %v4782 = vsel %vm1088, %v4777, %v4781
      %v4784 = vshrl.u32 %v4441, 16
      %v4786 = vrot.slane %v4784, 4
      %v4787 = vshll.u32 %v4441, 16
      %v4789 = vrot.slane %v4787, 5
      %v4790 = vor.u32 %v4786, %v4789
      %v4791 = vrot.slane %v4790, 4
      %v4793 = vshll.u32 %v4442, 16
      %v4795 = vrot.slane %v4793, 5
      %v4796 = vsel %vm1088, %v4791, %v4795
      %v4797 = vshrl.u32 %v4442, 16
      %v4799 = vrot.slane %v4797, 4
      %v4800 = vor.u32 %v4799, %v4795
      %v4801 = vrot.slane %v4800, 4
      %v4803 = vshll.u32 %v4443, 16
      %v4805 = vrot.slane %v4803, 5
      %v4806 = vsel %vm1088, %v4801, %v4805
      %v4808 = vshrl.u32 %v4444, 16
      %v4810 = vrot.slane %v4808, 4
      %v4811 = vshll.u32 %v4444, 16
      %v4813 = vrot.slane %v4811, 5
      %v4814 = vor.u32 %v4810, %v4813
      %v4815 = vrot.slane %v4814, 4
      %v4817 = vshll.u32 %v4445, 16
      %v4819 = vrot.slane %v4817, 5
      %v4820 = vsel %vm1088, %v4815, %v4819
      %v4821 = vshrl.u32 %v4445, 16
      %v4823 = vrot.slane %v4821, 4
      %v4824 = vor.u32 %v4823, %v4819
      %v4825 = vrot.slane %v4824, 4
      %v4827 = vshll.u32 %v4446, 16
      %v4829 = vrot.slane %v4827, 5
      %v4830 = vsel %vm1088, %v4825, %v4829
      %s4831 = scalar_lea.vmem %s3, 14
      %v4832 = vld [vmem:[%s4831] sm:$0x3]
      %v4833 = vunpack.c.l.b16 %v4460
      %v4834 = vunpack.c.l.b16 %v4470
      %v4835 = vunpack.c.l.b16 %v4484
      %v4836 = vunpack.c.l.b16 %v4494
      %v4837 = vunpack.c.l.b16 %v4508
      %v4838 = vunpack.c.l.b16 %v4518
      %v4839 = vunpack.c.l.b16 %v4532
      %v4840 = vunpack.c.l.b16 %v4542
      %v4841 = vunpack.c.l.b16 %v4556
      %v4842 = vunpack.c.l.b16 %v4566
      %v4843 = vunpack.c.l.b16 %v4580
      %v4844 = vunpack.c.l.b16 %v4590
      %v4845 = vunpack.c.l.b16 %v4604
      %v4846 = vunpack.c.l.b16 %v4614
      %v4847 = vunpack.c.l.b16 %v4628
      %v4848 = vunpack.c.l.b16 %v4638
      %v4849 = vunpack.c.l.b16 %v4652
      %v4850 = vunpack.c.l.b16 %v4662
      %v4851 = vunpack.c.l.b16 %v4676
      %v4852 = vunpack.c.l.b16 %v4686
      %v4853 = vunpack.c.l.b16 %v4700
      %v4854 = vunpack.c.l.b16 %v4710
      %v4855 = vunpack.c.l.b16 %v4724
      %v4856 = vunpack.c.l.b16 %v4734
      %v4857 = vunpack.c.l.b16 %v4748
      %v4858 = vunpack.c.l.b16 %v4758
      %v4859 = vunpack.c.l.b16 %v4772
      %v4860 = vunpack.c.l.b16 %v4782
      %v4861 = vunpack.c.l.b16 %v4796
      %v4862 = vunpack.c.l.b16 %v4806
      %v4863 = vunpack.c.l.b16 %v4820
      %v4864 = vunpack.c.l.b16 %v4830
      %v4865 = vpack.c.b16 %v4834, %v4833
      %v4866 = vpack.c.b16 %v4836, %v4835
      %v4867 = vpack.c.b16 %v4838, %v4837
      %v4868 = vpack.c.b16 %v4840, %v4839
      %v4869 = vpack.c.b16 %v4842, %v4841
      %v4870 = vpack.c.b16 %v4844, %v4843
      %v4871 = vpack.c.b16 %v4846, %v4845
      %v4872 = vpack.c.b16 %v4848, %v4847
      %v4873 = vpack.c.b16 %v4850, %v4849
      %v4874 = vpack.c.b16 %v4852, %v4851
      %v4875 = vpack.c.b16 %v4854, %v4853
      %v4876 = vpack.c.b16 %v4856, %v4855
      %v4877 = vpack.c.b16 %v4858, %v4857
      %v4878 = vpack.c.b16 %v4860, %v4859
      %v4879 = vpack.c.b16 %v4862, %v4861
      %v4880 = vpack.c.b16 %v4864, %v4863
      %v4882 = vsel %vm1523, %v4865, 0
      %v4885 = vsel %vm1523, %v4866, 0
      %v4888 = vsel %vm1523, %v4867, 0
      %v4891 = vsel %vm1523, %v4868, 0
      %v4894 = vsel %vm1523, %v4869, 0
      %v4897 = vsel %vm1523, %v4870, 0
      %v4900 = vsel %vm1523, %v4871, 0
      %v4903 = vsel %vm1523, %v4872, 0
      %v4906 = vsel %vm1523, %v4873, 0
      %v4909 = vsel %vm1523, %v4874, 0
      %v4912 = vsel %vm1523, %v4875, 0
      %v4915 = vsel %vm1523, %v4876, 0
      %v4918 = vsel %vm1523, %v4877, 0
      %v4921 = vsel %vm1523, %v4878, 0
      %v4924 = vsel %vm1523, %v4879, 0
      %v4927 = vsel %vm1523, %v4880, 0
      %v4930 = vsel %vm1572, %v4832, 0
      %4932 = vmatprep.subr.bf16.mxu0 0
      %4933 = vmatpush1.bf16.msra.mxu0 %v4930
      %4934 = vmatprep.subr.bf16.mxu0 0
      %4935 = vmatpush1.bf16.msra.mxu0 0
      %4936 = vmatprep.subr.bf16.mxu0 0
      %4937 = vmatpush1.bf16.msra.mxu0 0
      %4938 = vmatprep.subr.bf16.mxu0 0
      %4939 = vmatpush1.bf16.msra.mxu0 0
      %4940 = vmatprep.subr.bf16.mxu0 0
      %4941 = vmatpush1.bf16.msra.mxu0 0
      %4942 = vmatprep.subr.bf16.mxu0 0
      %4943 = vmatpush1.bf16.msra.mxu0 0
      %4944 = vmatprep.subr.bf16.mxu0 0
      %4945 = vmatpush1.bf16.msra.mxu0 0
      %4946 = vmatprep.subr.bf16.mxu0 0
      %4947 = vmatpush1.bf16.msra.mxu0 0
      %4948 = vmatprep.subr.bf16.mxu0 0
      %4949 = vmatpush1.bf16.msra.mxu0 0
      %4950 = vmatprep.subr.bf16.mxu0 0
      %4951 = vmatpush1.bf16.msra.mxu0 0
      %4952 = vmatprep.subr.bf16.mxu0 0
      %4953 = vmatpush1.bf16.msra.mxu0 0
      %4954 = vmatprep.subr.bf16.mxu0 0
      %4955 = vmatpush1.bf16.msra.mxu0 0
      %4956 = vmatprep.subr.bf16.mxu0 0
      %4957 = vmatpush1.bf16.msra.mxu0 0
      %4958 = vmatprep.subr.bf16.mxu0 0
      %4959 = vmatpush1.bf16.msra.mxu0 0
      %4960 = vmatprep.subr.bf16.mxu0 0
      %4961 = vmatpush1.bf16.msra.mxu0 0
      %4962 = vmatprep.subr.bf16.mxu0 0
      %4963 = vmatpush1.bf16.msra.mxu0 0
      %4964 = vmatprep.mubr.bf16.mxu0 0
      %4965 = vmatmul.mubr.bf16.gmra.mrb[0].mxu0 %v4882
      %v4966 = vpop.f32.mrb[0].mxu0
      %v4967 = vadd.f32 0.0, %v4966
      %v4968 = vpop.f32.mrb[0].mxu0
      %v4969 = vpop.f32.mrb[0].mxu0
      %v4970 = vadd.f32 0.0, %v4969
      %v4971 = vpop.f32.mrb[0].mxu0
      %4972 = vmatprep.mubr.bf16.mxu0 0
      %4973 = vmatmul.mubr.bf16.gmra.mrb[0].mxu0 %v4885
      %v4974 = vpop.f32.mrb[0].mxu0
      %v4975 = vadd.f32 0.0, %v4974
      %v4976 = vpop.f32.mrb[0].mxu0
      %v4977 = vpop.f32.mrb[0].mxu0
      %v4978 = vadd.f32 0.0, %v4977
      %v4979 = vpop.f32.mrb[0].mxu0
      %4980 = vmatprep.mubr.bf16.mxu0 0
      %4981 = vmatmul.mubr.bf16.gmra.mrb[0].mxu0 %v4888
      %v4982 = vpop.f32.mrb[0].mxu0
      %v4983 = vadd.f32 0.0, %v4982
      %v4984 = vpop.f32.mrb[0].mxu0
      %v4985 = vpop.f32.mrb[0].mxu0
      %v4986 = vadd.f32 0.0, %v4985
      %v4987 = vpop.f32.mrb[0].mxu0
      %4988 = vmatprep.mubr.bf16.mxu0 0
      %4989 = vmatmul.mubr.bf16.gmra.mrb[0].mxu0 %v4891
      %v4990 = vpop.f32.mrb[0].mxu0
      %v4991 = vadd.f32 0.0, %v4990
      %v4992 = vpop.f32.mrb[0].mxu0
      %v4993 = vpop.f32.mrb[0].mxu0
      %v4994 = vadd.f32 0.0, %v4993
      %v4995 = vpop.f32.mrb[0].mxu0
      %4996 = vmatprep.mubr.bf16.mxu0 0
      %4997 = vmatmul.mubr.bf16.gmra.mrb[0].mxu0 %v4894
      %v4998 = vpop.f32.mrb[0].mxu0
      %v4999 = vadd.f32 0.0, %v4998
      %v5000 = vpop.f32.mrb[0].mxu0
      %v5001 = vpop.f32.mrb[0].mxu0
      %v5002 = vadd.f32 0.0, %v5001
      %v5003 = vpop.f32.mrb[0].mxu0
      %5004 = vmatprep.mubr.bf16.mxu0 0
      %5005 = vmatmul.mubr.bf16.gmra.mrb[0].mxu0 %v4897
      %v5006 = vpop.f32.mrb[0].mxu0
      %v5007 = vadd.f32 0.0, %v5006
      %v5008 = vpop.f32.mrb[0].mxu0
      %v5009 = vpop.f32.mrb[0].mxu0
      %v5010 = vadd.f32 0.0, %v5009
      %v5011 = vpop.f32.mrb[0].mxu0
      %5012 = vmatprep.mubr.bf16.mxu0 0
      %5013 = vmatmul.mubr.bf16.gmra.mrb[0].mxu0 %v4900
      %v5014 = vpop.f32.mrb[0].mxu0
      %v5015 = vadd.f32 0.0, %v5014
      %v5016 = vpop.f32.mrb[0].mxu0
      %v5017 = vpop.f32.mrb[0].mxu0
      %v5018 = vadd.f32 0.0, %v5017
      %v5019 = vpop.f32.mrb[0].mxu0
      %5020 = vmatprep.mubr.bf16.mxu0 0
      %5021 = vmatmul.mubr.bf16.gmra.mrb[0].mxu0 %v4903
      %v5022 = vpop.f32.mrb[0].mxu0
      %v5023 = vadd.f32 0.0, %v5022
      %v5024 = vpop.f32.mrb[0].mxu0
      %v5025 = vpop.f32.mrb[0].mxu0
      %v5026 = vadd.f32 0.0, %v5025
      %v5027 = vpop.f32.mrb[0].mxu0
      %5028 = vmatprep.mubr.bf16.mxu0 0
      %5029 = vmatmul.mubr.bf16.gmra.mrb[0].mxu0 %v4906
      %v5030 = vpop.f32.mrb[0].mxu0
      %v5031 = vadd.f32 0.0, %v5030
      %v5032 = vpop.f32.mrb[0].mxu0
      %v5033 = vpop.f32.mrb[0].mxu0
      %v5034 = vadd.f32 0.0, %v5033
      %v5035 = vpop.f32.mrb[0].mxu0
      %5036 = vmatprep.mubr.bf16.mxu0 0
      %5037 = vmatmul.mubr.bf16.gmra.mrb[0].mxu0 %v4909
      %v5038 = vpop.f32.mrb[0].mxu0
      %v5039 = vadd.f32 0.0, %v5038
      %v5040 = vpop.f32.mrb[0].mxu0
      %v5041 = vpop.f32.mrb[0].mxu0
      %v5042 = vadd.f32 0.0, %v5041
      %v5043 = vpop.f32.mrb[0].mxu0
      %5044 = vmatprep.mubr.bf16.mxu0 0
      %5045 = vmatmul.mubr.bf16.gmra.mrb[0].mxu0 %v4912
      %v5046 = vpop.f32.mrb[0].mxu0
      %v5047 = vadd.f32 0.0, %v5046
      %v5048 = vpop.f32.mrb[0].mxu0
      %v5049 = vpop.f32.mrb[0].mxu0
      %v5050 = vadd.f32 0.0, %v5049
      %v5051 = vpop.f32.mrb[0].mxu0
      %5052 = vmatprep.mubr.bf16.mxu0 0
      %5053 = vmatmul.mubr.bf16.gmra.mrb[0].mxu0 %v4915
      %v5054 = vpop.f32.mrb[0].mxu0
      %v5055 = vadd.f32 0.0, %v5054
      %v5056 = vpop.f32.mrb[0].mxu0
      %v5057 = vpop.f32.mrb[0].mxu0
      %v5058 = vadd.f32 0.0, %v5057
      %v5059 = vpop.f32.mrb[0].mxu0
      %5060 = vmatprep.mubr.bf16.mxu0 0
      %5061 = vmatmul.mubr.bf16.gmra.mrb[0].mxu0 %v4918
      %v5062 = vpop.f32.mrb[0].mxu0
      %v5063 = vadd.f32 0.0, %v5062
      %v5064 = vpop.f32.mrb[0].mxu0
      %v5065 = vpop.f32.mrb[0].mxu0
      %v5066 = vadd.f32 0.0, %v5065
      %v5067 = vpop.f32.mrb[0].mxu0
      %5068 = vmatprep.mubr.bf16.mxu0 0
      %5069 = vmatmul.mubr.bf16.gmra.mrb[0].mxu0 %v4921
      %v5070 = vpop.f32.mrb[0].mxu0
      %v5071 = vadd.f32 0.0, %v5070
      %v5072 = vpop.f32.mrb[0].mxu0
      %v5073 = vpop.f32.mrb[0].mxu0
      %v5074 = vadd.f32 0.0, %v5073
      %v5075 = vpop.f32.mrb[0].mxu0
      %5076 = vmatprep.mubr.bf16.mxu0 0
      %5077 = vmatmul.mubr.bf16.gmra.mrb[0].mxu0 %v4924
      %v5078 = vpop.f32.mrb[0].mxu0
      %v5079 = vadd.f32 0.0, %v5078
      %v5080 = vpop.f32.mrb[0].mxu0
      %v5081 = vpop.f32.mrb[0].mxu0
      %v5082 = vadd.f32 0.0, %v5081
      %v5083 = vpop.f32.mrb[0].mxu0
      %5084 = vmatprep.mubr.bf16.mxu0 0
      %5085 = vmatmul.mubr.bf16.gmra.mrb[0].mxu0 %v4927
      %v5086 = vpop.f32.mrb[0].mxu0
      %v5087 = vadd.f32 0.0, %v5086
      %v5088 = vpop.f32.mrb[0].mxu0
      %v5089 = vpop.f32.mrb[0].mxu0
      %v5090 = vadd.f32 0.0, %v5089
      %v5091 = vpop.f32.mrb[0].mxu0
      %5092 = vdwg.mxu0
      %v5093 = vadd.f32 %v4367, %v4967
      %v5094 = vadd.f32 %v4368, %v4970
      %v5095 = vadd.f32 %v4369, %v4975
      %v5096 = vadd.f32 %v4370, %v4978
      %v5097 = vadd.f32 %v4371, %v4983
      %v5098 = vadd.f32 %v4372, %v4986
      %v5099 = vadd.f32 %v4373, %v4991
      %v5100 = vadd.f32 %v4374, %v4994
      %v5101 = vadd.f32 %v4375, %v4999
      %v5102 = vadd.f32 %v4376, %v5002
      %v5103 = vadd.f32 %v4377, %v5007
      %v5104 = vadd.f32 %v4378, %v5010
      %v5105 = vadd.f32 %v4379, %v5015
      %v5106 = vadd.f32 %v4380, %v5018
      %v5107 = vadd.f32 %v4381, %v5023
      %v5108 = vadd.f32 %v4382, %v5026
      %v5109 = vadd.f32 %v4383, %v5031
      %v5110 = vadd.f32 %v4384, %v5034
      %v5111 = vadd.f32 %v4385, %v5039
      %v5112 = vadd.f32 %v4386, %v5042
      %v5113 = vadd.f32 %v4387, %v5047
      %v5114 = vadd.f32 %v4388, %v5050
      %v5115 = vadd.f32 %v4389, %v5055
      %v5116 = vadd.f32 %v4390, %v5058
      %v5117 = vadd.f32 %v4391, %v5063
      %v5118 = vadd.f32 %v4392, %v5066
      %v5119 = vadd.f32 %v4393, %v5071
      %v5120 = vadd.f32 %v4394, %v5074
      %v5121 = vadd.f32 %v4395, %v5079
      %v5122 = vadd.f32 %v4396, %v5082
      %v5123 = vadd.f32 %v4397, %v5087
      %v5124 = vadd.f32 %v4398, %v5090
      %v5125 = vld [vmem:[%s4040] sm:$0xe]
      %v5126 = vld [vmem:[%s4040 + $0xc] sm:$0xe]
      %v5127 = vld [vmem:[%s4040 + $0x18] sm:$0xe]
      %v5128 = vld [vmem:[%s4040 + $0x24] sm:$0xe]
      %v5129 = vld [vmem:[%s4040 + $0x30] sm:$0xe]
      %v5130 = vld [vmem:[%s4040 + $0x3c] sm:$0xe]
      %v5131 = vld [vmem:[%s4040 + $0x48] sm:$0xe]
      %v5132 = vld [vmem:[%s4040 + $0x54] sm:$0xe]
      %v5133 = vld [vmem:[%s4040 + $0x60] sm:$0xe]
      %v5134 = vld [vmem:[%s4040 + $0x6c] sm:$0xe]
      %v5135 = vld [vmem:[%s4040 + $0x78] sm:$0xe]
      %v5136 = vld [vmem:[%s4040 + $0x84] sm:$0xe]
      %v5137 = vld [vmem:[%s4040 + $0x90] sm:$0xe]
      %v5138 = vld [vmem:[%s4040 + $0x9c] sm:$0xe]
      %v5139 = vld [vmem:[%s4040 + $0xa8] sm:$0xe]
      %v5140 = vld [vmem:[%s4040 + $0xb4] sm:$0xe]
      %v5189 = vrot.slane %v5125, 5
      %v5190 = vrot.slane %v5189, 4
      %v5191 = vrot.slane %v4400, 5
      %v5192 = vsel %vm2079, %v5190, %v5191
      %v5193 = vrot.slane %v5191, 4
      %v5194 = vrot.slane %v4401, 5
      %v5195 = vsel %vm2079, %v5193, %v5194
      %v5196 = vrot.slane %v5126, 5
      %v5197 = vrot.slane %v5196, 4
      %v5198 = vrot.slane %v4403, 5
      %v5199 = vsel %vm2079, %v5197, %v5198
      %v5200 = vrot.slane %v5198, 4
      %v5201 = vrot.slane %v4404, 5
      %v5202 = vsel %vm2079, %v5200, %v5201
      %v5203 = vrot.slane %v5127, 5
      %v5204 = vrot.slane %v5203, 4
      %v5205 = vrot.slane %v4406, 5
      %v5206 = vsel %vm2079, %v5204, %v5205
      %v5207 = vrot.slane %v5205, 4
      %v5208 = vrot.slane %v4407, 5
      %v5209 = vsel %vm2079, %v5207, %v5208
      %v5210 = vrot.slane %v5128, 5
      %v5211 = vrot.slane %v5210, 4
      %v5212 = vrot.slane %v4409, 5
      %v5213 = vsel %vm2079, %v5211, %v5212
      %v5214 = vrot.slane %v5212, 4
      %v5215 = vrot.slane %v4410, 5
      %v5216 = vsel %vm2079, %v5214, %v5215
      %v5217 = vrot.slane %v5129, 5
      %v5218 = vrot.slane %v5217, 4
      %v5219 = vrot.slane %v4412, 5
      %v5220 = vsel %vm2079, %v5218, %v5219
      %v5221 = vrot.slane %v5219, 4
      %v5222 = vrot.slane %v4413, 5
      %v5223 = vsel %vm2079, %v5221, %v5222
      %v5224 = vrot.slane %v5130, 5
      %v5225 = vrot.slane %v5224, 4
      %v5226 = vrot.slane %v4415, 5
      %v5227 = vsel %vm2079, %v5225, %v5226
      %v5228 = vrot.slane %v5226, 4
      %v5229 = vrot.slane %v4416, 5
      %v5230 = vsel %vm2079, %v5228, %v5229
      %v5231 = vrot.slane %v5131, 5
      %v5232 = vrot.slane %v5231, 4
      %v5233 = vrot.slane %v4418, 5
      %v5234 = vsel %vm2079, %v5232, %v5233
      %v5235 = vrot.slane %v5233, 4
      %v5236 = vrot.slane %v4419, 5
      %v5237 = vsel %vm2079, %v5235, %v5236
      %v5238 = vrot.slane %v5132, 5
      %v5239 = vrot.slane %v5238, 4
      %v5240 = vrot.slane %v4421, 5
      %v5241 = vsel %vm2079, %v5239, %v5240
      %v5242 = vrot.slane %v5240, 4
      %v5243 = vrot.slane %v4422, 5
      %v5244 = vsel %vm2079, %v5242, %v5243
      %v5245 = vrot.slane %v5133, 5
      %v5246 = vrot.slane %v5245, 4
      %v5247 = vrot.slane %v4424, 5
      %v5248 = vsel %vm2079, %v5246, %v5247
      %v5249 = vrot.slane %v5247, 4
      %v5250 = vrot.slane %v4425, 5
      %v5251 = vsel %vm2079, %v5249, %v5250
      %v5252 = vrot.slane %v5134, 5
      %v5253 = vrot.slane %v5252, 4
      %v5254 = vrot.slane %v4427, 5
      %v5255 = vsel %vm2079, %v5253, %v5254
      %v5256 = vrot.slane %v5254, 4
      %v5257 = vrot.slane %v4428, 5
      %v5258 = vsel %vm2079, %v5256, %v5257
      %v5259 = vrot.slane %v5135, 5
      %v5260 = vrot.slane %v5259, 4
      %v5261 = vrot.slane %v4430, 5
      %v5262 = vsel %vm2079, %v5260, %v5261
      %v5263 = vrot.slane %v5261, 4
      %v5264 = vrot.slane %v4431, 5
      %v5265 = vsel %vm2079, %v5263, %v5264
      %v5266 = vrot.slane %v5136, 5
      %v5267 = vrot.slane %v5266, 4
      %v5268 = vrot.slane %v4433, 5
      %v5269 = vsel %vm2079, %v5267, %v5268
      %v5270 = vrot.slane %v5268, 4
      %v5271 = vrot.slane %v4434, 5
      %v5272 = vsel %vm2079, %v5270, %v5271
      %v5273 = vrot.slane %v5137, 5
      %v5274 = vrot.slane %v5273, 4
      %v5275 = vrot.slane %v4436, 5
      %v5276 = vsel %vm2079, %v5274, %v5275
      %v5277 = vrot.slane %v5275, 4
      %v5278 = vrot.slane %v4437, 5
      %v5279 = vsel %vm2079, %v5277, %v5278
      %v5280 = vrot.slane %v5138, 5
      %v5281 = vrot.slane %v5280, 4
      %v5282 = vrot.slane %v4439, 5
      %v5283 = vsel %vm2079, %v5281, %v5282
      %v5284 = vrot.slane %v5282, 4
      %v5285 = vrot.slane %v4440, 5
      %v5286 = vsel %vm2079, %v5284, %v5285
      %v5287 = vrot.slane %v5139, 5
      %v5288 = vrot.slane %v5287, 4
      %v5289 = vrot.slane %v4442, 5
      %v5290 = vsel %vm2079, %v5288, %v5289
      %v5291 = vrot.slane %v5289, 4
      %v5292 = vrot.slane %v4443, 5
      %v5293 = vsel %vm2079, %v5291, %v5292
      %v5294 = vrot.slane %v5140, 5
      %v5295 = vrot.slane %v5294, 4
      %v5296 = vrot.slane %v4445, 5
      %v5297 = vsel %vm2079, %v5295, %v5296
      %v5298 = vrot.slane %v5296, 4
      %v5299 = vrot.slane %v4446, 5
      %v5300 = vsel %vm2079, %v5298, %v5299
      %s5301 = scalar_lea.vmem %s3, 16
      %v5302 = vld [vmem:[%s5301] sm:$0x3]
      %v5303 = vunpack.c.l.b16 %v5192
      %v5304 = vunpack.c.l.b16 %v5195
      %v5305 = vunpack.c.l.b16 %v5199
      %v5306 = vunpack.c.l.b16 %v5202
      %v5307 = vunpack.c.l.b16 %v5206
      %v5308 = vunpack.c.l.b16 %v5209
      %v5309 = vunpack.c.l.b16 %v5213
      %v5310 = vunpack.c.l.b16 %v5216
      %v5311 = vunpack.c.l.b16 %v5220
      %v5312 = vunpack.c.l.b16 %v5223
      %v5313 = vunpack.c.l.b16 %v5227
      %v5314 = vunpack.c.l.b16 %v5230
      %v5315 = vunpack.c.l.b16 %v5234
      %v5316 = vunpack.c.l.b16 %v5237
      %v5317 = vunpack.c.l.b16 %v5241
      %v5318 = vunpack.c.l.b16 %v5244
      %v5319 = vunpack.c.l.b16 %v5248
      %v5320 = vunpack.c.l.b16 %v5251
      %v5321 = vunpack.c.l.b16 %v5255
      %v5322 = vunpack.c.l.b16 %v5258
      %v5323 = vunpack.c.l.b16 %v5262
      %v5324 = vunpack.c.l.b16 %v5265
      %v5325 = vunpack.c.l.b16 %v5269
      %v5326 = vunpack.c.l.b16 %v5272
      %v5327 = vunpack.c.l.b16 %v5276
      %v5328 = vunpack.c.l.b16 %v5279
      %v5329 = vunpack.c.l.b16 %v5283
      %v5330 = vunpack.c.l.b16 %v5286
      %v5331 = vunpack.c.l.b16 %v5290
      %v5332 = vunpack.c.l.b16 %v5293
      %v5333 = vunpack.c.l.b16 %v5297
      %v5334 = vunpack.c.l.b16 %v5300
      %v5335 = vpack.c.b16 %v5304, %v5303
      %v5336 = vpack.c.b16 %v5306, %v5305
      %v5337 = vpack.c.b16 %v5308, %v5307
      %v5338 = vpack.c.b16 %v5310, %v5309
      %v5339 = vpack.c.b16 %v5312, %v5311
      %v5340 = vpack.c.b16 %v5314, %v5313
      %v5341 = vpack.c.b16 %v5316, %v5315
      %v5342 = vpack.c.b16 %v5318, %v5317
      %v5343 = vpack.c.b16 %v5320, %v5319
      %v5344 = vpack.c.b16 %v5322, %v5321
      %v5345 = vpack.c.b16 %v5324, %v5323
      %v5346 = vpack.c.b16 %v5326, %v5325
      %v5347 = vpack.c.b16 %v5328, %v5327
      %v5348 = vpack.c.b16 %v5330, %v5329
      %v5349 = vpack.c.b16 %v5332, %v5331
      %v5350 = vpack.c.b16 %v5334, %v5333
      %v5352 = vsel %vm1523, %v5335, 0
      %v5355 = vsel %vm1523, %v5336, 0
      %v5358 = vsel %vm1523, %v5337, 0
      %v5361 = vsel %vm1523, %v5338, 0
      %v5364 = vsel %vm1523, %v5339, 0
      %v5367 = vsel %vm1523, %v5340, 0
      %v5370 = vsel %vm1523, %v5341, 0
      %v5373 = vsel %vm1523, %v5342, 0
      %v5376 = vsel %vm1523, %v5343, 0
      %v5379 = vsel %vm1523, %v5344, 0
      %v5382 = vsel %vm1523, %v5345, 0
      %v5385 = vsel %vm1523, %v5346, 0
      %v5388 = vsel %vm1523, %v5347, 0
      %v5391 = vsel %vm1523, %v5348, 0
      %v5394 = vsel %vm1523, %v5349, 0
      %v5397 = vsel %vm1523, %v5350, 0
      %v5400 = vsel %vm1572, %v5302, 0
      %5402 = vmatprep.subr.bf16.mxu0 0
      %5403 = vmatpush1.bf16.msra.mxu0 %v5400
      %5404 = vmatprep.subr.bf16.mxu0 0
      %5405 = vmatpush1.bf16.msra.mxu0 0
      %5406 = vmatprep.subr.bf16.mxu0 0
      %5407 = vmatpush1.bf16.msra.mxu0 0
      %5408 = vmatprep.subr.bf16.mxu0 0
      %5409 = vmatpush1.bf16.msra.mxu0 0
      %5410 = vmatprep.subr.bf16.mxu0 0
      %5411 = vmatpush1.bf16.msra.mxu0 0
      %5412 = vmatprep.subr.bf16.mxu0 0
      %5413 = vmatpush1.bf16.msra.mxu0 0
      %5414 = vmatprep.subr.bf16.mxu0 0
      %5415 = vmatpush1.bf16.msra.mxu0 0
      %5416 = vmatprep.subr.bf16.mxu0 0
      %5417 = vmatpush1.bf16.msra.mxu0 0
      %5418 = vmatprep.subr.bf16.mxu0 0
      %5419 = vmatpush1.bf16.msra.mxu0 0
      %5420 = vmatprep.subr.bf16.mxu0 0
      %5421 = vmatpush1.bf16.msra.mxu0 0
      %5422 = vmatprep.subr.bf16.mxu0 0
      %5423 = vmatpush1.bf16.msra.mxu0 0
      %5424 = vmatprep.subr.bf16.mxu0 0
      %5425 = vmatpush1.bf16.msra.mxu0 0
      %5426 = vmatprep.subr.bf16.mxu0 0
      %5427 = vmatpush1.bf16.msra.mxu0 0
      %5428 = vmatprep.subr.bf16.mxu0 0
      %5429 = vmatpush1.bf16.msra.mxu0 0
      %5430 = vmatprep.subr.bf16.mxu0 0
      %5431 = vmatpush1.bf16.msra.mxu0 0
      %5432 = vmatprep.subr.bf16.mxu0 0
      %5433 = vmatpush1.bf16.msra.mxu0 0
      %5434 = vmatprep.mubr.bf16.mxu0 0
      %5435 = vmatmul.mubr.bf16.gmra.mrb[0].mxu0 %v5352
      %v5436 = vpop.f32.mrb[0].mxu0
      %v5437 = vadd.f32 0.0, %v5436
      %v5438 = vpop.f32.mrb[0].mxu0
      %v5439 = vpop.f32.mrb[0].mxu0
      %v5440 = vadd.f32 0.0, %v5439
      %v5441 = vpop.f32.mrb[0].mxu0
      %5442 = vmatprep.mubr.bf16.mxu0 0
      %5443 = vmatmul.mubr.bf16.gmra.mrb[0].mxu0 %v5355
      %v5444 = vpop.f32.mrb[0].mxu0
      %v5445 = vadd.f32 0.0, %v5444
      %v5446 = vpop.f32.mrb[0].mxu0
      %v5447 = vpop.f32.mrb[0].mxu0
      %v5448 = vadd.f32 0.0, %v5447
      %v5449 = vpop.f32.mrb[0].mxu0
      %5450 = vmatprep.mubr.bf16.mxu0 0
      %5451 = vmatmul.mubr.bf16.gmra.mrb[0].mxu0 %v5358
      %v5452 = vpop.f32.mrb[0].mxu0
      %v5453 = vadd.f32 0.0, %v5452
      %v5454 = vpop.f32.mrb[0].mxu0
      %v5455 = vpop.f32.mrb[0].mxu0
      %v5456 = vadd.f32 0.0, %v5455
      %v5457 = vpop.f32.mrb[0].mxu0
      %5458 = vmatprep.mubr.bf16.mxu0 0
      %5459 = vmatmul.mubr.bf16.gmra.mrb[0].mxu0 %v5361
      %v5460 = vpop.f32.mrb[0].mxu0
      %v5461 = vadd.f32 0.0, %v5460
      %v5462 = vpop.f32.mrb[0].mxu0
      %v5463 = vpop.f32.mrb[0].mxu0
      %v5464 = vadd.f32 0.0, %v5463
      %v5465 = vpop.f32.mrb[0].mxu0
      %5466 = vmatprep.mubr.bf16.mxu0 0
      %5467 = vmatmul.mubr.bf16.gmra.mrb[0].mxu0 %v5364
      %v5468 = vpop.f32.mrb[0].mxu0
      %v5469 = vadd.f32 0.0, %v5468
      %v5470 = vpop.f32.mrb[0].mxu0
      %v5471 = vpop.f32.mrb[0].mxu0
      %v5472 = vadd.f32 0.0, %v5471
      %v5473 = vpop.f32.mrb[0].mxu0
      %5474 = vmatprep.mubr.bf16.mxu0 0
      %5475 = vmatmul.mubr.bf16.gmra.mrb[0].mxu0 %v5367
      %v5476 = vpop.f32.mrb[0].mxu0
      %v5477 = vadd.f32 0.0, %v5476
      %v5478 = vpop.f32.mrb[0].mxu0
      %v5479 = vpop.f32.mrb[0].mxu0
      %v5480 = vadd.f32 0.0, %v5479
      %v5481 = vpop.f32.mrb[0].mxu0
      %5482 = vmatprep.mubr.bf16.mxu0 0
      %5483 = vmatmul.mubr.bf16.gmra.mrb[0].mxu0 %v5370
      %v5484 = vpop.f32.mrb[0].mxu0
      %v5485 = vadd.f32 0.0, %v5484
      %v5486 = vpop.f32.mrb[0].mxu0
      %v5487 = vpop.f32.mrb[0].mxu0
      %v5488 = vadd.f32 0.0, %v5487
      %v5489 = vpop.f32.mrb[0].mxu0
      %5490 = vmatprep.mubr.bf16.mxu0 0
      %5491 = vmatmul.mubr.bf16.gmra.mrb[0].mxu0 %v5373
      %v5492 = vpop.f32.mrb[0].mxu0
      %v5493 = vadd.f32 0.0, %v5492
      %v5494 = vpop.f32.mrb[0].mxu0
      %v5495 = vpop.f32.mrb[0].mxu0
      %v5496 = vadd.f32 0.0, %v5495
      %v5497 = vpop.f32.mrb[0].mxu0
      %5498 = vmatprep.mubr.bf16.mxu0 0
      %5499 = vmatmul.mubr.bf16.gmra.mrb[0].mxu0 %v5376
      %v5500 = vpop.f32.mrb[0].mxu0
      %v5501 = vadd.f32 0.0, %v5500
      %v5502 = vpop.f32.mrb[0].mxu0
      %v5503 = vpop.f32.mrb[0].mxu0
      %v5504 = vadd.f32 0.0, %v5503
      %v5505 = vpop.f32.mrb[0].mxu0
      %5506 = vmatprep.mubr.bf16.mxu0 0
      %5507 = vmatmul.mubr.bf16.gmra.mrb[0].mxu0 %v5379
      %v5508 = vpop.f32.mrb[0].mxu0
      %v5509 = vadd.f32 0.0, %v5508
      %v5510 = vpop.f32.mrb[0].mxu0
      %v5511 = vpop.f32.mrb[0].mxu0
      %v5512 = vadd.f32 0.0, %v5511
      %v5513 = vpop.f32.mrb[0].mxu0
      %5514 = vmatprep.mubr.bf16.mxu0 0
      %5515 = vmatmul.mubr.bf16.gmra.mrb[0].mxu0 %v5382
      %v5516 = vpop.f32.mrb[0].mxu0
      %v5517 = vadd.f32 0.0, %v5516
      %v5518 = vpop.f32.mrb[0].mxu0
      %v5519 = vpop.f32.mrb[0].mxu0
      %v5520 = vadd.f32 0.0, %v5519
      %v5521 = vpop.f32.mrb[0].mxu0
      %5522 = vmatprep.mubr.bf16.mxu0 0
      %5523 = vmatmul.mubr.bf16.gmra.mrb[0].mxu0 %v5385
      %v5524 = vpop.f32.mrb[0].mxu0
      %v5525 = vadd.f32 0.0, %v5524
      %v5526 = vpop.f32.mrb[0].mxu0
      %v5527 = vpop.f32.mrb[0].mxu0
      %v5528 = vadd.f32 0.0, %v5527
      %v5529 = vpop.f32.mrb[0].mxu0
      %5530 = vmatprep.mubr.bf16.mxu0 0
      %5531 = vmatmul.mubr.bf16.gmra.mrb[0].mxu0 %v5388
      %v5532 = vpop.f32.mrb[0].mxu0
      %v5533 = vadd.f32 0.0, %v5532
      %v5534 = vpop.f32.mrb[0].mxu0
      %v5535 = vpop.f32.mrb[0].mxu0
      %v5536 = vadd.f32 0.0, %v5535
      %v5537 = vpop.f32.mrb[0].mxu0
      %5538 = vmatprep.mubr.bf16.mxu0 0
      %5539 = vmatmul.mubr.bf16.gmra.mrb[0].mxu0 %v5391
      %v5540 = vpop.f32.mrb[0].mxu0
      %v5541 = vadd.f32 0.0, %v5540
      %v5542 = vpop.f32.mrb[0].mxu0
      %v5543 = vpop.f32.mrb[0].mxu0
      %v5544 = vadd.f32 0.0, %v5543
      %v5545 = vpop.f32.mrb[0].mxu0
      %5546 = vmatprep.mubr.bf16.mxu0 0
      %5547 = vmatmul.mubr.bf16.gmra.mrb[0].mxu0 %v5394
      %v5548 = vpop.f32.mrb[0].mxu0
      %v5549 = vadd.f32 0.0, %v5548
      %v5550 = vpop.f32.mrb[0].mxu0
      %v5551 = vpop.f32.mrb[0].mxu0
      %v5552 = vadd.f32 0.0, %v5551
      %v5553 = vpop.f32.mrb[0].mxu0
      %5554 = vmatprep.mubr.bf16.mxu0 0
      %5555 = vmatmul.mubr.bf16.gmra.mrb[0].mxu0 %v5397
      %v5556 = vpop.f32.mrb[0].mxu0
      %v5557 = vadd.f32 0.0, %v5556
      %v5558 = vpop.f32.mrb[0].mxu0
      %v5559 = vpop.f32.mrb[0].mxu0
      %v5560 = vadd.f32 0.0, %v5559
      %v5561 = vpop.f32.mrb[0].mxu0
      %5562 = vdwg.mxu0
      %v5563 = vadd.f32 %v5093, %v5437
      %v5564 = vadd.f32 %v5094, %v5440
      %v5565 = vadd.f32 %v5095, %v5445
      %v5566 = vadd.f32 %v5096, %v5448
      %v5567 = vadd.f32 %v5097, %v5453
      %v5568 = vadd.f32 %v5098, %v5456
      %v5569 = vadd.f32 %v5099, %v5461
      %v5570 = vadd.f32 %v5100, %v5464
      %v5571 = vadd.f32 %v5101, %v5469
      %v5572 = vadd.f32 %v5102, %v5472
      %v5573 = vadd.f32 %v5103, %v5477
      %v5574 = vadd.f32 %v5104, %v5480
      %v5575 = vadd.f32 %v5105, %v5485
      %v5576 = vadd.f32 %v5106, %v5488
      %v5577 = vadd.f32 %v5107, %v5493
      %v5578 = vadd.f32 %v5108, %v5496
      %v5579 = vadd.f32 %v5109, %v5501
      %v5580 = vadd.f32 %v5110, %v5504
      %v5581 = vadd.f32 %v5111, %v5509
      %v5582 = vadd.f32 %v5112, %v5512
      %v5583 = vadd.f32 %v5113, %v5517
      %v5584 = vadd.f32 %v5114, %v5520
      %v5585 = vadd.f32 %v5115, %v5525
      %v5586 = vadd.f32 %v5116, %v5528
      %v5587 = vadd.f32 %v5117, %v5533
      %v5588 = vadd.f32 %v5118, %v5536
      %v5589 = vadd.f32 %v5119, %v5541
      %v5590 = vadd.f32 %v5120, %v5544
      %v5591 = vadd.f32 %v5121, %v5549
      %v5592 = vadd.f32 %v5122, %v5552
      %v5593 = vadd.f32 %v5123, %v5557
      %v5594 = vadd.f32 %v5124, %v5560
      %v5595 = vld [vmem:[%s4] sm:$0x1]
      %v5597 = vlaneseq
      %v5598 = vshrl.u32 %v5597, 7
      %v5599 = vsub.s32 0, %v5598
      %v5600 = vrot.slane %v5595, %v5599
      %v5602 = vadd.f32 %v5563, %v5600
      %v5603 = vadd.f32 %v5564, %v5600
      %v5604 = vadd.f32 %v5565, %v5600
      %v5605 = vadd.f32 %v5566, %v5600
      %v5606 = vadd.f32 %v5567, %v5600
      %v5607 = vadd.f32 %v5568, %v5600
      %v5608 = vadd.f32 %v5569, %v5600
      %v5609 = vadd.f32 %v5570, %v5600
      %v5610 = vadd.f32 %v5571, %v5600
      %v5611 = vadd.f32 %v5572, %v5600
      %v5612 = vadd.f32 %v5573, %v5600
      %v5613 = vadd.f32 %v5574, %v5600
      %v5614 = vadd.f32 %v5575, %v5600
      %v5615 = vadd.f32 %v5576, %v5600
      %v5616 = vadd.f32 %v5577, %v5600
      %v5617 = vadd.f32 %v5578, %v5600
      %v5618 = vadd.f32 %v5579, %v5600
      %v5619 = vadd.f32 %v5580, %v5600
      %v5620 = vadd.f32 %v5581, %v5600
      %v5621 = vadd.f32 %v5582, %v5600
      %v5622 = vadd.f32 %v5583, %v5600
      %v5623 = vadd.f32 %v5584, %v5600
      %v5624 = vadd.f32 %v5585, %v5600
      %v5625 = vadd.f32 %v5586, %v5600
      %v5626 = vadd.f32 %v5587, %v5600
      %v5627 = vadd.f32 %v5588, %v5600
      %v5628 = vadd.f32 %v5589, %v5600
      %v5629 = vadd.f32 %v5590, %v5600
      %v5630 = vadd.f32 %v5591, %v5600
      %v5631 = vadd.f32 %v5592, %v5600
      %v5632 = vadd.f32 %v5593, %v5600
      %v5633 = vadd.f32 %v5594, %v5600
      %5634 = vst.msk [vmem:[%s430] sm:$0xff] %vm1523, %v5602
      %5635 = vst.msk [vmem:[%s430 + $0x8] sm:$0xff] %vm1523, %v5603
      %5636 = vst.msk [vmem:[%s430 + $0x10] sm:$0xff] %vm1523, %v5604
      %5637 = vst.msk [vmem:[%s430 + $0x18] sm:$0xff] %vm1523, %v5605
      %5638 = vst.msk [vmem:[%s430 + $0x20] sm:$0xff] %vm1523, %v5606
      %5639 = vst.msk [vmem:[%s430 + $0x28] sm:$0xff] %vm1523, %v5607
      %5640 = vst.msk [vmem:[%s430 + $0x30] sm:$0xff] %vm1523, %v5608
      %5641 = vst.msk [vmem:[%s430 + $0x38] sm:$0xff] %vm1523, %v5609
      %5642 = vst.msk [vmem:[%s430 + $0x40] sm:$0xff] %vm1523, %v5610
      %5643 = vst.msk [vmem:[%s430 + $0x48] sm:$0xff] %vm1523, %v5611
      %5644 = vst.msk [vmem:[%s430 + $0x50] sm:$0xff] %vm1523, %v5612
      %5645 = vst.msk [vmem:[%s430 + $0x58] sm:$0xff] %vm1523, %v5613
      %5646 = vst.msk [vmem:[%s430 + $0x60] sm:$0xff] %vm1523, %v5614
      %5647 = vst.msk [vmem:[%s430 + $0x68] sm:$0xff] %vm1523, %v5615
      %5648 = vst.msk [vmem:[%s430 + $0x70] sm:$0xff] %vm1523, %v5616
      %5649 = vst.msk [vmem:[%s430 + $0x78] sm:$0xff] %vm1523, %v5617
      %5650 = vst.msk [vmem:[%s430 + $0x80] sm:$0xff] %vm1523, %v5618
      %5651 = vst.msk [vmem:[%s430 + $0x88] sm:$0xff] %vm1523, %v5619
      %5652 = vst.msk [vmem:[%s430 + $0x90] sm:$0xff] %vm1523, %v5620
      %5653 = vst.msk [vmem:[%s430 + $0x98] sm:$0xff] %vm1523, %v5621
      %5654 = vst.msk [vmem:[%s430 + $0xa0] sm:$0xff] %vm1523, %v5622
      %5655 = vst.msk [vmem:[%s430 + $0xa8] sm:$0xff] %vm1523, %v5623
      %5656 = vst.msk [vmem:[%s430 + $0xb0] sm:$0xff] %vm1523, %v5624
      %5657 = vst.msk [vmem:[%s430 + $0xb8] sm:$0xff] %vm1523, %v5625
      %5658 = vst.msk [vmem:[%s430 + $0xc0] sm:$0xff] %vm1523, %v5626
      %5659 = vst.msk [vmem:[%s430 + $0xc8] sm:$0xff] %vm1523, %v5627
      %5660 = vst.msk [vmem:[%s430 + $0xd0] sm:$0xff] %vm1523, %v5628
      %5661 = vst.msk [vmem:[%s430 + $0xd8] sm:$0xff] %vm1523, %v5629
      %5662 = vst.msk [vmem:[%s430 + $0xe0] sm:$0xff] %vm1523, %v5630
      %5663 = vst.msk [vmem:[%s430 + $0xe8] sm:$0xff] %vm1523, %v5631
      %5664 = vst.msk [vmem:[%s430 + $0xf0] sm:$0xff] %vm1523, %v5632
      %5665 = vst.msk [vmem:[%s430 + $0xf8] sm:$0xff] %vm1523, %v5633
      %v5666 = vsel %vm1523, %v5602, 0.0
      %v5667 = vsel %vm1523, %v5603, 0.0
      %v5668 = vadd.f32 %v5666, %v5667
      %v5669 = vsel %vm1523, %v5604, 0.0
      %v5670 = vadd.f32 %v5668, %v5669
      %v5671 = vsel %vm1523, %v5605, 0.0
      %v5672 = vadd.f32 %v5670, %v5671
      %v5673 = vsel %vm1523, %v5606, 0.0
      %v5674 = vadd.f32 %v5672, %v5673
      %v5675 = vsel %vm1523, %v5607, 0.0
      %v5676 = vadd.f32 %v5674, %v5675
      %v5677 = vsel %vm1523, %v5608, 0.0
      %v5678 = vadd.f32 %v5676, %v5677
      %v5679 = vsel %vm1523, %v5609, 0.0
      %v5680 = vadd.f32 %v5678, %v5679
      %v5681 = vsel %vm1523, %v5610, 0.0
      %v5682 = vadd.f32 %v5680, %v5681
      %v5683 = vsel %vm1523, %v5611, 0.0
      %v5684 = vadd.f32 %v5682, %v5683
      %v5685 = vsel %vm1523, %v5612, 0.0
      %v5686 = vadd.f32 %v5684, %v5685
      %v5687 = vsel %vm1523, %v5613, 0.0
      %v5688 = vadd.f32 %v5686, %v5687
      %v5689 = vsel %vm1523, %v5614, 0.0
      %v5690 = vadd.f32 %v5688, %v5689
      %v5691 = vsel %vm1523, %v5615, 0.0
      %v5692 = vadd.f32 %v5690, %v5691
      %v5693 = vsel %vm1523, %v5616, 0.0
      %v5694 = vadd.f32 %v5692, %v5693
      %v5695 = vsel %vm1523, %v5617, 0.0
      %v5696 = vadd.f32 %v5694, %v5695
      %v5697 = vsel %vm1523, %v5618, 0.0
      %v5698 = vadd.f32 %v5696, %v5697
      %v5699 = vsel %vm1523, %v5619, 0.0
      %v5700 = vadd.f32 %v5698, %v5699
      %v5701 = vsel %vm1523, %v5620, 0.0
      %v5702 = vadd.f32 %v5700, %v5701
      %v5703 = vsel %vm1523, %v5621, 0.0
      %v5704 = vadd.f32 %v5702, %v5703
      %v5705 = vsel %vm1523, %v5622, 0.0
      %v5706 = vadd.f32 %v5704, %v5705
      %v5707 = vsel %vm1523, %v5623, 0.0
      %v5708 = vadd.f32 %v5706, %v5707
      %v5709 = vsel %vm1523, %v5624, 0.0
      %v5710 = vadd.f32 %v5708, %v5709
      %v5711 = vsel %vm1523, %v5625, 0.0
      %v5712 = vadd.f32 %v5710, %v5711
      %v5713 = vsel %vm1523, %v5626, 0.0
      %v5714 = vadd.f32 %v5712, %v5713
      %v5715 = vsel %vm1523, %v5627, 0.0
      %v5716 = vadd.f32 %v5714, %v5715
      %v5717 = vsel %vm1523, %v5628, 0.0
      %v5718 = vadd.f32 %v5716, %v5717
      %v5719 = vsel %vm1523, %v5629, 0.0
      %v5720 = vadd.f32 %v5718, %v5719
      %v5721 = vsel %vm1523, %v5630, 0.0
      %v5722 = vadd.f32 %v5720, %v5721
      %v5723 = vsel %vm1523, %v5631, 0.0
      %v5724 = vadd.f32 %v5722, %v5723
      %v5725 = vsel %vm1523, %v5632, 0.0
      %v5726 = vadd.f32 %v5724, %v5725
      %v5727 = vsel %vm1523, %v5633, 0.0
      %v5728 = vadd.f32 %v5726, %v5727
      %v5729 = vrot.slane %v5728, 4
      %v5730 = vadd.f32 %v5728, %v5729
      %v5731 = vrot.slane %v5730, 2
      %v5732 = vadd.f32 %v5730, %v5731
      %v5733 = vrot.slane %v5732, 1
      %v5734 = vadd.f32 %v5732, %v5733
      %v5735 = vmul.f32 %v5602, %v5602
      %v5736 = vmul.f32 %v5603, %v5603
      %v5737 = vmul.f32 %v5604, %v5604
      %v5738 = vmul.f32 %v5605, %v5605
      %v5739 = vmul.f32 %v5606, %v5606
      %v5740 = vmul.f32 %v5607, %v5607
      %v5741 = vmul.f32 %v5608, %v5608
      %v5742 = vmul.f32 %v5609, %v5609
      %v5743 = vmul.f32 %v5610, %v5610
      %v5744 = vmul.f32 %v5611, %v5611
      %v5745 = vmul.f32 %v5612, %v5612
      %v5746 = vmul.f32 %v5613, %v5613
      %v5747 = vmul.f32 %v5614, %v5614
      %v5748 = vmul.f32 %v5615, %v5615
      %v5749 = vmul.f32 %v5616, %v5616
      %v5750 = vmul.f32 %v5617, %v5617
      %v5751 = vmul.f32 %v5618, %v5618
      %v5752 = vmul.f32 %v5619, %v5619
      %v5753 = vmul.f32 %v5620, %v5620
      %v5754 = vmul.f32 %v5621, %v5621
      %v5755 = vmul.f32 %v5622, %v5622
      %v5756 = vmul.f32 %v5623, %v5623
      %v5757 = vmul.f32 %v5624, %v5624
      %v5758 = vmul.f32 %v5625, %v5625
      %v5759 = vmul.f32 %v5626, %v5626
      %v5760 = vmul.f32 %v5627, %v5627
      %v5761 = vmul.f32 %v5628, %v5628
      %v5762 = vmul.f32 %v5629, %v5629
      %v5763 = vmul.f32 %v5630, %v5630
      %v5764 = vmul.f32 %v5631, %v5631
      %v5765 = vmul.f32 %v5632, %v5632
      %v5766 = vmul.f32 %v5633, %v5633
      %v5767 = vsel %vm1523, %v5735, 0.0
      %v5768 = vsel %vm1523, %v5736, 0.0
      %v5769 = vadd.f32 %v5767, %v5768
      %v5770 = vsel %vm1523, %v5737, 0.0
      %v5771 = vadd.f32 %v5769, %v5770
      %v5772 = vsel %vm1523, %v5738, 0.0
      %v5773 = vadd.f32 %v5771, %v5772
      %v5774 = vsel %vm1523, %v5739, 0.0
      %v5775 = vadd.f32 %v5773, %v5774
      %v5776 = vsel %vm1523, %v5740, 0.0
      %v5777 = vadd.f32 %v5775, %v5776
      %v5778 = vsel %vm1523, %v5741, 0.0
      %v5779 = vadd.f32 %v5777, %v5778
      %v5780 = vsel %vm1523, %v5742, 0.0
      %v5781 = vadd.f32 %v5779, %v5780
      %v5782 = vsel %vm1523, %v5743, 0.0
      %v5783 = vadd.f32 %v5781, %v5782
      %v5784 = vsel %vm1523, %v5744, 0.0
      %v5785 = vadd.f32 %v5783, %v5784
      %v5786 = vsel %vm1523, %v5745, 0.0
      %v5787 = vadd.f32 %v5785, %v5786
      %v5788 = vsel %vm1523, %v5746, 0.0
      %v5789 = vadd.f32 %v5787, %v5788
      %v5790 = vsel %vm1523, %v5747, 0.0
      %v5791 = vadd.f32 %v5789, %v5790
      %v5792 = vsel %vm1523, %v5748, 0.0
      %v5793 = vadd.f32 %v5791, %v5792
      %v5794 = vsel %vm1523, %v5749, 0.0
      %v5795 = vadd.f32 %v5793, %v5794
      %v5796 = vsel %vm1523, %v5750, 0.0
      %v5797 = vadd.f32 %v5795, %v5796
      %v5798 = vsel %vm1523, %v5751, 0.0
      %v5799 = vadd.f32 %v5797, %v5798
      %v5800 = vsel %vm1523, %v5752, 0.0
      %v5801 = vadd.f32 %v5799, %v5800
      %v5802 = vsel %vm1523, %v5753, 0.0
      %v5803 = vadd.f32 %v5801, %v5802
      %v5804 = vsel %vm1523, %v5754, 0.0
      %v5805 = vadd.f32 %v5803, %v5804
      %v5806 = vsel %vm1523, %v5755, 0.0
      %v5807 = vadd.f32 %v5805, %v5806
      %v5808 = vsel %vm1523, %v5756, 0.0
      %v5809 = vadd.f32 %v5807, %v5808
      %v5810 = vsel %vm1523, %v5757, 0.0
      %v5811 = vadd.f32 %v5809, %v5810
      %v5812 = vsel %vm1523, %v5758, 0.0
      %v5813 = vadd.f32 %v5811, %v5812
      %v5814 = vsel %vm1523, %v5759, 0.0
      %v5815 = vadd.f32 %v5813, %v5814
      %v5816 = vsel %vm1523, %v5760, 0.0
      %v5817 = vadd.f32 %v5815, %v5816
      %v5818 = vsel %vm1523, %v5761, 0.0
      %v5819 = vadd.f32 %v5817, %v5818
      %v5820 = vsel %vm1523, %v5762, 0.0
      %v5821 = vadd.f32 %v5819, %v5820
      %v5822 = vsel %vm1523, %v5763, 0.0
      %v5823 = vadd.f32 %v5821, %v5822
      %v5824 = vsel %vm1523, %v5764, 0.0
      %v5825 = vadd.f32 %v5823, %v5824
      %v5826 = vsel %vm1523, %v5765, 0.0
      %v5827 = vadd.f32 %v5825, %v5826
      %v5828 = vsel %vm1523, %v5766, 0.0
      %v5829 = vadd.f32 %v5827, %v5828
      %v5830 = vrot.slane %v5829, 4
      %v5831 = vadd.f32 %v5829, %v5830
      %v5832 = vrot.slane %v5831, 2
      %v5833 = vadd.f32 %v5831, %v5832
      %v5834 = vrot.slane %v5833, 1
      %v5835 = vadd.f32 %v5833, %v5834
      %vm5836 = vcmask 1040384
      %v5837 = vsel %vm5836, %v5734, %v5835
      %vm5838 = vcmask 25600
      %5839 = vst.msk [vmem:[%s438] sm:$0x3] %vm5838, %v5837
      %s5840 = smul.u32 16, %s23
      %p5841 = scmp.lt.s32.totalorder %s22, 1
      %s5842 = scalar_select %p5841, %s22, 1
      %p5843 = scmp.lt.s32.totalorder %s5840, 15
      %s5844 = scalar_select %p5843, %s5840, 15
      %s5845 = smul.addr %s5844, 2
      %s5846 = smul.addr %s5842, 32
      %s5847 = sadd.s32 %s5845, %s5846
      %s5848 = smul.addr %s5847, 8
      %s5849 = scalar_lea.vmem %s5, %s5848
      %p5850 = scmp.lt.s32.totalorder %s22, 1
      %s5851 = scalar_select %p5850, %s22, 1
      %p5852 = scmp.lt.s32.totalorder %s23, 0
      %s5853 = scalar_select %p5852, %s23, 0
      %s5854 = sadd.s32 %s5853, %s5851
      %s5855 = smul.addr %s5854, 2
      %s5856 = scalar_lea.vmem %s6, %s5855
      // Predicated region
      $region49: #{recurrent_block_forward.4} parent=39 // pred_check
        %p5857 = pneg %p192
      $region50: #{recurrent_block_forward.4} parent=39 // pred_check_branch
        %5859 = sbr.rel (%p5857) target = $region52
      $region51: #{recurrent_block_forward.4} parent=39 // pred_region
        %s5860 = smul.u32 16, %s23
      $region52: #{recurrent_block_forward.4} parent=39 // pred_fallthru
        _
      // Predicated region
      $region53: #{recurrent_block_forward.4} parent=39 // pred_check
        %p5861 = pneg %p220
      $region54: #{recurrent_block_forward.4} parent=39 // pred_check_branch
        %5863 = sbr.rel (%p5861) target = $region56
      $region55: #{recurrent_block_forward.4} parent=39 // pred_region
        _
      $region56: #{recurrent_block_forward.4} parent=39 // pred_fallthru
        _
    $region40: #{recurrent_block_forward.4} parent=5 // pred_fallthru
      _
    %p5864 = scmp.le.s32.totalorder 2, %s13
    // Predicated region
    $region57: #{recurrent_block_forward.4} parent=5 // pred_check
      %p5865 = pneg %p5864
    $region58: #{recurrent_block_forward.4} parent=5 // pred_check_branch
      %5867 = sbr.rel (%p5865) target = $region60
    $region59: #{recurrent_block_forward.4} parent=5 // pred_region
      %s5868 = ssub.s32 %s13, 2
      // Predicated region
      $region61: #{recurrent_block_forward.4} parent=59 // pred_check
        %p5869 = pneg %p198
      $region62: #{recurrent_block_forward.4} parent=59 // pred_check_branch
        %5871 = sbr.rel (%p5869) target = $region64
      $region63: #{recurrent_block_forward.4} parent=59 // pred_region
        %s5872 = smul.u32 16, %s25
        %p5873 = scmp.lt.s32.totalorder %s24, 1
        %s5874 = scalar_select %p5873, %s24, 1
        %p5875 = scmp.lt.s32.totalorder %s5872, 15
        %s5876 = scalar_select %p5875, %s5872, 15
        %s5877 = smul.addr %s5876, 2
        %s5878 = smul.addr %s5874, 32
        %s5879 = sadd.s32 %s5877, %s5878
        %s5880 = smul.addr %s5879, 8
        %s5881 = scalar_lea.vmem %s5, %s5880
      $region64: #{recurrent_block_forward.4} parent=59 // pred_fallthru
        _
      // Predicated region
      $region65: #{recurrent_block_forward.4} parent=59 // pred_check
        %p5882 = pneg %p226
      $region66: #{recurrent_block_forward.4} parent=59 // pred_check_branch
        %5884 = sbr.rel (%p5882) target = $region68
      $region67: #{recurrent_block_forward.4} parent=59 // pred_region
        %p5885 = scmp.lt.s32.totalorder %s24, 1
        %s5886 = scalar_select %p5885, %s24, 1
        %p5887 = scmp.lt.s32.totalorder %s25, 0
        %s5888 = scalar_select %p5887, %s25, 0
        %s5889 = sadd.s32 %s5888, %s5886
        %s5890 = smul.addr %s5889, 2
        %s5891 = scalar_lea.vmem %s6, %s5890
      $region68: #{recurrent_block_forward.4} parent=59 // pred_fallthru
        _
    $region60: #{recurrent_block_forward.4} parent=5 // pred_fallthru
      _
  $region6: #{recurrent_block_forward.4} parent=0 // loop_footer
    %s17 = sadd.s32 1, %s13
  $region7: #{recurrent_block_forward.4} parent=0 // loop_footer_branch
    %12 = sbr.rel target = $region3
  $region8: #{recurrent_block_forward.4} parent=0 // loop_exit
    _

</llo_original>
